<compile_context>
chip_gen: v6e
topology: v6e:2x2x1
jax: 0.10.0
libtpu: 0.0.40
codegen_flags: <defaults>
</compile_context>

<pallas_src>
import jax
import jax.numpy as jnp
from jax.experimental import pallas as pl
from jax.experimental.pallas import tpu as pltpu

EPS = 1e-5                   # nn.InstanceNorm2d default (affine=False, eps=1e-5)
MXU_DTYPE = jnp.bfloat16     # MXU operand dtype; accumulation is always f32


# ------------------------------- kernel ------------------------------------ #

def _fused_residual_block_kernel(x_ref, w1_ref, w2_ref, o_ref, pad_scr):
    """One batch element per grid step.

    x_ref   : (C, H*W)      f32   input image, lane-dense
    w*_ref  : (C, 9*C+1)    bf16  im2col weights, conv bias folded in last col
    o_ref   : (C, H*W)      f32   output, lane-dense
    pad_scr : (C, H+2, W+2) f32   VMEM scratch: reflect-padded image (reused
                                  by both conv stages; `h` never leaves VMEM)
    """
    C, HW = o_ref.shape
    H = pad_scr.shape[1] - 2
    W = pad_scr.shape[2] - 2

    def reflect_pad_into_scratch(img):          # img: (C, H, W) f32 value
        # Interior
        pad_scr[:, 1:H + 1, 1:W + 1] = img
        # Top / bottom rows (reflect, excludes edge): row -1 -> row 1, row H -> row H-2
        pad_scr[:, 0:1, 1:W + 1] = img[:, 1:2, :]
        pad_scr[:, H + 1:H + 2, 1:W + 1] = img[:, H - 2:H - 1, :]
        # Left / right columns (corners fall out correctly from the padded rows)
        pad_scr[:, :, 0:1] = pad_scr[:, :, 2:3]
        pad_scr[:, :, W + 1:W + 2] = pad_scr[:, :, W - 1:W]

    def conv3x3_instnorm(w):
        # im2col: 9 shifted taps + a ones row (bias) -> one MXU matmul, K = 9C+1.
        # TODO(synk): the per-tap slice+reshape still relayouts through VMEM; a
        # pltpu.roll-based lane-shift scheme would move those shifts to the XLU.
        taps = [pad_scr[:, kh:kh + H, kw:kw + W].reshape(C, HW)
                for kh in range(3) for kw in range(3)]
        taps.append(jnp.ones((1, HW), jnp.float32))            # bias row
        patches = jnp.concatenate(taps, axis=0).astype(w.dtype)  # (9C+1, HW)
        y = jnp.dot(w, patches, preferred_element_type=jnp.float32)  # (C, HW) f32
        # InstanceNorm (biased variance, affine=False) in f32.
        mean = jnp.mean(y, axis=1, keepdims=True)
        yc = y - mean
        var = jnp.mean(yc * yc, axis=1, keepdims=True)
        return yc * jax.lax.rsqrt(var + EPS)

    x = x_ref[...]                                             # (C, HW) f32

    # Stage 1: ReflectPad -> Conv3x3 -> InstanceNorm -> ReLU   (stays in VMEM)
    reflect_pad_into_scratch(x.reshape(C, H, W))
    h = jnp.maximum(conv3x3_instnorm(w1_ref[...]), 0.0)

    # Stage 2: ReflectPad -> Conv3x3 -> InstanceNorm -> residual add
    reflect_pad_into_scratch(h.reshape(C, H, W))
    o_ref[...] = x + conv3x3_instnorm(w2_ref[...])


# --------------------------- wrapper / pallas_call -------------------------- #

def _prep_weight(w, b, dtype):
    """(Cout, Cin, 3, 3), (Cout,) -> (Cout, 9*Cin + 1).

    Column order is (kh*3+kw)*Cin + ci, matching the in-kernel im2col row
    order; the conv bias is folded in as the last column (multiplied by the
    kernel's trailing ones row)."""
    C = w.shape[0]
    wm = jnp.transpose(w, (0, 2, 3, 1)).reshape(C, 9 * C)
    return jnp.concatenate([wm, b.reshape(C, 1)], axis=1).astype(dtype)


def _vmem_limit_bytes(C, H, W):
    HW = H * W
    io = 2 * (2 * C * HW * 4)                      # x + out blocks, double-buffered
    wts = 2 * (2 * C * (9 * C + 1) * 2)            # both weights, double-buffered
    scr = C * (H + 2) * (W + 2) * 4                # padded-image scratch
    inter = (9 * C + 1) * HW * 2 + 3 * C * HW * 4  # patches + conv/IN temporaries
    est = 4 * (io + wts + scr + inter)             # headroom for layout padding
    return int(min(max(est, 16 << 20), 64 << 20))


@jax.jit
def residual_block(x, w1, b1, w2, b2):
    """x: (N, C, H, W) f32; w*: (C, C, 3, 3) f32; b*: (C,) f32."""
    N, C, H, W = x.shape
    HW = H * W
    w1a = _prep_weight(w1, b1, MXU_DTYPE)
    w2a = _prep_weight(w2, b2, MXU_DTYPE)
    x2d = x.reshape(N, C, HW)                      # lane-dense activations

    out2d = pl.pallas_call(
        _fused_residual_block_kernel,
        out_shape=jax.ShapeDtypeStruct((N, C, HW), jnp.float32),
        grid=(N,),
        in_specs=[
            pl.BlockSpec((None, C, HW), lambda n: (n, 0, 0)),
            pl.BlockSpec((C, 9 * C + 1), lambda n: (0, 0)),
            pl.BlockSpec((C, 9 * C + 1), lambda n: (0, 0)),
        ],
        out_specs=pl.BlockSpec((None, C, HW), lambda n: (n, 0, 0)),
        scratch_shapes=[pltpu.VMEM((C, H + 2, W + 2), jnp.float32)],
        compiler_params=pltpu.CompilerParams(
            dimension_semantics=("parallel",),
            vmem_limit_bytes=_vmem_limit_bytes(C, H, W)),
    )(x2d, w1a, w2a)
    return out2d.reshape(N, C, H, W)


# ------------------------------ reference ----------------------------------- #

def residual_block_ref(x, w1, b1, w2, b2):
    def conv(inp, w, b):
        xp = jnp.pad(inp, ((0, 0), (0, 0), (1, 1), (1, 1)), mode="reflect")
        y = jax.lax.conv_general_dilated(
            xp, w, window_strides=(1, 1), padding="VALID",
            dimension_numbers=("NCHW", "OIHW", "NCHW"))
        return y + b[None, :, None, None]

    def inorm(y):
        m = y.mean(axis=(2, 3), keepdims=True)
        v = ((y - m) ** 2).mean(axis=(2, 3), keepdims=True)
        return (y - m) * jax.lax.rsqrt(v + EPS)

    h = jnp.maximum(inorm(conv(x, w1, b1)), 0.0)
    return x + inorm(conv(h, w2, b2))


# --------------------------------- main -------------------------------------- #

if __name__ == "__main__":
    N, C, H, W = 2, 4, 16, 16

    key = jax.random.PRNGKey(0)
    kx, kw1, kb1, kw2, kb2 = jax.random.split(key, 5)

    # PyTorch-style init: U(-1/sqrt(fan_in), 1/sqrt(fan_in)).
    fan_in = C * 3 * 3
    bound = 1.0 / (fan_in ** 0.5)
    x = jax.random.normal(kx, (N, C, H, W), jnp.float32)
    w1 = jax.random.uniform(kw1, (C, C, 3, 3), jnp.float32, -bound, bound)
    b1 = jax.random.uniform(kb1, (C,), jnp.float32, -bound, bound)
    w2 = jax.random.uniform(kw2, (C, C, 3, 3), jnp.float32, -bound, bound)
    b2 = jax.random.uniform(kb2, (C,), jnp.float32, -bound, bound)

    out = jax.block_until_ready(residual_block(x, w1, b1, w2, b2))
    ref = residual_block_ref(x, w1, b1, w2, b2)

    assert out.shape == (N, C, H, W)
    # bf16 MXU operands (f32 accumulation) vs. a pure-f32 reference -> looser
    # tolerance than the all-f32 version.
    assert jnp.allclose(out, ref, atol=5e-2, rtol=5e-2), (
        float(jnp.max(jnp.abs(out - ref))))

    print("KERNEL_OK")
</pallas_src>

<mosaic_0001>
module attributes {stable_mosaic.version = 11 : i64} {
  func.func @_fused_residual_block_kernel(%arg0: i32, %arg1: memref<1x4x256xf32, #tpu.memory_space<vmem>>, %arg2: memref<4x37xbf16, #tpu.memory_space<vmem>>, %arg3: memref<4x37xbf16, #tpu.memory_space<vmem>>, %arg4: memref<1x4x256xf32, #tpu.memory_space<vmem>>, %arg5: memref<4x18x18xf32, #tpu.memory_space<vmem>>) attributes {dimension_semantics = [#tpu.dimension_semantics<parallel>], iteration_bounds = array<i64: 2>, scalar_prefetch = 0 : i64, scratch_operands = 1 : i64, tpu.core_type = #tpu.core_type<tc>, window_params = [{transform_indices = @transform_0, window_bounds = array<i64: 1, 4, 256>}, {pipeline_mode = #tpu.pipeline_mode<synchronous>, transform_indices = @transform_1, window_bounds = array<i64: 4, 37>}, {pipeline_mode = #tpu.pipeline_mode<synchronous>, transform_indices = @transform_2, window_bounds = array<i64: 4, 37>}, {transform_indices = @transform_3, window_bounds = array<i64: 1, 4, 256>}]} {
    %c0 = arith.constant 0 : index
    %c0_0 = arith.constant 0 : index
    %c0_1 = arith.constant 0 : index
    %0 = vector.load %arg1[%c0, %c0_0, %c0_1] : memref<1x4x256xf32, #tpu.memory_space<vmem>>, vector<1x4x256xf32>
    %1 = vector.shape_cast %0 : vector<1x4x256xf32> to vector<4x256xf32>
    %2 = vector.shape_cast %1 : vector<4x256xf32> to vector<4x16x16xf32>
    %c0_2 = arith.constant 0 : index
    %c1 = arith.constant 1 : index
    %c1_3 = arith.constant 1 : index
    %3 = vector.load %arg5[%c0_2, %c1, %c1_3] : memref<4x18x18xf32, #tpu.memory_space<vmem>>, vector<4x16x16xf32>
    tpu.vector_store %arg5[%c0_2, %c1, %c1_3], %2 {strides = array<i32>} : memref<4x18x18xf32, #tpu.memory_space<vmem>>, vector<4x16x16xf32>,
    %4 = vector.extract_strided_slice %2 {offsets = [0, 1, 0], sizes = [4, 1, 16], strides = [1, 1, 1]} : vector<4x16x16xf32> to vector<4x1x16xf32>
    %c0_4 = arith.constant 0 : index
    %c0_5 = arith.constant 0 : index
    %c1_6 = arith.constant 1 : index
    %5 = vector.load %arg5[%c0_4, %c0_5, %c1_6] : memref<4x18x18xf32, #tpu.memory_space<vmem>>, vector<4x1x16xf32>
    tpu.vector_store %arg5[%c0_4, %c0_5, %c1_6], %4 {strides = array<i32>} : memref<4x18x18xf32, #tpu.memory_space<vmem>>, vector<4x1x16xf32>,
    %6 = vector.extract_strided_slice %2 {offsets = [0, 14, 0], sizes = [4, 1, 16], strides = [1, 1, 1]} : vector<4x16x16xf32> to vector<4x1x16xf32>
    %c0_7 = arith.constant 0 : index
    %c17 = arith.constant 17 : index
    %c1_8 = arith.constant 1 : index
    %7 = vector.load %arg5[%c0_7, %c17, %c1_8] : memref<4x18x18xf32, #tpu.memory_space<vmem>>, vector<4x1x16xf32>
    tpu.vector_store %arg5[%c0_7, %c17, %c1_8], %6 {strides = array<i32>} : memref<4x18x18xf32, #tpu.memory_space<vmem>>, vector<4x1x16xf32>,
    %c0_9 = arith.constant 0 : index
    %c0_10 = arith.constant 0 : index
    %c2 = arith.constant 2 : index
    %8 = vector.load %arg5[%c0_9, %c0_10, %c2] : memref<4x18x18xf32, #tpu.memory_space<vmem>>, vector<4x18x1xf32>
    %c0_11 = arith.constant 0 : index
    %c0_12 = arith.constant 0 : index
    %c0_13 = arith.constant 0 : index
    %9 = vector.load %arg5[%c0_11, %c0_12, %c0_13] : memref<4x18x18xf32, #tpu.memory_space<vmem>>, vector<4x18x1xf32>
    tpu.vector_store %arg5[%c0_11, %c0_12, %c0_13], %8 {strides = array<i32>} : memref<4x18x18xf32, #tpu.memory_space<vmem>>, vector<4x18x1xf32>,
    %c0_14 = arith.constant 0 : index
    %c0_15 = arith.constant 0 : index
    %c15 = arith.constant 15 : index
    %10 = vector.load %arg5[%c0_14, %c0_15, %c15] : memref<4x18x18xf32, #tpu.memory_space<vmem>>, vector<4x18x1xf32>
    %c0_16 = arith.constant 0 : index
    %c0_17 = arith.constant 0 : index
    %c17_18 = arith.constant 17 : index
    %11 = vector.load %arg5[%c0_16, %c0_17, %c17_18] : memref<4x18x18xf32, #tpu.memory_space<vmem>>, vector<4x18x1xf32>
    tpu.vector_store %arg5[%c0_16, %c0_17, %c17_18], %10 {strides = array<i32>} : memref<4x18x18xf32, #tpu.memory_space<vmem>>, vector<4x18x1xf32>,
    %c0_19 = arith.constant 0 : index
    %c0_20 = arith.constant 0 : index
    %12 = vector.load %arg2[%c0_19, %c0_20] : memref<4x37xbf16, #tpu.memory_space<vmem>>, vector<4x37xbf16>
    %c0_21 = arith.constant 0 : index
    %c0_22 = arith.constant 0 : index
    %c0_23 = arith.constant 0 : index
    %13 = vector.load %arg5[%c0_21, %c0_22, %c0_23] : memref<4x18x18xf32, #tpu.memory_space<vmem>>, vector<4x16x16xf32>
    %14 = vector.shape_cast %13 : vector<4x16x16xf32> to vector<4x256xf32>
    %c0_24 = arith.constant 0 : index
    %c0_25 = arith.constant 0 : index
    %c1_26 = arith.constant 1 : index
    %15 = vector.load %arg5[%c0_24, %c0_25, %c1_26] : memref<4x18x18xf32, #tpu.memory_space<vmem>>, vector<4x16x16xf32>
    %16 = vector.shape_cast %15 : vector<4x16x16xf32> to vector<4x256xf32>
    %c0_27 = arith.constant 0 : index
    %c0_28 = arith.constant 0 : index
    %c2_29 = arith.constant 2 : index
    %17 = vector.load %arg5[%c0_27, %c0_28, %c2_29] : memref<4x18x18xf32, #tpu.memory_space<vmem>>, vector<4x16x16xf32>
    %18 = vector.shape_cast %17 : vector<4x16x16xf32> to vector<4x256xf32>
    %c0_30 = arith.constant 0 : index
    %c1_31 = arith.constant 1 : index
    %c0_32 = arith.constant 0 : index
    %19 = vector.load %arg5[%c0_30, %c1_31, %c0_32] : memref<4x18x18xf32, #tpu.memory_space<vmem>>, vector<4x16x16xf32>
    %20 = vector.shape_cast %19 : vector<4x16x16xf32> to vector<4x256xf32>
    %c0_33 = arith.constant 0 : index
    %c1_34 = arith.constant 1 : index
    %c1_35 = arith.constant 1 : index
    %21 = vector.load %arg5[%c0_33, %c1_34, %c1_35] : memref<4x18x18xf32, #tpu.memory_space<vmem>>, vector<4x16x16xf32>
    %22 = vector.shape_cast %21 : vector<4x16x16xf32> to vector<4x256xf32>
    %c0_36 = arith.constant 0 : index
    %c1_37 = arith.constant 1 : index
    %c2_38 = arith.constant 2 : index
    %23 = vector.load %arg5[%c0_36, %c1_37, %c2_38] : memref<4x18x18xf32, #tpu.memory_space<vmem>>, vector<4x16x16xf32>
    %24 = vector.shape_cast %23 : vector<4x16x16xf32> to vector<4x256xf32>
    %c0_39 = arith.constant 0 : index
    %c2_40 = arith.constant 2 : index
    %c0_41 = arith.constant 0 : index
    %25 = vector.load %arg5[%c0_39, %c2_40, %c0_41] : memref<4x18x18xf32, #tpu.memory_space<vmem>>, vector<4x16x16xf32>
    %26 = vector.shape_cast %25 : vector<4x16x16xf32> to vector<4x256xf32>
    %c0_42 = arith.constant 0 : index
    %c2_43 = arith.constant 2 : index
    %c1_44 = arith.constant 1 : index
    %27 = vector.load %arg5[%c0_42, %c2_43, %c1_44] : memref<4x18x18xf32, #tpu.memory_space<vmem>>, vector<4x16x16xf32>
    %28 = vector.shape_cast %27 : vector<4x16x16xf32> to vector<4x256xf32>
    %c0_45 = arith.constant 0 : index
    %c2_46 = arith.constant 2 : index
    %c2_47 = arith.constant 2 : index
    %29 = vector.load %arg5[%c0_45, %c2_46, %c2_47] : memref<4x18x18xf32, #tpu.memory_space<vmem>>, vector<4x16x16xf32>
    %30 = vector.shape_cast %29 : vector<4x16x16xf32> to vector<4x256xf32>
    %cst = arith.constant 1.000000e+00 : f32
    %31 = vector.broadcast %cst : f32 to vector<1x256xf32>
    %32 = tpu.concatenate %14, %16, %18, %20, %22, %24, %26, %28, %30, %31 in 0 : vector<4x256xf32>, vector<4x256xf32>, vector<4x256xf32>, vector<4x256xf32>, vector<4x256xf32>, vector<4x256xf32>, vector<4x256xf32>, vector<4x256xf32>, vector<4x256xf32>, vector<1x256xf32> -> vector<37x256xf32>
    %33 = arith.truncf %32 : vector<37x256xf32> to vector<37x256xbf16>
    %cst_48 = arith.constant dense<0.000000e+00> : vector<4x256xf32>
    %34 = tpu.matmul %12, %33, %cst_48 {dimension_numbers = #tpu.dot_dimension_numbers<[1], [0], [0], [1], [0, 0, 1, 1], [], []>} : vector<4x37xbf16>, vector<37x256xbf16>, vector<4x256xf32> -> vector<4x256xf32>
    %cst_49 = arith.constant dense<0.000000e+00> : vector<4xf32>
    %35 = vector.multi_reduction <add>, %34, %cst_49 [1] : vector<4x256xf32> to vector<4xf32>
    %36 = vector.shape_cast %35 : vector<4xf32> to vector<4x1xf32>
    %cst_50 = arith.constant 2.560000e+02 : f32
    %37 = vector.broadcast %cst_50 : f32 to vector<4x1xf32>
    %38 = arith.divf %36, %37 : vector<4x1xf32>
    %39 = vector.broadcast %38 : vector<4x1xf32> to vector<4x256xf32>
    %40 = arith.subf %34, %39 : vector<4x256xf32>
    %41 = arith.mulf %40, %40 : vector<4x256xf32>
    %cst_51 = arith.constant dense<0.000000e+00> : vector<4xf32>
    %42 = vector.multi_reduction <add>, %41, %cst_51 [1] : vector<4x256xf32> to vector<4xf32>
    %43 = vector.shape_cast %42 : vector<4xf32> to vector<4x1xf32>
    %cst_52 = arith.constant 2.560000e+02 : f32
    %44 = vector.broadcast %cst_52 : f32 to vector<4x1xf32>
    %45 = arith.divf %43, %44 : vector<4x1xf32>
    %cst_53 = arith.constant 9.99999974E-6 : f32
    %46 = vector.broadcast %cst_53 : f32 to vector<4x1xf32>
    %47 = arith.addf %45, %46 : vector<4x1xf32>
    %48 = math.rsqrt %47 : vector<4x1xf32>
    %49 = vector.broadcast %48 : vector<4x1xf32> to vector<4x256xf32>
    %50 = arith.mulf %40, %49 : vector<4x256xf32>
    %cst_54 = arith.constant 0.000000e+00 : f32
    %51 = vector.broadcast %cst_54 : f32 to vector<4x256xf32>
    %52 = arith.maximumf %50, %51 : vector<4x256xf32>
    %53 = vector.shape_cast %52 : vector<4x256xf32> to vector<4x16x16xf32>
    %c0_55 = arith.constant 0 : index
    %c1_56 = arith.constant 1 : index
    %c1_57 = arith.constant 1 : index
    %54 = vector.load %arg5[%c0_55, %c1_56, %c1_57] : memref<4x18x18xf32, #tpu.memory_space<vmem>>, vector<4x16x16xf32>
    tpu.vector_store %arg5[%c0_55, %c1_56, %c1_57], %53 {strides = array<i32>} : memref<4x18x18xf32, #tpu.memory_space<vmem>>, vector<4x16x16xf32>,
    %55 = vector.extract_strided_slice %53 {offsets = [0, 1, 0], sizes = [4, 1, 16], strides = [1, 1, 1]} : vector<4x16x16xf32> to vector<4x1x16xf32>
    %c0_58 = arith.constant 0 : index
    %c0_59 = arith.constant 0 : index
    %c1_60 = arith.constant 1 : index
    %56 = vector.load %arg5[%c0_58, %c0_59, %c1_60] : memref<4x18x18xf32, #tpu.memory_space<vmem>>, vector<4x1x16xf32>
    tpu.vector_store %arg5[%c0_58, %c0_59, %c1_60], %55 {strides = array<i32>} : memref<4x18x18xf32, #tpu.memory_space<vmem>>, vector<4x1x16xf32>,
    %57 = vector.extract_strided_slice %53 {offsets = [0, 14, 0], sizes = [4, 1, 16], strides = [1, 1, 1]} : vector<4x16x16xf32> to vector<4x1x16xf32>
    %c0_61 = arith.constant 0 : index
    %c17_62 = arith.constant 17 : index
    %c1_63 = arith.constant 1 : index
    %58 = vector.load %arg5[%c0_61, %c17_62, %c1_63] : memref<4x18x18xf32, #tpu.memory_space<vmem>>, vector<4x1x16xf32>
    tpu.vector_store %arg5[%c0_61, %c17_62, %c1_63], %57 {strides = array<i32>} : memref<4x18x18xf32, #tpu.memory_space<vmem>>, vector<4x1x16xf32>,
    %c0_64 = arith.constant 0 : index
    %c0_65 = arith.constant 0 : index
    %c2_66 = arith.constant 2 : index
    %59 = vector.load %arg5[%c0_64, %c0_65, %c2_66] : memref<4x18x18xf32, #tpu.memory_space<vmem>>, vector<4x18x1xf32>
    %c0_67 = arith.constant 0 : index
    %c0_68 = arith.constant 0 : index
    %c0_69 = arith.constant 0 : index
    %60 = vector.load %arg5[%c0_67, %c0_68, %c0_69] : memref<4x18x18xf32, #tpu.memory_space<vmem>>, vector<4x18x1xf32>
    tpu.vector_store %arg5[%c0_67, %c0_68, %c0_69], %59 {strides = array<i32>} : memref<4x18x18xf32, #tpu.memory_space<vmem>>, vector<4x18x1xf32>,
    %c0_70 = arith.constant 0 : index
    %c0_71 = arith.constant 0 : index
    %c15_72 = arith.constant 15 : index
    %61 = vector.load %arg5[%c0_70, %c0_71, %c15_72] : memref<4x18x18xf32, #tpu.memory_space<vmem>>, vector<4x18x1xf32>
    %c0_73 = arith.constant 0 : index
    %c0_74 = arith.constant 0 : index
    %c17_75 = arith.constant 17 : index
    %62 = vector.load %arg5[%c0_73, %c0_74, %c17_75] : memref<4x18x18xf32, #tpu.memory_space<vmem>>, vector<4x18x1xf32>
    tpu.vector_store %arg5[%c0_73, %c0_74, %c17_75], %61 {strides = array<i32>} : memref<4x18x18xf32, #tpu.memory_space<vmem>>, vector<4x18x1xf32>,
    %c0_76 = arith.constant 0 : index
    %c0_77 = arith.constant 0 : index
    %63 = vector.load %arg3[%c0_76, %c0_77] : memref<4x37xbf16, #tpu.memory_space<vmem>>, vector<4x37xbf16>
    %c0_78 = arith.constant 0 : index
    %c0_79 = arith.constant 0 : index
    %c0_80 = arith.constant 0 : index
    %64 = vector.load %arg5[%c0_78, %c0_79, %c0_80] : memref<4x18x18xf32, #tpu.memory_space<vmem>>, vector<4x16x16xf32>
    %65 = vector.shape_cast %64 : vector<4x16x16xf32> to vector<4x256xf32>
    %c0_81 = arith.constant 0 : index
    %c0_82 = arith.constant 0 : index
    %c1_83 = arith.constant 1 : index
    %66 = vector.load %arg5[%c0_81, %c0_82, %c1_83] : memref<4x18x18xf32, #tpu.memory_space<vmem>>, vector<4x16x16xf32>
    %67 = vector.shape_cast %66 : vector<4x16x16xf32> to vector<4x256xf32>
    %c0_84 = arith.constant 0 : index
    %c0_85 = arith.constant 0 : index
    %c2_86 = arith.constant 2 : index
    %68 = vector.load %arg5[%c0_84, %c0_85, %c2_86] : memref<4x18x18xf32, #tpu.memory_space<vmem>>, vector<4x16x16xf32>
    %69 = vector.shape_cast %68 : vector<4x16x16xf32> to vector<4x256xf32>
    %c0_87 = arith.constant 0 : index
    %c1_88 = arith.constant 1 : index
    %c0_89 = arith.constant 0 : index
    %70 = vector.load %arg5[%c0_87, %c1_88, %c0_89] : memref<4x18x18xf32, #tpu.memory_space<vmem>>, vector<4x16x16xf32>
    %71 = vector.shape_cast %70 : vector<4x16x16xf32> to vector<4x256xf32>
    %c0_90 = arith.constant 0 : index
    %c1_91 = arith.constant 1 : index
    %c1_92 = arith.constant 1 : index
    %72 = vector.load %arg5[%c0_90, %c1_91, %c1_92] : memref<4x18x18xf32, #tpu.memory_space<vmem>>, vector<4x16x16xf32>
    %73 = vector.shape_cast %72 : vector<4x16x16xf32> to vector<4x256xf32>
    %c0_93 = arith.constant 0 : index
    %c1_94 = arith.constant 1 : index
    %c2_95 = arith.constant 2 : index
    %74 = vector.load %arg5[%c0_93, %c1_94, %c2_95] : memref<4x18x18xf32, #tpu.memory_space<vmem>>, vector<4x16x16xf32>
    %75 = vector.shape_cast %74 : vector<4x16x16xf32> to vector<4x256xf32>
    %c0_96 = arith.constant 0 : index
    %c2_97 = arith.constant 2 : index
    %c0_98 = arith.constant 0 : index
    %76 = vector.load %arg5[%c0_96, %c2_97, %c0_98] : memref<4x18x18xf32, #tpu.memory_space<vmem>>, vector<4x16x16xf32>
    %77 = vector.shape_cast %76 : vector<4x16x16xf32> to vector<4x256xf32>
    %c0_99 = arith.constant 0 : index
    %c2_100 = arith.constant 2 : index
    %c1_101 = arith.constant 1 : index
    %78 = vector.load %arg5[%c0_99, %c2_100, %c1_101] : memref<4x18x18xf32, #tpu.memory_space<vmem>>, vector<4x16x16xf32>
    %79 = vector.shape_cast %78 : vector<4x16x16xf32> to vector<4x256xf32>
    %c0_102 = arith.constant 0 : index
    %c2_103 = arith.constant 2 : index
    %c2_104 = arith.constant 2 : index
    %80 = vector.load %arg5[%c0_102, %c2_103, %c2_104] : memref<4x18x18xf32, #tpu.memory_space<vmem>>, vector<4x16x16xf32>
    %81 = vector.shape_cast %80 : vector<4x16x16xf32> to vector<4x256xf32>
    %cst_105 = arith.constant 1.000000e+00 : f32
    %82 = vector.broadcast %cst_105 : f32 to vector<1x256xf32>
    %83 = tpu.concatenate %65, %67, %69, %71, %73, %75, %77, %79, %81, %82 in 0 : vector<4x256xf32>, vector<4x256xf32>, vector<4x256xf32>, vector<4x256xf32>, vector<4x256xf32>, vector<4x256xf32>, vector<4x256xf32>, vector<4x256xf32>, vector<4x256xf32>, vector<1x256xf32> -> vector<37x256xf32>
    %84 = arith.truncf %83 : vector<37x256xf32> to vector<37x256xbf16>
    %cst_106 = arith.constant dense<0.000000e+00> : vector<4x256xf32>
    %85 = tpu.matmul %63, %84, %cst_106 {dimension_numbers = #tpu.dot_dimension_numbers<[1], [0], [0], [1], [0, 0, 1, 1], [], []>} : vector<4x37xbf16>, vector<37x256xbf16>, vector<4x256xf32> -> vector<4x256xf32>
    %cst_107 = arith.constant dense<0.000000e+00> : vector<4xf32>
    %86 = vector.multi_reduction <add>, %85, %cst_107 [1] : vector<4x256xf32> to vector<4xf32>
    %87 = vector.shape_cast %86 : vector<4xf32> to vector<4x1xf32>
    %cst_108 = arith.constant 2.560000e+02 : f32
    %88 = vector.broadcast %cst_108 : f32 to vector<4x1xf32>
    %89 = arith.divf %87, %88 : vector<4x1xf32>
    %90 = vector.broadcast %89 : vector<4x1xf32> to vector<4x256xf32>
    %91 = arith.subf %85, %90 : vector<4x256xf32>
    %92 = arith.mulf %91, %91 : vector<4x256xf32>
    %cst_109 = arith.constant dense<0.000000e+00> : vector<4xf32>
    %93 = vector.multi_reduction <add>, %92, %cst_109 [1] : vector<4x256xf32> to vector<4xf32>
    %94 = vector.shape_cast %93 : vector<4xf32> to vector<4x1xf32>
    %cst_110 = arith.constant 2.560000e+02 : f32
    %95 = vector.broadcast %cst_110 : f32 to vector<4x1xf32>
    %96 = arith.divf %94, %95 : vector<4x1xf32>
    %cst_111 = arith.constant 9.99999974E-6 : f32
    %97 = vector.broadcast %cst_111 : f32 to vector<4x1xf32>
    %98 = arith.addf %96, %97 : vector<4x1xf32>
    %99 = math.rsqrt %98 : vector<4x1xf32>
    %100 = vector.broadcast %99 : vector<4x1xf32> to vector<4x256xf32>
    %101 = arith.mulf %91, %100 : vector<4x256xf32>
    %102 = arith.addf %1, %101 : vector<4x256xf32>
    %c0_112 = arith.constant 0 : index
    %c0_113 = arith.constant 0 : index
    %c0_114 = arith.constant 0 : index
    %103 = vector.load %arg4[%c0_112, %c0_113, %c0_114] : memref<1x4x256xf32, #tpu.memory_space<vmem>>, vector<1x4x256xf32>
    %104 = vector.shape_cast %103 : vector<1x4x256xf32> to vector<4x256xf32>
    %105 = vector.shape_cast %102 : vector<4x256xf32> to vector<1x4x256xf32>
    tpu.vector_store %arg4[%c0_112, %c0_113, %c0_114], %105 {strides = array<i32>} : memref<1x4x256xf32, #tpu.memory_space<vmem>>, vector<1x4x256xf32>,
    return
  }
  func.func @transform_0(%arg0: i32) -> (i32, i32, i32) {
    %c0_i32 = arith.constant 0 : i32
    %c0_i32_0 = arith.constant 0 : i32
    %c0_i32_1 = arith.constant 0 : i32
    return %arg0, %c0_i32, %c0_i32_0 : i32, i32, i32
  }
  func.func @transform_1(%arg0: i32) -> (i32, i32) {
    %c0_i32 = arith.constant 0 : i32
    %c0_i32_0 = arith.constant 0 : i32
    %c0_i32_1 = arith.constant 0 : i32
    return %c0_i32, %c0_i32_0 : i32, i32
  }
  func.func @transform_2(%arg0: i32) -> (i32, i32) {
    %c0_i32 = arith.constant 0 : i32
    %c0_i32_0 = arith.constant 0 : i32
    %c0_i32_1 = arith.constant 0 : i32
    return %c0_i32, %c0_i32_0 : i32, i32
  }
  func.func @transform_3(%arg0: i32) -> (i32, i32, i32) {
    %c0_i32 = arith.constant 0 : i32
    %c0_i32_0 = arith.constant 0 : i32
    %c0_i32_1 = arith.constant 0 : i32
    return %arg0, %c0_i32, %c0_i32_0 : i32, i32, i32
  }
}

</mosaic_0001>

<llo_original>
// kernel: residual_block.1
$region0: #{residual_block.1}
  #allocation0 [shape = 'u32[]', space=smem, size = 0x4, offset = 0x4, fixed_abs, tag = 'smem constant byte address 0x4 - core index']
  #allocation1 [shape = 'u32[144,128]{1,0:T(1,128)}', space=vmem, size = 0x12000, scoped, tag = 'internal scratch']
  #allocation2 [shape = 'f32[4,18,18]{2,1,0:T(8,128)}', space=vmem, size = 0xc000, scoped, tag = 'scratch operand']
  %s0 = inlined_call_operand.vmem [shape: f32[2,4,256], index: 0, kind: input, shape index: {}]
  %s1 = inlined_call_operand.vmem [shape: bf16[4,37], index: 1, kind: input, shape index: {}]
  %s2 = inlined_call_operand.vmem [shape: bf16[4,37], index: 2, kind: input, shape index: {}]
  %s3 = inlined_call_operand.vmem [shape: f32[2,4,256], index: 3, kind: output, shape index: {}]
  %s4 = sld [smem:[#allocation0]]
  $region45: #{residual_block.1} parent=0
    _
  %s6 = ssub.s32 1, %s4
  %s7 = scalar_select 0, %s6, %s4
  loop: start=0, step=1, limit=4
  $region2: #{residual_block.1} parent=0 // loop_pre_header
    _
  $region3: #{residual_block.1} parent=0 // loop_header
    %s9 = sphi 0, %s13
    %p10 = scmp.ge.s32.totalorder %s9, 4
    %s19 = sphi 0, %s21
    %s22 = sphi 0, %s19
    %s23 = sphi 0, %s22
    %s39 = sphi 0, %s23
    %s43 = sphi 0, %s43
    %s45 = sphi 0, %s43
    %s46 = sphi 0, %s45
    %s60 = sphi 0, %s46
    %s64 = sphi 0, %s64
    %s66 = sphi 0, %s64
    %s67 = sphi 0, %s66
    %s81 = sphi 0, %s67
    %s87 = sphi 0, %s89
    %s90 = sphi 0, %s87
    %s91 = sphi 0, %s90
    %s107 = sphi 0, %s91
  $region4: #{residual_block.1} parent=0 // loop_header_branch
    %12 = sbr.rel (%p10) target = $region8
  $region5: #{residual_block.1} parent=0 // loop_body
    %s14 = ssub.s32 %s9, 1
    %s15 = ssub.s32 %s9, 2
    %s16 = sadd.s32 %s9, 1
    %s17 = ssub.s32 %s9, %s16
    %p18 = scmp.eq.s32.totalorder %s17, 0
    %s20 = sadd.s32 %s19, 1
    %s21 = scalar_select %p18, %s19, %s20
    %p24 = pneg %p18
    %p25 = scmp.eq.s32.totalorder %s9, 1
    %p26 = por %p24, %p25
    %p27 = scmp.ne.s32.totalorder %s19, %s22
    %p28 = scmp.eq.s32.totalorder %s9, 0
    %p29 = por %p27, %p28
    %p30 = scmp.ne.s32.totalorder %s19, %s22
    %p31 = scmp.eq.s32.totalorder %s14, 1
    %p32 = por %p30, %p31
    %p33 = scmp.ne.s32.totalorder %s22, %s23
    %p34 = scmp.eq.s32.totalorder %s14, 0
    %p35 = por %p33, %p34
    %p36 = scmp.ne.s32.totalorder %s22, %s23
    %p37 = scmp.eq.s32.totalorder %s15, 1
    %p38 = por %p36, %p37
    %p40 = scmp.ne.s32.totalorder %s23, %s39
    %p41 = scmp.eq.s32.totalorder %s15, 0
    %p42 = por %p40, %p41
    %s44 = sadd.s32 %s43, 1
    %p47 = scmp.eq.s32.totalorder %s9, 1
    %p48 = scmp.ne.s32.totalorder %s43, %s45
    %p49 = scmp.eq.s32.totalorder %s9, 0
    %p50 = por %p48, %p49
    %p51 = scmp.ne.s32.totalorder %s43, %s45
    %p52 = scmp.eq.s32.totalorder %s14, 1
    %p53 = por %p51, %p52
    %p54 = scmp.ne.s32.totalorder %s45, %s46
    %p55 = scmp.eq.s32.totalorder %s14, 0
    %p56 = por %p54, %p55
    %p57 = scmp.ne.s32.totalorder %s45, %s46
    %p58 = scmp.eq.s32.totalorder %s15, 1
    %p59 = por %p57, %p58
    %p61 = scmp.ne.s32.totalorder %s46, %s60
    %p62 = scmp.eq.s32.totalorder %s15, 0
    %p63 = por %p61, %p62
    %s65 = sadd.s32 %s64, 1
    %p68 = scmp.eq.s32.totalorder %s9, 1
    %p69 = scmp.ne.s32.totalorder %s64, %s66
    %p70 = scmp.eq.s32.totalorder %s9, 0
    %p71 = por %p69, %p70
    %p72 = scmp.ne.s32.totalorder %s64, %s66
    %p73 = scmp.eq.s32.totalorder %s14, 1
    %p74 = por %p72, %p73
    %p75 = scmp.ne.s32.totalorder %s66, %s67
    %p76 = scmp.eq.s32.totalorder %s14, 0
    %p77 = por %p75, %p76
    %p78 = scmp.ne.s32.totalorder %s66, %s67
    %p79 = scmp.eq.s32.totalorder %s15, 1
    %p80 = por %p78, %p79
    %p82 = scmp.ne.s32.totalorder %s67, %s81
    %p83 = scmp.eq.s32.totalorder %s15, 0
    %p84 = por %p82, %p83
    %s85 = ssub.s32 %s9, %s16
    %p86 = scmp.eq.s32.totalorder %s85, 0
    %s88 = sadd.s32 %s87, 1
    %s89 = scalar_select %p86, %s87, %s88
    %p92 = pneg %p86
    %p93 = scmp.eq.s32.totalorder %s9, 1
    %p94 = por %p92, %p93
    %p95 = scmp.ne.s32.totalorder %s87, %s90
    %p96 = scmp.eq.s32.totalorder %s9, 0
    %p97 = por %p95, %p96
    %p98 = scmp.ne.s32.totalorder %s87, %s90
    %p99 = scmp.eq.s32.totalorder %s14, 1
    %p100 = por %p98, %p99
    %p101 = scmp.ne.s32.totalorder %s90, %s91
    %p102 = scmp.eq.s32.totalorder %s14, 0
    %p103 = por %p101, %p102
    %p104 = scmp.ne.s32.totalorder %s90, %s91
    %p105 = scmp.eq.s32.totalorder %s15, 1
    %p106 = por %p104, %p105
    %p108 = scmp.ne.s32.totalorder %s91, %s107
    %p109 = scmp.eq.s32.totalorder %s15, 0
    %p110 = por %p108, %p109
    %p111 = scmp.le.s32.totalorder 1, %s9
    %p112 = scmp.lt.s32.totalorder %s9, 3
    %p113 = pnand %p111, %p112
    %p114 = pneg %p113
    // Predicated region
    $region9: #{residual_block.1} parent=5 // pred_check
      _
    $region10: #{residual_block.1} parent=5 // pred_check_branch
      %116 = sbr.rel (%p113) target = $region12
    $region11: #{residual_block.1} parent=5 // pred_region
      %s117 = ssub.s32 %s9, 1
      // Predicated region
      $region13: #{residual_block.1} parent=11 // pred_check
        %p118 = pneg %p56
      $region14: #{residual_block.1} parent=11 // pred_check_branch
        %120 = sbr.rel (%p118) target = $region16
      $region15: #{residual_block.1} parent=11 // pred_region
        _
      $region16: #{residual_block.1} parent=11 // pred_fallthru
        _
      // Predicated region
      $region17: #{residual_block.1} parent=11 // pred_check
        %p121 = pneg %p77
      $region18: #{residual_block.1} parent=11 // pred_check_branch
        %123 = sbr.rel (%p121) target = $region20
      $region19: #{residual_block.1} parent=11 // pred_region
        _
      $region20: #{residual_block.1} parent=11 // pred_fallthru
        _
    $region12: #{residual_block.1} parent=5 // pred_fallthru
      _
    %p124 = scmp.lt.s32.totalorder %s9, 2
    // Predicated region
    $region21: #{residual_block.1} parent=5 // pred_check
      %p125 = pneg %p124
    $region22: #{residual_block.1} parent=5 // pred_check_branch
      %127 = sbr.rel (%p125) target = $region24
    $region23: #{residual_block.1} parent=5 // pred_region
      // Predicated region
      $region25: #{residual_block.1} parent=23 // pred_check
        %p128 = pneg %p29
      $region26: #{residual_block.1} parent=23 // pred_check_branch
        %130 = sbr.rel (%p128) target = $region28
      $region27: #{residual_block.1} parent=23 // pred_region
        %p131 = scmp.lt.s32.totalorder %s9, 1
        %s132 = scalar_select %p131, %s9, 1
        %s133 = smul.addr %s132, 2
        %s134 = smul.addr %s133, 4
        %s135 = scalar_lea.vmem %s0, %s134
      $region28: #{residual_block.1} parent=23 // pred_fallthru
        _
    $region24: #{residual_block.1} parent=5 // pred_fallthru
      _
    %p136 = scmp.le.s32.totalorder 1, %s9
    %p137 = scmp.lt.s32.totalorder %s9, 3
    %p138 = pnand %p136, %p137
    %p139 = pneg %p138
    // Predicated region
    $region29: #{residual_block.1} parent=5 // pred_check
      _
    $region30: #{residual_block.1} parent=5 // pred_check_branch
      %141 = sbr.rel (%p138) target = $region32
    $region31: #{residual_block.1} parent=5 // pred_region
      %s142 = ssub.s32 %s9, 1
      %p143 = scmp.lt.s32.totalorder %s14, 1
      %s144 = scalar_select %p143, %s14, 1
      %s145 = smul.addr %s144, 2
      %s146 = smul.addr %s145, 4
      %s147 = scalar_lea.vmem %s0, %s146
      %p148 = pneg %p35
      %p149 = pneg %p32
      %p150 = pneg %p56
      %p151 = pneg %p53
      %p152 = pneg %p77
      %p153 = pneg %p74
      %p154 = pneg %p103
      %p155 = pneg %p100
      %p156 = scmp.lt.s32.totalorder %s14, 1
      %s157 = scalar_select %p156, %s14, 1
      %s158 = smul.addr %s157, 2
      %s159 = smul.addr %s158, 4
      %s160 = scalar_lea.vmem %s3, %s159
      %p161 = scmp.lt.s32.totalorder %s14, 1
      %s162 = scalar_select %p161, %s14, 1
      %s163 = smul.addr %s162, 2
      %s164 = smul.addr %s163, 4
      %s165 = scalar_lea.vmem %s0, %s164
      %p166 = scmp.lt.s32.totalorder %s14, 1
      %s167 = scalar_select %p166, %s14, 1
      %s168 = smul.addr %s167, 2
      %s169 = smul.addr %s168, 4
      %s170 = scalar_lea.vmem %s3, %s169
      %v172 = vld [vmem:[%s165] sm:$0xff]
      %v174 = vrot.slane %v172, 4
      %176 = vrot.lane.b32.xlu0 %v172, 112
      %v177 = vpop.permute.xlu0 %176
      %v178 = vrot.slane %v177, 4
      %180 = vrot.lane.b32.xlu0 %v172, 96
      %v181 = vpop.permute.xlu0 %180
      %v182 = vrot.slane %v181, 4
      %184 = vrot.lane.b32.xlu0 %v172, 80
      %v185 = vpop.permute.xlu0 %184
      %v186 = vrot.slane %v185, 4
      %188 = vrot.lane.b32.xlu0 %v172, 64
      %v189 = vpop.permute.xlu0 %188
      %v190 = vrot.slane %v189, 4
      %192 = vrot.lane.b32.xlu0 %v172, 48
      %v193 = vpop.permute.xlu0 %192
      %v194 = vrot.slane %v193, 4
      %196 = vrot.lane.b32.xlu0 %v172, 32
      %v197 = vpop.permute.xlu0 %196
      %v198 = vrot.slane %v197, 4
      %200 = vrot.lane.b32.xlu0 %v172, 16
      %v201 = vpop.permute.xlu0 %200
      %v202 = vrot.slane %v201, 4
      %v211 = vcombine.low %v172, %v181
      %v213 = vunpack.c.l.s4 1983009808
      %v214 = vunpack.c.0.s8 %v213
      %v215 = vlaneseq
      %v216 = vshrl.u32 %v215, 7
      %v217 = vsub.s32 %v214, %v216
      %v218 = vrot.slane %v211, %v217
      %v219 = vcombine.low %v177, %v185
      %v221 = vunpack.c.l.s4 1983009808
      %v222 = vunpack.c.0.s8 %v221
      %v223 = vlaneseq
      %v224 = vshrl.u32 %v223, 7
      %v225 = vsub.s32 %v222, %v224
      %v226 = vrot.slane %v219, %v225
      %v227 = vcombine.low %v218, %v226
      %v228 = vcombine.high %v218, %v226
      %v230 = vunpack.c.l.s4 1934713408
      %v231 = vunpack.c.0.s8 %v230
      %v232 = vlaneseq
      %v233 = vshrl.u32 %v232, 7
      %v234 = vsub.s32 %v231, %v233
      %v235 = vrot.slane %v227, %v234
      %v237 = vunpack.c.l.s4 1934713408
      %v238 = vunpack.c.0.s8 %v237
      %v239 = vlaneseq
      %v240 = vshrl.u32 %v239, 7
      %v241 = vsub.s32 %v238, %v240
      %v242 = vrot.slane %v228, %v241
      %v243 = vcombine.high %v235, 0.0
      %v244 = vcombine.high %v242, 0.0
      %v245 = vcombine.low %v189, %v197
      %v247 = vunpack.c.l.s4 1983009808
      %v248 = vunpack.c.0.s8 %v247
      %v249 = vlaneseq
      %v250 = vshrl.u32 %v249, 7
      %v251 = vsub.s32 %v248, %v250
      %v252 = vrot.slane %v245, %v251
      %v253 = vcombine.low %v193, %v201
      %v255 = vunpack.c.l.s4 1983009808
      %v256 = vunpack.c.0.s8 %v255
      %v257 = vlaneseq
      %v258 = vshrl.u32 %v257, 7
      %v259 = vsub.s32 %v256, %v258
      %v260 = vrot.slane %v253, %v259
      %v261 = vcombine.low %v252, %v260
      %v262 = vcombine.high %v252, %v260
      %v264 = vunpack.c.l.s4 1934713408
      %v265 = vunpack.c.0.s8 %v264
      %v266 = vlaneseq
      %v267 = vshrl.u32 %v266, 7
      %v268 = vsub.s32 %v265, %v267
      %v269 = vrot.slane %v261, %v268
      %v271 = vunpack.c.l.s4 1934713408
      %v272 = vunpack.c.0.s8 %v271
      %v273 = vlaneseq
      %v274 = vshrl.u32 %v273, 7
      %v275 = vsub.s32 %v272, %v274
      %v276 = vrot.slane %v262, %v275
      %v277 = vcombine.high %v269, 0.0
      %v278 = vcombine.high %v276, 0.0
      %v279 = vcombine.low %v174, %v182
      %v281 = vunpack.c.l.s4 1983009808
      %v282 = vunpack.c.0.s8 %v281
      %v283 = vlaneseq
      %v284 = vshrl.u32 %v283, 7
      %v285 = vsub.s32 %v282, %v284
      %v286 = vrot.slane %v279, %v285
      %v287 = vcombine.low %v178, %v186
      %v289 = vunpack.c.l.s4 1983009808
      %v290 = vunpack.c.0.s8 %v289
      %v291 = vlaneseq
      %v292 = vshrl.u32 %v291, 7
      %v293 = vsub.s32 %v290, %v292
      %v294 = vrot.slane %v287, %v293
      %v295 = vcombine.low %v286, %v294
      %v296 = vcombine.high %v286, %v294
      %v298 = vunpack.c.l.s4 1934713408
      %v299 = vunpack.c.0.s8 %v298
      %v300 = vlaneseq
      %v301 = vshrl.u32 %v300, 7
      %v302 = vsub.s32 %v299, %v301
      %v303 = vrot.slane %v295, %v302
      %v305 = vunpack.c.l.s4 1934713408
      %v306 = vunpack.c.0.s8 %v305
      %v307 = vlaneseq
      %v308 = vshrl.u32 %v307, 7
      %v309 = vsub.s32 %v306, %v308
      %v310 = vrot.slane %v296, %v309
      %v311 = vcombine.high %v303, 0.0
      %v312 = vcombine.high %v310, 0.0
      %v313 = vcombine.low %v190, %v198
      %v315 = vunpack.c.l.s4 1983009808
      %v316 = vunpack.c.0.s8 %v315
      %v317 = vlaneseq
      %v318 = vshrl.u32 %v317, 7
      %v319 = vsub.s32 %v316, %v318
      %v320 = vrot.slane %v313, %v319
      %v321 = vcombine.low %v194, %v202
      %v323 = vunpack.c.l.s4 1983009808
      %v324 = vunpack.c.0.s8 %v323
      %v325 = vlaneseq
      %v326 = vshrl.u32 %v325, 7
      %v327 = vsub.s32 %v324, %v326
      %v328 = vrot.slane %v321, %v327
      %v329 = vcombine.low %v320, %v328
      %v330 = vcombine.high %v320, %v328
      %v332 = vunpack.c.l.s4 1934713408
      %v333 = vunpack.c.0.s8 %v332
      %v334 = vlaneseq
      %v335 = vshrl.u32 %v334, 7
      %v336 = vsub.s32 %v333, %v335
      %v337 = vrot.slane %v329, %v336
      %v339 = vunpack.c.l.s4 1934713408
      %v340 = vunpack.c.0.s8 %v339
      %v341 = vlaneseq
      %v342 = vshrl.u32 %v341, 7
      %v343 = vsub.s32 %v340, %v342
      %v344 = vrot.slane %v330, %v343
      %v345 = vcombine.high %v337, 0.0
      %v346 = vcombine.high %v344, 0.0
      %v363 = vcombine.low %v235, %v269
      %v364 = vcombine.low %v303, %v337
      %v365 = vcombine.low %v243, %v277
      %v366 = vcombine.low %v311, %v345
      %v367 = vcombine.low %v242, %v276
      %v368 = vcombine.low %v310, %v344
      %v369 = vcombine.low %v244, %v278
      %v370 = vcombine.low %v312, %v346
      %371 = vrot.lane.b32.xlu0 %v363, 1
      %v372 = vpop.permute.xlu0 %371
      %373 = vrot.lane.b32.xlu0 %v364, 1
      %v374 = vpop.permute.xlu0 %373
      %375 = vrot.lane.b32.xlu0 %v365, 1
      %v376 = vpop.permute.xlu0 %375
      %377 = vrot.lane.b32.xlu0 %v366, 1
      %v378 = vpop.permute.xlu0 %377
      %379 = vrot.lane.b32.xlu0 %v367, 1
      %v380 = vpop.permute.xlu0 %379
      %381 = vrot.lane.b32.xlu0 %v368, 1
      %v382 = vpop.permute.xlu0 %381
      %383 = vrot.lane.b32.xlu0 %v369, 1
      %v384 = vpop.permute.xlu0 %383
      %385 = vrot.lane.b32.xlu0 %v370, 1
      %v386 = vpop.permute.xlu0 %385
      %vm395 = vcmask 138248
      %396 = vst.msk [vmem:[#allocation2 + $0x1] sm:$0xff] %vm395, %v372
      %397 = vst.msk [vmem:[#allocation2 + $0x9] sm:$0xff] %vm395, %v374
      %398 = vst.msk [vmem:[#allocation2 + $0x19] sm:$0xff] %vm395, %v376
      %399 = vst.msk [vmem:[#allocation2 + $0x21] sm:$0xff] %vm395, %v378
      %400 = vst.msk [vmem:[#allocation2 + $0x31] sm:$0xff] %vm395, %v380
      %401 = vst.msk [vmem:[#allocation2 + $0x39] sm:$0xff] %vm395, %v382
      %402 = vst.msk [vmem:[#allocation2 + $0x49] sm:$0xff] %vm395, %v384
      %403 = vst.msk [vmem:[#allocation2 + $0x51] sm:$0xff] %vm395, %v386
      %v404 = vlaneseq
      %v405 = vshrl.u32 %v404, 7
      %v406 = vsub.s32 1, %v405
      %v407 = vrot.slane %v235, %v406
      %v408 = vlaneseq
      %v409 = vshrl.u32 %v408, 7
      %v410 = vsub.s32 1, %v409
      %v411 = vrot.slane %v243, %v410
      %v412 = vlaneseq
      %v413 = vshrl.u32 %v412, 7
      %v414 = vsub.s32 1, %v413
      %v415 = vrot.slane %v242, %v414
      %v416 = vlaneseq
      %v417 = vshrl.u32 %v416, 7
      %v418 = vsub.s32 1, %v417
      %v419 = vrot.slane %v244, %v418
      %420 = vrot.lane.b32.xlu0 %v407, 1
      %v421 = vpop.permute.xlu0 %420
      %422 = vrot.lane.b32.xlu0 %v411, 1
      %v423 = vpop.permute.xlu0 %422
      %424 = vrot.lane.b32.xlu0 %v415, 1
      %v425 = vpop.permute.xlu0 %424
      %426 = vrot.lane.b32.xlu0 %v419, 1
      %v427 = vpop.permute.xlu0 %426
      %vm432 = vcmask 132105
      %433 = vst.msk [vmem:[#allocation2 - $0x1] sm:$0x2] %vm432, %v421
      %434 = vst.msk [vmem:[#allocation2 + $0x17] sm:$0x2] %vm432, %v423
      %435 = vst.msk [vmem:[#allocation2 + $0x2f] sm:$0x2] %vm432, %v425
      %436 = vst.msk [vmem:[#allocation2 + $0x47] sm:$0x2] %vm432, %v427
      %v437 = vlaneseq
      %v438 = vshrl.u32 %v437, 7
      %v439 = vsub.s32 2, %v438
      %v440 = vrot.slane %v337, %v439
      %v441 = vlaneseq
      %v442 = vshrl.u32 %v441, 7
      %v443 = vsub.s32 2, %v442
      %v444 = vrot.slane %v345, %v443
      %v445 = vlaneseq
      %v446 = vshrl.u32 %v445, 7
      %v447 = vsub.s32 2, %v446
      %v448 = vrot.slane %v344, %v447
      %v449 = vlaneseq
      %v450 = vshrl.u32 %v449, 7
      %v451 = vsub.s32 2, %v450
      %v452 = vrot.slane %v346, %v451
      %453 = vrot.lane.b32.xlu0 %v440, 1
      %v454 = vpop.permute.xlu0 %453
      %455 = vrot.lane.b32.xlu0 %v444, 1
      %v456 = vpop.permute.xlu0 %455
      %457 = vrot.lane.b32.xlu0 %v448, 1
      %v458 = vpop.permute.xlu0 %457
      %459 = vrot.lane.b32.xlu0 %v452, 1
      %v460 = vpop.permute.xlu0 %459
      %vm465 = vcmask 133130
      %466 = vst.msk [vmem:[#allocation2 + $0xf] sm:$0x4] %vm465, %v454
      %467 = vst.msk [vmem:[#allocation2 + $0x27] sm:$0x4] %vm465, %v456
      %468 = vst.msk [vmem:[#allocation2 + $0x3f] sm:$0x4] %vm465, %v458
      %469 = vst.msk [vmem:[#allocation2 + $0x57] sm:$0x4] %vm465, %v460
      %v470 = vld [vmem:[#allocation2] sm:$0xff]
      %v471 = vld [vmem:[#allocation2 + $0x8] sm:$0xff]
      %v472 = vld [vmem:[#allocation2 + $0x10] sm:$0x3]
      %v473 = vld [vmem:[#allocation2 + $0x18] sm:$0xff]
      %v474 = vld [vmem:[#allocation2 + $0x20] sm:$0xff]
      %v475 = vld [vmem:[#allocation2 + $0x28] sm:$0x3]
      %v476 = vld [vmem:[#allocation2 + $0x30] sm:$0xff]
      %v477 = vld [vmem:[#allocation2 + $0x38] sm:$0xff]
      %v478 = vld [vmem:[#allocation2 + $0x40] sm:$0x3]
      %v479 = vld [vmem:[#allocation2 + $0x48] sm:$0xff]
      %v480 = vld [vmem:[#allocation2 + $0x50] sm:$0xff]
      %v481 = vld [vmem:[#allocation2 + $0x58] sm:$0x3]
      %494 = vrot.lane.b32.xlu0 %v470, 126
      %v495 = vpop.permute.xlu0 %494
      %496 = vrot.lane.b32.xlu0 %v471, 126
      %v497 = vpop.permute.xlu0 %496
      %498 = vrot.lane.b32.xlu0 %v472, 126
      %v499 = vpop.permute.xlu0 %498
      %500 = vrot.lane.b32.xlu0 %v473, 126
      %v501 = vpop.permute.xlu0 %500
      %502 = vrot.lane.b32.xlu0 %v474, 126
      %v503 = vpop.permute.xlu0 %502
      %504 = vrot.lane.b32.xlu0 %v475, 126
      %v505 = vpop.permute.xlu0 %504
      %506 = vrot.lane.b32.xlu0 %v476, 126
      %v507 = vpop.permute.xlu0 %506
      %508 = vrot.lane.b32.xlu0 %v477, 126
      %v509 = vpop.permute.xlu0 %508
      %510 = vrot.lane.b32.xlu0 %v478, 126
      %v511 = vpop.permute.xlu0 %510
      %512 = vrot.lane.b32.xlu0 %v479, 126
      %v513 = vpop.permute.xlu0 %512
      %514 = vrot.lane.b32.xlu0 %v480, 126
      %v515 = vpop.permute.xlu0 %514
      %516 = vrot.lane.b32.xlu0 %v481, 126
      %v517 = vpop.permute.xlu0 %516
      %vm530 = vcmask 7168
      %531 = vst.msk [vmem:[#allocation2] sm:$0xff] %vm530, %v495
      %532 = vst.msk [vmem:[#allocation2 + $0x8] sm:$0xff] %vm530, %v497
      %vm533 = vcmask 1024
      %534 = vst.msk [vmem:[#allocation2 + $0x10] sm:$0x3] %vm533, %v499
      %535 = vst.msk [vmem:[#allocation2 + $0x18] sm:$0xff] %vm530, %v501
      %536 = vst.msk [vmem:[#allocation2 + $0x20] sm:$0xff] %vm530, %v503
      %537 = vst.msk [vmem:[#allocation2 + $0x28] sm:$0x3] %vm533, %v505
      %538 = vst.msk [vmem:[#allocation2 + $0x30] sm:$0xff] %vm530, %v507
      %539 = vst.msk [vmem:[#allocation2 + $0x38] sm:$0xff] %vm530, %v509
      %540 = vst.msk [vmem:[#allocation2 + $0x40] sm:$0x3] %vm533, %v511
      %541 = vst.msk [vmem:[#allocation2 + $0x48] sm:$0xff] %vm530, %v513
      %542 = vst.msk [vmem:[#allocation2 + $0x50] sm:$0xff] %vm530, %v515
      %543 = vst.msk [vmem:[#allocation2 + $0x58] sm:$0x3] %vm533, %v517
      %v544 = vld [vmem:[#allocation2] sm:$0xff]
      %v545 = vld [vmem:[#allocation2 + $0x8] sm:$0xff]
      %v546 = vld [vmem:[#allocation2 + $0x10] sm:$0x3]
      %v547 = vld [vmem:[#allocation2 + $0x18] sm:$0xff]
      %v548 = vld [vmem:[#allocation2 + $0x20] sm:$0xff]
      %v549 = vld [vmem:[#allocation2 + $0x28] sm:$0x3]
      %v550 = vld [vmem:[#allocation2 + $0x30] sm:$0xff]
      %v551 = vld [vmem:[#allocation2 + $0x38] sm:$0xff]
      %v552 = vld [vmem:[#allocation2 + $0x40] sm:$0x3]
      %v553 = vld [vmem:[#allocation2 + $0x48] sm:$0xff]
      %v554 = vld [vmem:[#allocation2 + $0x50] sm:$0xff]
      %v555 = vld [vmem:[#allocation2 + $0x58] sm:$0x3]
      %568 = vrot.lane.b32.xlu0 %v544, 2
      %v569 = vpop.permute.xlu0 %568
      %570 = vrot.lane.b32.xlu0 %v545, 2
      %v571 = vpop.permute.xlu0 %570
      %572 = vrot.lane.b32.xlu0 %v546, 2
      %v573 = vpop.permute.xlu0 %572
      %574 = vrot.lane.b32.xlu0 %v547, 2
      %v575 = vpop.permute.xlu0 %574
      %576 = vrot.lane.b32.xlu0 %v548, 2
      %v577 = vpop.permute.xlu0 %576
      %578 = vrot.lane.b32.xlu0 %v549, 2
      %v579 = vpop.permute.xlu0 %578
      %580 = vrot.lane.b32.xlu0 %v550, 2
      %v581 = vpop.permute.xlu0 %580
      %582 = vrot.lane.b32.xlu0 %v551, 2
      %v583 = vpop.permute.xlu0 %582
      %584 = vrot.lane.b32.xlu0 %v552, 2
      %v585 = vpop.permute.xlu0 %584
      %586 = vrot.lane.b32.xlu0 %v553, 2
      %v587 = vpop.permute.xlu0 %586
      %588 = vrot.lane.b32.xlu0 %v554, 2
      %v589 = vpop.permute.xlu0 %588
      %590 = vrot.lane.b32.xlu0 %v555, 2
      %v591 = vpop.permute.xlu0 %590
      %vm604 = vcmask 146568
      %605 = vst.msk [vmem:[#allocation2] sm:$0xff] %vm604, %v569
      %606 = vst.msk [vmem:[#allocation2 + $0x8] sm:$0xff] %vm604, %v571
      %vm607 = vcmask 140424
      %608 = vst.msk [vmem:[#allocation2 + $0x10] sm:$0x3] %vm607, %v573
      %609 = vst.msk [vmem:[#allocation2 + $0x18] sm:$0xff] %vm604, %v575
      %610 = vst.msk [vmem:[#allocation2 + $0x20] sm:$0xff] %vm604, %v577
      %611 = vst.msk [vmem:[#allocation2 + $0x28] sm:$0x3] %vm607, %v579
      %612 = vst.msk [vmem:[#allocation2 + $0x30] sm:$0xff] %vm604, %v581
      %613 = vst.msk [vmem:[#allocation2 + $0x38] sm:$0xff] %vm604, %v583
      %614 = vst.msk [vmem:[#allocation2 + $0x40] sm:$0x3] %vm607, %v585
      %615 = vst.msk [vmem:[#allocation2 + $0x48] sm:$0xff] %vm604, %v587
      %616 = vst.msk [vmem:[#allocation2 + $0x50] sm:$0xff] %vm604, %v589
      %617 = vst.msk [vmem:[#allocation2 + $0x58] sm:$0x3] %vm607, %v591
      %v618 = vld [vmem:[%s1] sm:$0x3]
      %v619 = vld [vmem:[#allocation2] sm:$0xff]
      %v620 = vld [vmem:[#allocation2 + $0x8] sm:$0xff]
      %v621 = vld [vmem:[#allocation2 + $0x18] sm:$0xff]
      %v622 = vld [vmem:[#allocation2 + $0x20] sm:$0xff]
      %v623 = vld [vmem:[#allocation2 + $0x30] sm:$0xff]
      %v624 = vld [vmem:[#allocation2 + $0x38] sm:$0xff]
      %v625 = vld [vmem:[#allocation2 + $0x48] sm:$0xff]
      %v626 = vld [vmem:[#allocation2 + $0x50] sm:$0xff]
      %v627 = vcombine.low %v619, %v623
      %v628 = vcombine.high %v619, %v623
      %v630 = vunpack.c.l.s4 1983009808
      %v631 = vunpack.c.0.s8 %v630
      %v632 = vlaneseq
      %v633 = vshrl.u32 %v632, 7
      %v634 = vsub.s32 %v631, %v633
      %v635 = vrot.slane %v627, %v634
      %v637 = vunpack.c.l.s4 1983009808
      %v638 = vunpack.c.0.s8 %v637
      %v639 = vlaneseq
      %v640 = vshrl.u32 %v639, 7
      %v641 = vsub.s32 %v638, %v640
      %v642 = vrot.slane %v628, %v641
      %v643 = vcombine.low %v621, %v625
      %v644 = vcombine.high %v621, %v625
      %v646 = vunpack.c.l.s4 1983009808
      %v647 = vunpack.c.0.s8 %v646
      %v648 = vlaneseq
      %v649 = vshrl.u32 %v648, 7
      %v650 = vsub.s32 %v647, %v649
      %v651 = vrot.slane %v643, %v650
      %v653 = vunpack.c.l.s4 1983009808
      %v654 = vunpack.c.0.s8 %v653
      %v655 = vlaneseq
      %v656 = vshrl.u32 %v655, 7
      %v657 = vsub.s32 %v654, %v656
      %v658 = vrot.slane %v644, %v657
      %v659 = vcombine.low %v635, %v651
      %v660 = vcombine.high %v635, %v651
      %v662 = vunpack.c.l.s4 1934713408
      %v663 = vunpack.c.0.s8 %v662
      %v664 = vlaneseq
      %v665 = vshrl.u32 %v664, 7
      %v666 = vsub.s32 %v663, %v665
      %v667 = vrot.slane %v659, %v666
      %v669 = vunpack.c.l.s4 1934713408
      %v670 = vunpack.c.0.s8 %v669
      %v671 = vlaneseq
      %v672 = vshrl.u32 %v671, 7
      %v673 = vsub.s32 %v670, %v672
      %v674 = vrot.slane %v660, %v673
      %v675 = vcombine.low %v642, %v658
      %v676 = vcombine.high %v642, %v658
      %v678 = vunpack.c.l.s4 1934713408
      %v679 = vunpack.c.0.s8 %v678
      %v680 = vlaneseq
      %v681 = vshrl.u32 %v680, 7
      %v682 = vsub.s32 %v679, %v681
      %v683 = vrot.slane %v675, %v682
      %v685 = vunpack.c.l.s4 1934713408
      %v686 = vunpack.c.0.s8 %v685
      %v687 = vlaneseq
      %v688 = vshrl.u32 %v687, 7
      %v689 = vsub.s32 %v686, %v688
      %v690 = vrot.slane %v676, %v689
      %v691 = vcombine.high %v667, 0.0
      %v692 = vcombine.high %v674, 0.0
      %v693 = vcombine.high %v683, 0.0
      %v694 = vcombine.high %v690, 0.0
      %v695 = vcombine.low %v620, %v624
      %v696 = vcombine.high %v620, %v624
      %v698 = vunpack.c.l.s4 1983009808
      %v699 = vunpack.c.0.s8 %v698
      %v700 = vlaneseq
      %v701 = vshrl.u32 %v700, 7
      %v702 = vsub.s32 %v699, %v701
      %v703 = vrot.slane %v695, %v702
      %v705 = vunpack.c.l.s4 1983009808
      %v706 = vunpack.c.0.s8 %v705
      %v707 = vlaneseq
      %v708 = vshrl.u32 %v707, 7
      %v709 = vsub.s32 %v706, %v708
      %v710 = vrot.slane %v696, %v709
      %v711 = vcombine.low %v622, %v626
      %v712 = vcombine.high %v622, %v626
      %v714 = vunpack.c.l.s4 1983009808
      %v715 = vunpack.c.0.s8 %v714
      %v716 = vlaneseq
      %v717 = vshrl.u32 %v716, 7
      %v718 = vsub.s32 %v715, %v717
      %v719 = vrot.slane %v711, %v718
      %v721 = vunpack.c.l.s4 1983009808
      %v722 = vunpack.c.0.s8 %v721
      %v723 = vlaneseq
      %v724 = vshrl.u32 %v723, 7
      %v725 = vsub.s32 %v722, %v724
      %v726 = vrot.slane %v712, %v725
      %v727 = vcombine.low %v703, %v719
      %v728 = vcombine.high %v703, %v719
      %v730 = vunpack.c.l.s4 1934713408
      %v731 = vunpack.c.0.s8 %v730
      %v732 = vlaneseq
      %v733 = vshrl.u32 %v732, 7
      %v734 = vsub.s32 %v731, %v733
      %v735 = vrot.slane %v727, %v734
      %v737 = vunpack.c.l.s4 1934713408
      %v738 = vunpack.c.0.s8 %v737
      %v739 = vlaneseq
      %v740 = vshrl.u32 %v739, 7
      %v741 = vsub.s32 %v738, %v740
      %v742 = vrot.slane %v728, %v741
      %v743 = vcombine.low %v710, %v726
      %v744 = vcombine.high %v710, %v726
      %v746 = vunpack.c.l.s4 1934713408
      %v747 = vunpack.c.0.s8 %v746
      %v748 = vlaneseq
      %v749 = vshrl.u32 %v748, 7
      %v750 = vsub.s32 %v747, %v749
      %v751 = vrot.slane %v743, %v750
      %v753 = vunpack.c.l.s4 1934713408
      %v754 = vunpack.c.0.s8 %v753
      %v755 = vlaneseq
      %v756 = vshrl.u32 %v755, 7
      %v757 = vsub.s32 %v754, %v756
      %v758 = vrot.slane %v744, %v757
      %v759 = vcombine.high %v735, 0.0
      %v760 = vcombine.high %v742, 0.0
      %v761 = vcombine.high %v751, 0.0
      %v762 = vcombine.high %v758, 0.0
      %764 = vrot.lane.b32.xlu0 %v691, 16
      %v765 = vpop.permute.xlu0 %764
      %768 = vrot.lane.b32.xlu0 %v674, 32
      %v769 = vpop.permute.xlu0 %768
      %772 = vrot.lane.b32.xlu0 %v692, 48
      %v773 = vpop.permute.xlu0 %772
      %776 = vrot.lane.b32.xlu0 %v683, 64
      %v777 = vpop.permute.xlu0 %776
      %780 = vrot.lane.b32.xlu0 %v693, 80
      %v781 = vpop.permute.xlu0 %780
      %784 = vrot.lane.b32.xlu0 %v690, 96
      %v785 = vpop.permute.xlu0 %784
      %788 = vrot.lane.b32.xlu0 %v694, 112
      %v789 = vpop.permute.xlu0 %788
      %792 = vrot.lane.b32.xlu0 %v759, 16
      %v793 = vpop.permute.xlu0 %792
      %796 = vrot.lane.b32.xlu0 %v742, 32
      %v797 = vpop.permute.xlu0 %796
      %800 = vrot.lane.b32.xlu0 %v760, 48
      %v801 = vpop.permute.xlu0 %800
      %804 = vrot.lane.b32.xlu0 %v751, 64
      %v805 = vpop.permute.xlu0 %804
      %808 = vrot.lane.b32.xlu0 %v761, 80
      %v809 = vpop.permute.xlu0 %808
      %812 = vrot.lane.b32.xlu0 %v758, 96
      %v813 = vpop.permute.xlu0 %812
      %816 = vrot.lane.b32.xlu0 %v762, 112
      %v817 = vpop.permute.xlu0 %816
      %vm819 = vcmask 130048
      %v820 = vsel %vm819, %v667, %v765
      %vm821 = vcmask 261120
      %v822 = vsel %vm821, %v820, %v769
      %vm823 = vcmask 392192
      %v824 = vsel %vm823, %v822, %v773
      %vm825 = vcmask 523264
      %v826 = vsel %vm825, %v824, %v777
      %vm827 = vcmask 654336
      %v828 = vsel %vm827, %v826, %v781
      %vm829 = vcmask 785408
      %v830 = vsel %vm829, %v828, %v785
      %vm831 = vcmask 916480
      %v832 = vsel %vm831, %v830, %v789
      %v833 = vsel %vm819, %v735, %v793
      %v834 = vsel %vm821, %v833, %v797
      %v835 = vsel %vm823, %v834, %v801
      %v836 = vsel %vm825, %v835, %v805
      %v837 = vsel %vm827, %v836, %v809
      %v838 = vsel %vm829, %v837, %v813
      %v839 = vsel %vm831, %v838, %v817
      %848 = vrot.lane.b32.xlu0 %v619, 127
      %v849 = vpop.permute.xlu0 %848
      %850 = vrot.lane.b32.xlu0 %v620, 127
      %v851 = vpop.permute.xlu0 %850
      %852 = vrot.lane.b32.xlu0 %v621, 127
      %v853 = vpop.permute.xlu0 %852
      %854 = vrot.lane.b32.xlu0 %v622, 127
      %v855 = vpop.permute.xlu0 %854
      %856 = vrot.lane.b32.xlu0 %v623, 127
      %v857 = vpop.permute.xlu0 %856
      %858 = vrot.lane.b32.xlu0 %v624, 127
      %v859 = vpop.permute.xlu0 %858
      %860 = vrot.lane.b32.xlu0 %v625, 127
      %v861 = vpop.permute.xlu0 %860
      %862 = vrot.lane.b32.xlu0 %v626, 127
      %v863 = vpop.permute.xlu0 %862
      %v872 = vcombine.low %v849, %v857
      %v873 = vcombine.high %v849, %v857
      %v875 = vunpack.c.l.s4 1983009808
      %v876 = vunpack.c.0.s8 %v875
      %v877 = vlaneseq
      %v878 = vshrl.u32 %v877, 7
      %v879 = vsub.s32 %v876, %v878
      %v880 = vrot.slane %v872, %v879
      %v882 = vunpack.c.l.s4 1983009808
      %v883 = vunpack.c.0.s8 %v882
      %v884 = vlaneseq
      %v885 = vshrl.u32 %v884, 7
      %v886 = vsub.s32 %v883, %v885
      %v887 = vrot.slane %v873, %v886
      %v888 = vcombine.low %v853, %v861
      %v889 = vcombine.high %v853, %v861
      %v891 = vunpack.c.l.s4 1983009808
      %v892 = vunpack.c.0.s8 %v891
      %v893 = vlaneseq
      %v894 = vshrl.u32 %v893, 7
      %v895 = vsub.s32 %v892, %v894
      %v896 = vrot.slane %v888, %v895
      %v898 = vunpack.c.l.s4 1983009808
      %v899 = vunpack.c.0.s8 %v898
      %v900 = vlaneseq
      %v901 = vshrl.u32 %v900, 7
      %v902 = vsub.s32 %v899, %v901
      %v903 = vrot.slane %v889, %v902
      %v904 = vcombine.low %v880, %v896
      %v905 = vcombine.high %v880, %v896
      %v907 = vunpack.c.l.s4 1934713408
      %v908 = vunpack.c.0.s8 %v907
      %v909 = vlaneseq
      %v910 = vshrl.u32 %v909, 7
      %v911 = vsub.s32 %v908, %v910
      %v912 = vrot.slane %v904, %v911
      %v914 = vunpack.c.l.s4 1934713408
      %v915 = vunpack.c.0.s8 %v914
      %v916 = vlaneseq
      %v917 = vshrl.u32 %v916, 7
      %v918 = vsub.s32 %v915, %v917
      %v919 = vrot.slane %v905, %v918
      %v920 = vcombine.low %v887, %v903
      %v921 = vcombine.high %v887, %v903
      %v923 = vunpack.c.l.s4 1934713408
      %v924 = vunpack.c.0.s8 %v923
      %v925 = vlaneseq
      %v926 = vshrl.u32 %v925, 7
      %v927 = vsub.s32 %v924, %v926
      %v928 = vrot.slane %v920, %v927
      %v930 = vunpack.c.l.s4 1934713408
      %v931 = vunpack.c.0.s8 %v930
      %v932 = vlaneseq
      %v933 = vshrl.u32 %v932, 7
      %v934 = vsub.s32 %v931, %v933
      %v935 = vrot.slane %v921, %v934
      %v936 = vcombine.high %v912, 0.0
      %v937 = vcombine.high %v919, 0.0
      %v938 = vcombine.high %v928, 0.0
      %v939 = vcombine.high %v935, 0.0
      %v940 = vcombine.low %v851, %v859
      %v941 = vcombine.high %v851, %v859
      %v943 = vunpack.c.l.s4 1983009808
      %v944 = vunpack.c.0.s8 %v943
      %v945 = vlaneseq
      %v946 = vshrl.u32 %v945, 7
      %v947 = vsub.s32 %v944, %v946
      %v948 = vrot.slane %v940, %v947
      %v950 = vunpack.c.l.s4 1983009808
      %v951 = vunpack.c.0.s8 %v950
      %v952 = vlaneseq
      %v953 = vshrl.u32 %v952, 7
      %v954 = vsub.s32 %v951, %v953
      %v955 = vrot.slane %v941, %v954
      %v956 = vcombine.low %v855, %v863
      %v957 = vcombine.high %v855, %v863
      %v959 = vunpack.c.l.s4 1983009808
      %v960 = vunpack.c.0.s8 %v959
      %v961 = vlaneseq
      %v962 = vshrl.u32 %v961, 7
      %v963 = vsub.s32 %v960, %v962
      %v964 = vrot.slane %v956, %v963
      %v966 = vunpack.c.l.s4 1983009808
      %v967 = vunpack.c.0.s8 %v966
      %v968 = vlaneseq
      %v969 = vshrl.u32 %v968, 7
      %v970 = vsub.s32 %v967, %v969
      %v971 = vrot.slane %v957, %v970
      %v972 = vcombine.low %v948, %v964
      %v973 = vcombine.high %v948, %v964
      %v975 = vunpack.c.l.s4 1934713408
      %v976 = vunpack.c.0.s8 %v975
      %v977 = vlaneseq
      %v978 = vshrl.u32 %v977, 7
      %v979 = vsub.s32 %v976, %v978
      %v980 = vrot.slane %v972, %v979
      %v982 = vunpack.c.l.s4 1934713408
      %v983 = vunpack.c.0.s8 %v982
      %v984 = vlaneseq
      %v985 = vshrl.u32 %v984, 7
      %v986 = vsub.s32 %v983, %v985
      %v987 = vrot.slane %v973, %v986
      %v988 = vcombine.low %v955, %v971
      %v989 = vcombine.high %v955, %v971
      %v991 = vunpack.c.l.s4 1934713408
      %v992 = vunpack.c.0.s8 %v991
      %v993 = vlaneseq
      %v994 = vshrl.u32 %v993, 7
      %v995 = vsub.s32 %v992, %v994
      %v996 = vrot.slane %v988, %v995
      %v998 = vunpack.c.l.s4 1934713408
      %v999 = vunpack.c.0.s8 %v998
      %v1000 = vlaneseq
      %v1001 = vshrl.u32 %v1000, 7
      %v1002 = vsub.s32 %v999, %v1001
      %v1003 = vrot.slane %v989, %v1002
      %v1004 = vcombine.high %v980, 0.0
      %v1005 = vcombine.high %v987, 0.0
      %v1006 = vcombine.high %v996, 0.0
      %v1007 = vcombine.high %v1003, 0.0
      %1009 = vrot.lane.b32.xlu0 %v936, 16
      %v1010 = vpop.permute.xlu0 %1009
      %1013 = vrot.lane.b32.xlu0 %v919, 32
      %v1014 = vpop.permute.xlu0 %1013
      %1017 = vrot.lane.b32.xlu0 %v937, 48
      %v1018 = vpop.permute.xlu0 %1017
      %1021 = vrot.lane.b32.xlu0 %v928, 64
      %v1022 = vpop.permute.xlu0 %1021
      %1025 = vrot.lane.b32.xlu0 %v938, 80
      %v1026 = vpop.permute.xlu0 %1025
      %1029 = vrot.lane.b32.xlu0 %v935, 96
      %v1030 = vpop.permute.xlu0 %1029
      %1033 = vrot.lane.b32.xlu0 %v939, 112
      %v1034 = vpop.permute.xlu0 %1033
      %1037 = vrot.lane.b32.xlu0 %v1004, 16
      %v1038 = vpop.permute.xlu0 %1037
      %1041 = vrot.lane.b32.xlu0 %v987, 32
      %v1042 = vpop.permute.xlu0 %1041
      %1045 = vrot.lane.b32.xlu0 %v1005, 48
      %v1046 = vpop.permute.xlu0 %1045
      %1049 = vrot.lane.b32.xlu0 %v996, 64
      %v1050 = vpop.permute.xlu0 %1049
      %1053 = vrot.lane.b32.xlu0 %v1006, 80
      %v1054 = vpop.permute.xlu0 %1053
      %1057 = vrot.lane.b32.xlu0 %v1003, 96
      %v1058 = vpop.permute.xlu0 %1057
      %1061 = vrot.lane.b32.xlu0 %v1007, 112
      %v1062 = vpop.permute.xlu0 %1061
      %v1064 = vsel %vm819, %v912, %v1010
      %v1065 = vsel %vm821, %v1064, %v1014
      %v1066 = vsel %vm823, %v1065, %v1018
      %v1067 = vsel %vm825, %v1066, %v1022
      %v1068 = vsel %vm827, %v1067, %v1026
      %v1069 = vsel %vm829, %v1068, %v1030
      %v1070 = vsel %vm831, %v1069, %v1034
      %v1071 = vsel %vm819, %v980, %v1038
      %v1072 = vsel %vm821, %v1071, %v1042
      %v1073 = vsel %vm823, %v1072, %v1046
      %v1074 = vsel %vm825, %v1073, %v1050
      %v1075 = vsel %vm827, %v1074, %v1054
      %v1076 = vsel %vm829, %v1075, %v1058
      %v1077 = vsel %vm831, %v1076, %v1062
      %1078 = vrot.lane.b32.xlu0 %v619, 126
      %v1079 = vpop.permute.xlu0 %1078
      %1080 = vrot.lane.b32.xlu0 %v620, 126
      %v1081 = vpop.permute.xlu0 %1080
      %1082 = vrot.lane.b32.xlu0 %v621, 126
      %v1083 = vpop.permute.xlu0 %1082
      %1084 = vrot.lane.b32.xlu0 %v622, 126
      %v1085 = vpop.permute.xlu0 %1084
      %1086 = vrot.lane.b32.xlu0 %v623, 126
      %v1087 = vpop.permute.xlu0 %1086
      %1088 = vrot.lane.b32.xlu0 %v624, 126
      %v1089 = vpop.permute.xlu0 %1088
      %1090 = vrot.lane.b32.xlu0 %v625, 126
      %v1091 = vpop.permute.xlu0 %1090
      %1092 = vrot.lane.b32.xlu0 %v626, 126
      %v1093 = vpop.permute.xlu0 %1092
      %v1102 = vcombine.low %v1079, %v1087
      %v1103 = vcombine.high %v1079, %v1087
      %v1105 = vunpack.c.l.s4 1983009808
      %v1106 = vunpack.c.0.s8 %v1105
      %v1107 = vlaneseq
      %v1108 = vshrl.u32 %v1107, 7
      %v1109 = vsub.s32 %v1106, %v1108
      %v1110 = vrot.slane %v1102, %v1109
      %v1112 = vunpack.c.l.s4 1983009808
      %v1113 = vunpack.c.0.s8 %v1112
      %v1114 = vlaneseq
      %v1115 = vshrl.u32 %v1114, 7
      %v1116 = vsub.s32 %v1113, %v1115
      %v1117 = vrot.slane %v1103, %v1116
      %v1118 = vcombine.low %v1083, %v1091
      %v1119 = vcombine.high %v1083, %v1091
      %v1121 = vunpack.c.l.s4 1983009808
      %v1122 = vunpack.c.0.s8 %v1121
      %v1123 = vlaneseq
      %v1124 = vshrl.u32 %v1123, 7
      %v1125 = vsub.s32 %v1122, %v1124
      %v1126 = vrot.slane %v1118, %v1125
      %v1128 = vunpack.c.l.s4 1983009808
      %v1129 = vunpack.c.0.s8 %v1128
      %v1130 = vlaneseq
      %v1131 = vshrl.u32 %v1130, 7
      %v1132 = vsub.s32 %v1129, %v1131
      %v1133 = vrot.slane %v1119, %v1132
      %v1134 = vcombine.low %v1110, %v1126
      %v1135 = vcombine.high %v1110, %v1126
      %v1137 = vunpack.c.l.s4 1934713408
      %v1138 = vunpack.c.0.s8 %v1137
      %v1139 = vlaneseq
      %v1140 = vshrl.u32 %v1139, 7
      %v1141 = vsub.s32 %v1138, %v1140
      %v1142 = vrot.slane %v1134, %v1141
      %v1144 = vunpack.c.l.s4 1934713408
      %v1145 = vunpack.c.0.s8 %v1144
      %v1146 = vlaneseq
      %v1147 = vshrl.u32 %v1146, 7
      %v1148 = vsub.s32 %v1145, %v1147
      %v1149 = vrot.slane %v1135, %v1148
      %v1150 = vcombine.low %v1117, %v1133
      %v1151 = vcombine.high %v1117, %v1133
      %v1153 = vunpack.c.l.s4 1934713408
      %v1154 = vunpack.c.0.s8 %v1153
      %v1155 = vlaneseq
      %v1156 = vshrl.u32 %v1155, 7
      %v1157 = vsub.s32 %v1154, %v1156
      %v1158 = vrot.slane %v1150, %v1157
      %v1160 = vunpack.c.l.s4 1934713408
      %v1161 = vunpack.c.0.s8 %v1160
      %v1162 = vlaneseq
      %v1163 = vshrl.u32 %v1162, 7
      %v1164 = vsub.s32 %v1161, %v1163
      %v1165 = vrot.slane %v1151, %v1164
      %v1166 = vcombine.high %v1142, 0.0
      %v1167 = vcombine.high %v1149, 0.0
      %v1168 = vcombine.high %v1158, 0.0
      %v1169 = vcombine.high %v1165, 0.0
      %v1170 = vcombine.low %v1081, %v1089
      %v1171 = vcombine.high %v1081, %v1089
      %v1173 = vunpack.c.l.s4 1983009808
      %v1174 = vunpack.c.0.s8 %v1173
      %v1175 = vlaneseq
      %v1176 = vshrl.u32 %v1175, 7
      %v1177 = vsub.s32 %v1174, %v1176
      %v1178 = vrot.slane %v1170, %v1177
      %v1180 = vunpack.c.l.s4 1983009808
      %v1181 = vunpack.c.0.s8 %v1180
      %v1182 = vlaneseq
      %v1183 = vshrl.u32 %v1182, 7
      %v1184 = vsub.s32 %v1181, %v1183
      %v1185 = vrot.slane %v1171, %v1184
      %v1186 = vcombine.low %v1085, %v1093
      %v1187 = vcombine.high %v1085, %v1093
      %v1189 = vunpack.c.l.s4 1983009808
      %v1190 = vunpack.c.0.s8 %v1189
      %v1191 = vlaneseq
      %v1192 = vshrl.u32 %v1191, 7
      %v1193 = vsub.s32 %v1190, %v1192
      %v1194 = vrot.slane %v1186, %v1193
      %v1196 = vunpack.c.l.s4 1983009808
      %v1197 = vunpack.c.0.s8 %v1196
      %v1198 = vlaneseq
      %v1199 = vshrl.u32 %v1198, 7
      %v1200 = vsub.s32 %v1197, %v1199
      %v1201 = vrot.slane %v1187, %v1200
      %v1202 = vcombine.low %v1178, %v1194
      %v1203 = vcombine.high %v1178, %v1194
      %v1205 = vunpack.c.l.s4 1934713408
      %v1206 = vunpack.c.0.s8 %v1205
      %v1207 = vlaneseq
      %v1208 = vshrl.u32 %v1207, 7
      %v1209 = vsub.s32 %v1206, %v1208
      %v1210 = vrot.slane %v1202, %v1209
      %v1212 = vunpack.c.l.s4 1934713408
      %v1213 = vunpack.c.0.s8 %v1212
      %v1214 = vlaneseq
      %v1215 = vshrl.u32 %v1214, 7
      %v1216 = vsub.s32 %v1213, %v1215
      %v1217 = vrot.slane %v1203, %v1216
      %v1218 = vcombine.low %v1185, %v1201
      %v1219 = vcombine.high %v1185, %v1201
      %v1221 = vunpack.c.l.s4 1934713408
      %v1222 = vunpack.c.0.s8 %v1221
      %v1223 = vlaneseq
      %v1224 = vshrl.u32 %v1223, 7
      %v1225 = vsub.s32 %v1222, %v1224
      %v1226 = vrot.slane %v1218, %v1225
      %v1228 = vunpack.c.l.s4 1934713408
      %v1229 = vunpack.c.0.s8 %v1228
      %v1230 = vlaneseq
      %v1231 = vshrl.u32 %v1230, 7
      %v1232 = vsub.s32 %v1229, %v1231
      %v1233 = vrot.slane %v1219, %v1232
      %v1234 = vcombine.high %v1210, 0.0
      %v1235 = vcombine.high %v1217, 0.0
      %v1236 = vcombine.high %v1226, 0.0
      %v1237 = vcombine.high %v1233, 0.0
      %1239 = vrot.lane.b32.xlu0 %v1166, 16
      %v1240 = vpop.permute.xlu0 %1239
      %1243 = vrot.lane.b32.xlu0 %v1149, 32
      %v1244 = vpop.permute.xlu0 %1243
      %1247 = vrot.lane.b32.xlu0 %v1167, 48
      %v1248 = vpop.permute.xlu0 %1247
      %1251 = vrot.lane.b32.xlu0 %v1158, 64
      %v1252 = vpop.permute.xlu0 %1251
      %1255 = vrot.lane.b32.xlu0 %v1168, 80
      %v1256 = vpop.permute.xlu0 %1255
      %1259 = vrot.lane.b32.xlu0 %v1165, 96
      %v1260 = vpop.permute.xlu0 %1259
      %1263 = vrot.lane.b32.xlu0 %v1169, 112
      %v1264 = vpop.permute.xlu0 %1263
      %1267 = vrot.lane.b32.xlu0 %v1234, 16
      %v1268 = vpop.permute.xlu0 %1267
      %1271 = vrot.lane.b32.xlu0 %v1217, 32
      %v1272 = vpop.permute.xlu0 %1271
      %1275 = vrot.lane.b32.xlu0 %v1235, 48
      %v1276 = vpop.permute.xlu0 %1275
      %1279 = vrot.lane.b32.xlu0 %v1226, 64
      %v1280 = vpop.permute.xlu0 %1279
      %1283 = vrot.lane.b32.xlu0 %v1236, 80
      %v1284 = vpop.permute.xlu0 %1283
      %1287 = vrot.lane.b32.xlu0 %v1233, 96
      %v1288 = vpop.permute.xlu0 %1287
      %1291 = vrot.lane.b32.xlu0 %v1237, 112
      %v1292 = vpop.permute.xlu0 %1291
      %v1294 = vsel %vm819, %v1142, %v1240
      %v1295 = vsel %vm821, %v1294, %v1244
      %v1296 = vsel %vm823, %v1295, %v1248
      %v1297 = vsel %vm825, %v1296, %v1252
      %v1298 = vsel %vm827, %v1297, %v1256
      %v1299 = vsel %vm829, %v1298, %v1260
      %v1300 = vsel %vm831, %v1299, %v1264
      %v1301 = vsel %vm819, %v1210, %v1268
      %v1302 = vsel %vm821, %v1301, %v1272
      %v1303 = vsel %vm823, %v1302, %v1276
      %v1304 = vsel %vm825, %v1303, %v1280
      %v1305 = vsel %vm827, %v1304, %v1284
      %v1306 = vsel %vm829, %v1305, %v1288
      %v1307 = vsel %vm831, %v1306, %v1292
      %v1308 = vld [vmem:[#allocation2 + $0x1] sm:$0xff]
      %v1309 = vld [vmem:[#allocation2 + $0x9] sm:$0xff]
      %v1310 = vld [vmem:[#allocation2 + $0x19] sm:$0xff]
      %v1311 = vld [vmem:[#allocation2 + $0x21] sm:$0xff]
      %v1312 = vld [vmem:[#allocation2 + $0x31] sm:$0xff]
      %v1313 = vld [vmem:[#allocation2 + $0x39] sm:$0xff]
      %v1314 = vld [vmem:[#allocation2 + $0x49] sm:$0xff]
      %v1315 = vld [vmem:[#allocation2 + $0x51] sm:$0xff]
      %v1316 = vcombine.low %v1308, %v1312
      %v1317 = vcombine.high %v1308, %v1312
      %v1319 = vunpack.c.l.s4 1983009808
      %v1320 = vunpack.c.0.s8 %v1319
      %v1321 = vlaneseq
      %v1322 = vshrl.u32 %v1321, 7
      %v1323 = vsub.s32 %v1320, %v1322
      %v1324 = vrot.slane %v1316, %v1323
      %v1326 = vunpack.c.l.s4 1983009808
      %v1327 = vunpack.c.0.s8 %v1326
      %v1328 = vlaneseq
      %v1329 = vshrl.u32 %v1328, 7
      %v1330 = vsub.s32 %v1327, %v1329
      %v1331 = vrot.slane %v1317, %v1330
      %v1332 = vcombine.low %v1310, %v1314
      %v1333 = vcombine.high %v1310, %v1314
      %v1335 = vunpack.c.l.s4 1983009808
      %v1336 = vunpack.c.0.s8 %v1335
      %v1337 = vlaneseq
      %v1338 = vshrl.u32 %v1337, 7
      %v1339 = vsub.s32 %v1336, %v1338
      %v1340 = vrot.slane %v1332, %v1339
      %v1342 = vunpack.c.l.s4 1983009808
      %v1343 = vunpack.c.0.s8 %v1342
      %v1344 = vlaneseq
      %v1345 = vshrl.u32 %v1344, 7
      %v1346 = vsub.s32 %v1343, %v1345
      %v1347 = vrot.slane %v1333, %v1346
      %v1348 = vcombine.low %v1324, %v1340
      %v1349 = vcombine.high %v1324, %v1340
      %v1351 = vunpack.c.l.s4 1934713408
      %v1352 = vunpack.c.0.s8 %v1351
      %v1353 = vlaneseq
      %v1354 = vshrl.u32 %v1353, 7
      %v1355 = vsub.s32 %v1352, %v1354
      %v1356 = vrot.slane %v1348, %v1355
      %v1358 = vunpack.c.l.s4 1934713408
      %v1359 = vunpack.c.0.s8 %v1358
      %v1360 = vlaneseq
      %v1361 = vshrl.u32 %v1360, 7
      %v1362 = vsub.s32 %v1359, %v1361
      %v1363 = vrot.slane %v1349, %v1362
      %v1364 = vcombine.low %v1331, %v1347
      %v1365 = vcombine.high %v1331, %v1347
      %v1367 = vunpack.c.l.s4 1934713408
      %v1368 = vunpack.c.0.s8 %v1367
      %v1369 = vlaneseq
      %v1370 = vshrl.u32 %v1369, 7
      %v1371 = vsub.s32 %v1368, %v1370
      %v1372 = vrot.slane %v1364, %v1371
      %v1374 = vunpack.c.l.s4 1934713408
      %v1375 = vunpack.c.0.s8 %v1374
      %v1376 = vlaneseq
      %v1377 = vshrl.u32 %v1376, 7
      %v1378 = vsub.s32 %v1375, %v1377
      %v1379 = vrot.slane %v1365, %v1378
      %v1380 = vcombine.high %v1356, 0.0
      %v1381 = vcombine.high %v1363, 0.0
      %v1382 = vcombine.high %v1372, 0.0
      %v1383 = vcombine.high %v1379, 0.0
      %v1384 = vcombine.low %v1309, %v1313
      %v1385 = vcombine.high %v1309, %v1313
      %v1387 = vunpack.c.l.s4 1983009808
      %v1388 = vunpack.c.0.s8 %v1387
      %v1389 = vlaneseq
      %v1390 = vshrl.u32 %v1389, 7
      %v1391 = vsub.s32 %v1388, %v1390
      %v1392 = vrot.slane %v1384, %v1391
      %v1394 = vunpack.c.l.s4 1983009808
      %v1395 = vunpack.c.0.s8 %v1394
      %v1396 = vlaneseq
      %v1397 = vshrl.u32 %v1396, 7
      %v1398 = vsub.s32 %v1395, %v1397
      %v1399 = vrot.slane %v1385, %v1398
      %v1400 = vcombine.low %v1311, %v1315
      %v1401 = vcombine.high %v1311, %v1315
      %v1403 = vunpack.c.l.s4 1983009808
      %v1404 = vunpack.c.0.s8 %v1403
      %v1405 = vlaneseq
      %v1406 = vshrl.u32 %v1405, 7
      %v1407 = vsub.s32 %v1404, %v1406
      %v1408 = vrot.slane %v1400, %v1407
      %v1410 = vunpack.c.l.s4 1983009808
      %v1411 = vunpack.c.0.s8 %v1410
      %v1412 = vlaneseq
      %v1413 = vshrl.u32 %v1412, 7
      %v1414 = vsub.s32 %v1411, %v1413
      %v1415 = vrot.slane %v1401, %v1414
      %v1416 = vcombine.low %v1392, %v1408
      %v1417 = vcombine.high %v1392, %v1408
      %v1419 = vunpack.c.l.s4 1934713408
      %v1420 = vunpack.c.0.s8 %v1419
      %v1421 = vlaneseq
      %v1422 = vshrl.u32 %v1421, 7
      %v1423 = vsub.s32 %v1420, %v1422
      %v1424 = vrot.slane %v1416, %v1423
      %v1426 = vunpack.c.l.s4 1934713408
      %v1427 = vunpack.c.0.s8 %v1426
      %v1428 = vlaneseq
      %v1429 = vshrl.u32 %v1428, 7
      %v1430 = vsub.s32 %v1427, %v1429
      %v1431 = vrot.slane %v1417, %v1430
      %v1432 = vcombine.low %v1399, %v1415
      %v1433 = vcombine.high %v1399, %v1415
      %v1435 = vunpack.c.l.s4 1934713408
      %v1436 = vunpack.c.0.s8 %v1435
      %v1437 = vlaneseq
      %v1438 = vshrl.u32 %v1437, 7
      %v1439 = vsub.s32 %v1436, %v1438
      %v1440 = vrot.slane %v1432, %v1439
      %v1442 = vunpack.c.l.s4 1934713408
      %v1443 = vunpack.c.0.s8 %v1442
      %v1444 = vlaneseq
      %v1445 = vshrl.u32 %v1444, 7
      %v1446 = vsub.s32 %v1443, %v1445
      %v1447 = vrot.slane %v1433, %v1446
      %v1448 = vcombine.high %v1424, 0.0
      %v1449 = vcombine.high %v1431, 0.0
      %v1450 = vcombine.high %v1440, 0.0
      %v1451 = vcombine.high %v1447, 0.0
      %1453 = vrot.lane.b32.xlu0 %v1380, 16
      %v1454 = vpop.permute.xlu0 %1453
      %1457 = vrot.lane.b32.xlu0 %v1363, 32
      %v1458 = vpop.permute.xlu0 %1457
      %1461 = vrot.lane.b32.xlu0 %v1381, 48
      %v1462 = vpop.permute.xlu0 %1461
      %1465 = vrot.lane.b32.xlu0 %v1372, 64
      %v1466 = vpop.permute.xlu0 %1465
      %1469 = vrot.lane.b32.xlu0 %v1382, 80
      %v1470 = vpop.permute.xlu0 %1469
      %1473 = vrot.lane.b32.xlu0 %v1379, 96
      %v1474 = vpop.permute.xlu0 %1473
      %1477 = vrot.lane.b32.xlu0 %v1383, 112
      %v1478 = vpop.permute.xlu0 %1477
      %1481 = vrot.lane.b32.xlu0 %v1448, 16
      %v1482 = vpop.permute.xlu0 %1481
      %1485 = vrot.lane.b32.xlu0 %v1431, 32
      %v1486 = vpop.permute.xlu0 %1485
      %1489 = vrot.lane.b32.xlu0 %v1449, 48
      %v1490 = vpop.permute.xlu0 %1489
      %1493 = vrot.lane.b32.xlu0 %v1440, 64
      %v1494 = vpop.permute.xlu0 %1493
      %1497 = vrot.lane.b32.xlu0 %v1450, 80
      %v1498 = vpop.permute.xlu0 %1497
      %1501 = vrot.lane.b32.xlu0 %v1447, 96
      %v1502 = vpop.permute.xlu0 %1501
      %1505 = vrot.lane.b32.xlu0 %v1451, 112
      %v1506 = vpop.permute.xlu0 %1505
      %v1508 = vsel %vm819, %v1356, %v1454
      %v1509 = vsel %vm821, %v1508, %v1458
      %v1510 = vsel %vm823, %v1509, %v1462
      %v1511 = vsel %vm825, %v1510, %v1466
      %v1512 = vsel %vm827, %v1511, %v1470
      %v1513 = vsel %vm829, %v1512, %v1474
      %v1514 = vsel %vm831, %v1513, %v1478
      %v1515 = vsel %vm819, %v1424, %v1482
      %v1516 = vsel %vm821, %v1515, %v1486
      %v1517 = vsel %vm823, %v1516, %v1490
      %v1518 = vsel %vm825, %v1517, %v1494
      %v1519 = vsel %vm827, %v1518, %v1498
      %v1520 = vsel %vm829, %v1519, %v1502
      %v1521 = vsel %vm831, %v1520, %v1506
      %1530 = vrot.lane.b32.xlu0 %v1308, 127
      %v1531 = vpop.permute.xlu0 %1530
      %1532 = vrot.lane.b32.xlu0 %v1309, 127
      %v1533 = vpop.permute.xlu0 %1532
      %1534 = vrot.lane.b32.xlu0 %v1310, 127
      %v1535 = vpop.permute.xlu0 %1534
      %1536 = vrot.lane.b32.xlu0 %v1311, 127
      %v1537 = vpop.permute.xlu0 %1536
      %1538 = vrot.lane.b32.xlu0 %v1312, 127
      %v1539 = vpop.permute.xlu0 %1538
      %1540 = vrot.lane.b32.xlu0 %v1313, 127
      %v1541 = vpop.permute.xlu0 %1540
      %1542 = vrot.lane.b32.xlu0 %v1314, 127
      %v1543 = vpop.permute.xlu0 %1542
      %1544 = vrot.lane.b32.xlu0 %v1315, 127
      %v1545 = vpop.permute.xlu0 %1544
      %v1554 = vcombine.low %v1531, %v1539
      %v1555 = vcombine.high %v1531, %v1539
      %v1557 = vunpack.c.l.s4 1983009808
      %v1558 = vunpack.c.0.s8 %v1557
      %v1559 = vlaneseq
      %v1560 = vshrl.u32 %v1559, 7
      %v1561 = vsub.s32 %v1558, %v1560
      %v1562 = vrot.slane %v1554, %v1561
      %v1564 = vunpack.c.l.s4 1983009808
      %v1565 = vunpack.c.0.s8 %v1564
      %v1566 = vlaneseq
      %v1567 = vshrl.u32 %v1566, 7
      %v1568 = vsub.s32 %v1565, %v1567
      %v1569 = vrot.slane %v1555, %v1568
      %v1570 = vcombine.low %v1535, %v1543
      %v1571 = vcombine.high %v1535, %v1543
      %v1573 = vunpack.c.l.s4 1983009808
      %v1574 = vunpack.c.0.s8 %v1573
      %v1575 = vlaneseq
      %v1576 = vshrl.u32 %v1575, 7
      %v1577 = vsub.s32 %v1574, %v1576
      %v1578 = vrot.slane %v1570, %v1577
      %v1580 = vunpack.c.l.s4 1983009808
      %v1581 = vunpack.c.0.s8 %v1580
      %v1582 = vlaneseq
      %v1583 = vshrl.u32 %v1582, 7
      %v1584 = vsub.s32 %v1581, %v1583
      %v1585 = vrot.slane %v1571, %v1584
      %v1586 = vcombine.low %v1562, %v1578
      %v1587 = vcombine.high %v1562, %v1578
      %v1589 = vunpack.c.l.s4 1934713408
      %v1590 = vunpack.c.0.s8 %v1589
      %v1591 = vlaneseq
      %v1592 = vshrl.u32 %v1591, 7
      %v1593 = vsub.s32 %v1590, %v1592
      %v1594 = vrot.slane %v1586, %v1593
      %v1596 = vunpack.c.l.s4 1934713408
      %v1597 = vunpack.c.0.s8 %v1596
      %v1598 = vlaneseq
      %v1599 = vshrl.u32 %v1598, 7
      %v1600 = vsub.s32 %v1597, %v1599
      %v1601 = vrot.slane %v1587, %v1600
      %v1602 = vcombine.low %v1569, %v1585
      %v1603 = vcombine.high %v1569, %v1585
      %v1605 = vunpack.c.l.s4 1934713408
      %v1606 = vunpack.c.0.s8 %v1605
      %v1607 = vlaneseq
      %v1608 = vshrl.u32 %v1607, 7
      %v1609 = vsub.s32 %v1606, %v1608
      %v1610 = vrot.slane %v1602, %v1609
      %v1612 = vunpack.c.l.s4 1934713408
      %v1613 = vunpack.c.0.s8 %v1612
      %v1614 = vlaneseq
      %v1615 = vshrl.u32 %v1614, 7
      %v1616 = vsub.s32 %v1613, %v1615
      %v1617 = vrot.slane %v1603, %v1616
      %v1618 = vcombine.high %v1594, 0.0
      %v1619 = vcombine.high %v1601, 0.0
      %v1620 = vcombine.high %v1610, 0.0
      %v1621 = vcombine.high %v1617, 0.0
      %v1622 = vcombine.low %v1533, %v1541
      %v1623 = vcombine.high %v1533, %v1541
      %v1625 = vunpack.c.l.s4 1983009808
      %v1626 = vunpack.c.0.s8 %v1625
      %v1627 = vlaneseq
      %v1628 = vshrl.u32 %v1627, 7
      %v1629 = vsub.s32 %v1626, %v1628
      %v1630 = vrot.slane %v1622, %v1629
      %v1632 = vunpack.c.l.s4 1983009808
      %v1633 = vunpack.c.0.s8 %v1632
      %v1634 = vlaneseq
      %v1635 = vshrl.u32 %v1634, 7
      %v1636 = vsub.s32 %v1633, %v1635
      %v1637 = vrot.slane %v1623, %v1636
      %v1638 = vcombine.low %v1537, %v1545
      %v1639 = vcombine.high %v1537, %v1545
      %v1641 = vunpack.c.l.s4 1983009808
      %v1642 = vunpack.c.0.s8 %v1641
      %v1643 = vlaneseq
      %v1644 = vshrl.u32 %v1643, 7
      %v1645 = vsub.s32 %v1642, %v1644
      %v1646 = vrot.slane %v1638, %v1645
      %v1648 = vunpack.c.l.s4 1983009808
      %v1649 = vunpack.c.0.s8 %v1648
      %v1650 = vlaneseq
      %v1651 = vshrl.u32 %v1650, 7
      %v1652 = vsub.s32 %v1649, %v1651
      %v1653 = vrot.slane %v1639, %v1652
      %v1654 = vcombine.low %v1630, %v1646
      %v1655 = vcombine.high %v1630, %v1646
      %v1657 = vunpack.c.l.s4 1934713408
      %v1658 = vunpack.c.0.s8 %v1657
      %v1659 = vlaneseq
      %v1660 = vshrl.u32 %v1659, 7
      %v1661 = vsub.s32 %v1658, %v1660
      %v1662 = vrot.slane %v1654, %v1661
      %v1664 = vunpack.c.l.s4 1934713408
      %v1665 = vunpack.c.0.s8 %v1664
      %v1666 = vlaneseq
      %v1667 = vshrl.u32 %v1666, 7
      %v1668 = vsub.s32 %v1665, %v1667
      %v1669 = vrot.slane %v1655, %v1668
      %v1670 = vcombine.low %v1637, %v1653
      %v1671 = vcombine.high %v1637, %v1653
      %v1673 = vunpack.c.l.s4 1934713408
      %v1674 = vunpack.c.0.s8 %v1673
      %v1675 = vlaneseq
      %v1676 = vshrl.u32 %v1675, 7
      %v1677 = vsub.s32 %v1674, %v1676
      %v1678 = vrot.slane %v1670, %v1677
      %v1680 = vunpack.c.l.s4 1934713408
      %v1681 = vunpack.c.0.s8 %v1680
      %v1682 = vlaneseq
      %v1683 = vshrl.u32 %v1682, 7
      %v1684 = vsub.s32 %v1681, %v1683
      %v1685 = vrot.slane %v1671, %v1684
      %v1686 = vcombine.high %v1662, 0.0
      %v1687 = vcombine.high %v1669, 0.0
      %v1688 = vcombine.high %v1678, 0.0
      %v1689 = vcombine.high %v1685, 0.0
      %1691 = vrot.lane.b32.xlu0 %v1618, 16
      %v1692 = vpop.permute.xlu0 %1691
      %1695 = vrot.lane.b32.xlu0 %v1601, 32
      %v1696 = vpop.permute.xlu0 %1695
      %1699 = vrot.lane.b32.xlu0 %v1619, 48
      %v1700 = vpop.permute.xlu0 %1699
      %1703 = vrot.lane.b32.xlu0 %v1610, 64
      %v1704 = vpop.permute.xlu0 %1703
      %1707 = vrot.lane.b32.xlu0 %v1620, 80
      %v1708 = vpop.permute.xlu0 %1707
      %1711 = vrot.lane.b32.xlu0 %v1617, 96
      %v1712 = vpop.permute.xlu0 %1711
      %1715 = vrot.lane.b32.xlu0 %v1621, 112
      %v1716 = vpop.permute.xlu0 %1715
      %1719 = vrot.lane.b32.xlu0 %v1686, 16
      %v1720 = vpop.permute.xlu0 %1719
      %1723 = vrot.lane.b32.xlu0 %v1669, 32
      %v1724 = vpop.permute.xlu0 %1723
      %1727 = vrot.lane.b32.xlu0 %v1687, 48
      %v1728 = vpop.permute.xlu0 %1727
      %1731 = vrot.lane.b32.xlu0 %v1678, 64
      %v1732 = vpop.permute.xlu0 %1731
      %1735 = vrot.lane.b32.xlu0 %v1688, 80
      %v1736 = vpop.permute.xlu0 %1735
      %1739 = vrot.lane.b32.xlu0 %v1685, 96
      %v1740 = vpop.permute.xlu0 %1739
      %1743 = vrot.lane.b32.xlu0 %v1689, 112
      %v1744 = vpop.permute.xlu0 %1743
      %v1746 = vsel %vm819, %v1594, %v1692
      %v1747 = vsel %vm821, %v1746, %v1696
      %v1748 = vsel %vm823, %v1747, %v1700
      %v1749 = vsel %vm825, %v1748, %v1704
      %v1750 = vsel %vm827, %v1749, %v1708
      %v1751 = vsel %vm829, %v1750, %v1712
      %v1752 = vsel %vm831, %v1751, %v1716
      %v1753 = vsel %vm819, %v1662, %v1720
      %v1754 = vsel %vm821, %v1753, %v1724
      %v1755 = vsel %vm823, %v1754, %v1728
      %v1756 = vsel %vm825, %v1755, %v1732
      %v1757 = vsel %vm827, %v1756, %v1736
      %v1758 = vsel %vm829, %v1757, %v1740
      %v1759 = vsel %vm831, %v1758, %v1744
      %1760 = vrot.lane.b32.xlu0 %v1308, 126
      %v1761 = vpop.permute.xlu0 %1760
      %1762 = vrot.lane.b32.xlu0 %v1309, 126
      %v1763 = vpop.permute.xlu0 %1762
      %1764 = vrot.lane.b32.xlu0 %v1310, 126
      %v1765 = vpop.permute.xlu0 %1764
      %1766 = vrot.lane.b32.xlu0 %v1311, 126
      %v1767 = vpop.permute.xlu0 %1766
      %1768 = vrot.lane.b32.xlu0 %v1312, 126
      %v1769 = vpop.permute.xlu0 %1768
      %1770 = vrot.lane.b32.xlu0 %v1313, 126
      %v1771 = vpop.permute.xlu0 %1770
      %1772 = vrot.lane.b32.xlu0 %v1314, 126
      %v1773 = vpop.permute.xlu0 %1772
      %1774 = vrot.lane.b32.xlu0 %v1315, 126
      %v1775 = vpop.permute.xlu0 %1774
      %v1784 = vcombine.low %v1761, %v1769
      %v1785 = vcombine.high %v1761, %v1769
      %v1787 = vunpack.c.l.s4 1983009808
      %v1788 = vunpack.c.0.s8 %v1787
      %v1789 = vlaneseq
      %v1790 = vshrl.u32 %v1789, 7
      %v1791 = vsub.s32 %v1788, %v1790
      %v1792 = vrot.slane %v1784, %v1791
      %v1794 = vunpack.c.l.s4 1983009808
      %v1795 = vunpack.c.0.s8 %v1794
      %v1796 = vlaneseq
      %v1797 = vshrl.u32 %v1796, 7
      %v1798 = vsub.s32 %v1795, %v1797
      %v1799 = vrot.slane %v1785, %v1798
      %v1800 = vcombine.low %v1765, %v1773
      %v1801 = vcombine.high %v1765, %v1773
      %v1803 = vunpack.c.l.s4 1983009808
      %v1804 = vunpack.c.0.s8 %v1803
      %v1805 = vlaneseq
      %v1806 = vshrl.u32 %v1805, 7
      %v1807 = vsub.s32 %v1804, %v1806
      %v1808 = vrot.slane %v1800, %v1807
      %v1810 = vunpack.c.l.s4 1983009808
      %v1811 = vunpack.c.0.s8 %v1810
      %v1812 = vlaneseq
      %v1813 = vshrl.u32 %v1812, 7
      %v1814 = vsub.s32 %v1811, %v1813
      %v1815 = vrot.slane %v1801, %v1814
      %v1816 = vcombine.low %v1792, %v1808
      %v1817 = vcombine.high %v1792, %v1808
      %v1819 = vunpack.c.l.s4 1934713408
      %v1820 = vunpack.c.0.s8 %v1819
      %v1821 = vlaneseq
      %v1822 = vshrl.u32 %v1821, 7
      %v1823 = vsub.s32 %v1820, %v1822
      %v1824 = vrot.slane %v1816, %v1823
      %v1826 = vunpack.c.l.s4 1934713408
      %v1827 = vunpack.c.0.s8 %v1826
      %v1828 = vlaneseq
      %v1829 = vshrl.u32 %v1828, 7
      %v1830 = vsub.s32 %v1827, %v1829
      %v1831 = vrot.slane %v1817, %v1830
      %v1832 = vcombine.low %v1799, %v1815
      %v1833 = vcombine.high %v1799, %v1815
      %v1835 = vunpack.c.l.s4 1934713408
      %v1836 = vunpack.c.0.s8 %v1835
      %v1837 = vlaneseq
      %v1838 = vshrl.u32 %v1837, 7
      %v1839 = vsub.s32 %v1836, %v1838
      %v1840 = vrot.slane %v1832, %v1839
      %v1842 = vunpack.c.l.s4 1934713408
      %v1843 = vunpack.c.0.s8 %v1842
      %v1844 = vlaneseq
      %v1845 = vshrl.u32 %v1844, 7
      %v1846 = vsub.s32 %v1843, %v1845
      %v1847 = vrot.slane %v1833, %v1846
      %v1848 = vcombine.high %v1824, 0.0
      %v1849 = vcombine.high %v1831, 0.0
      %v1850 = vcombine.high %v1840, 0.0
      %v1851 = vcombine.high %v1847, 0.0
      %v1852 = vcombine.low %v1763, %v1771
      %v1853 = vcombine.high %v1763, %v1771
      %v1855 = vunpack.c.l.s4 1983009808
      %v1856 = vunpack.c.0.s8 %v1855
      %v1857 = vlaneseq
      %v1858 = vshrl.u32 %v1857, 7
      %v1859 = vsub.s32 %v1856, %v1858
      %v1860 = vrot.slane %v1852, %v1859
      %v1862 = vunpack.c.l.s4 1983009808
      %v1863 = vunpack.c.0.s8 %v1862
      %v1864 = vlaneseq
      %v1865 = vshrl.u32 %v1864, 7
      %v1866 = vsub.s32 %v1863, %v1865
      %v1867 = vrot.slane %v1853, %v1866
      %v1868 = vcombine.low %v1767, %v1775
      %v1869 = vcombine.high %v1767, %v1775
      %v1871 = vunpack.c.l.s4 1983009808
      %v1872 = vunpack.c.0.s8 %v1871
      %v1873 = vlaneseq
      %v1874 = vshrl.u32 %v1873, 7
      %v1875 = vsub.s32 %v1872, %v1874
      %v1876 = vrot.slane %v1868, %v1875
      %v1878 = vunpack.c.l.s4 1983009808
      %v1879 = vunpack.c.0.s8 %v1878
      %v1880 = vlaneseq
      %v1881 = vshrl.u32 %v1880, 7
      %v1882 = vsub.s32 %v1879, %v1881
      %v1883 = vrot.slane %v1869, %v1882
      %v1884 = vcombine.low %v1860, %v1876
      %v1885 = vcombine.high %v1860, %v1876
      %v1887 = vunpack.c.l.s4 1934713408
      %v1888 = vunpack.c.0.s8 %v1887
      %v1889 = vlaneseq
      %v1890 = vshrl.u32 %v1889, 7
      %v1891 = vsub.s32 %v1888, %v1890
      %v1892 = vrot.slane %v1884, %v1891
      %v1894 = vunpack.c.l.s4 1934713408
      %v1895 = vunpack.c.0.s8 %v1894
      %v1896 = vlaneseq
      %v1897 = vshrl.u32 %v1896, 7
      %v1898 = vsub.s32 %v1895, %v1897
      %v1899 = vrot.slane %v1885, %v1898
      %v1900 = vcombine.low %v1867, %v1883
      %v1901 = vcombine.high %v1867, %v1883
      %v1903 = vunpack.c.l.s4 1934713408
      %v1904 = vunpack.c.0.s8 %v1903
      %v1905 = vlaneseq
      %v1906 = vshrl.u32 %v1905, 7
      %v1907 = vsub.s32 %v1904, %v1906
      %v1908 = vrot.slane %v1900, %v1907
      %v1910 = vunpack.c.l.s4 1934713408
      %v1911 = vunpack.c.0.s8 %v1910
      %v1912 = vlaneseq
      %v1913 = vshrl.u32 %v1912, 7
      %v1914 = vsub.s32 %v1911, %v1913
      %v1915 = vrot.slane %v1901, %v1914
      %v1916 = vcombine.high %v1892, 0.0
      %v1917 = vcombine.high %v1899, 0.0
      %v1918 = vcombine.high %v1908, 0.0
      %v1919 = vcombine.high %v1915, 0.0
      %1921 = vrot.lane.b32.xlu0 %v1848, 16
      %v1922 = vpop.permute.xlu0 %1921
      %1925 = vrot.lane.b32.xlu0 %v1831, 32
      %v1926 = vpop.permute.xlu0 %1925
      %1929 = vrot.lane.b32.xlu0 %v1849, 48
      %v1930 = vpop.permute.xlu0 %1929
      %1933 = vrot.lane.b32.xlu0 %v1840, 64
      %v1934 = vpop.permute.xlu0 %1933
      %1937 = vrot.lane.b32.xlu0 %v1850, 80
      %v1938 = vpop.permute.xlu0 %1937
      %1941 = vrot.lane.b32.xlu0 %v1847, 96
      %v1942 = vpop.permute.xlu0 %1941
      %1945 = vrot.lane.b32.xlu0 %v1851, 112
      %v1946 = vpop.permute.xlu0 %1945
      %1949 = vrot.lane.b32.xlu0 %v1916, 16
      %v1950 = vpop.permute.xlu0 %1949
      %1953 = vrot.lane.b32.xlu0 %v1899, 32
      %v1954 = vpop.permute.xlu0 %1953
      %1957 = vrot.lane.b32.xlu0 %v1917, 48
      %v1958 = vpop.permute.xlu0 %1957
      %1961 = vrot.lane.b32.xlu0 %v1908, 64
      %v1962 = vpop.permute.xlu0 %1961
      %1965 = vrot.lane.b32.xlu0 %v1918, 80
      %v1966 = vpop.permute.xlu0 %1965
      %1969 = vrot.lane.b32.xlu0 %v1915, 96
      %v1970 = vpop.permute.xlu0 %1969
      %1973 = vrot.lane.b32.xlu0 %v1919, 112
      %v1974 = vpop.permute.xlu0 %1973
      %v1976 = vsel %vm819, %v1824, %v1922
      %v1977 = vsel %vm821, %v1976, %v1926
      %v1978 = vsel %vm823, %v1977, %v1930
      %v1979 = vsel %vm825, %v1978, %v1934
      %v1980 = vsel %vm827, %v1979, %v1938
      %v1981 = vsel %vm829, %v1980, %v1942
      %v1982 = vsel %vm831, %v1981, %v1946
      %v1983 = vsel %vm819, %v1892, %v1950
      %v1984 = vsel %vm821, %v1983, %v1954
      %v1985 = vsel %vm823, %v1984, %v1958
      %v1986 = vsel %vm825, %v1985, %v1962
      %v1987 = vsel %vm827, %v1986, %v1966
      %v1988 = vsel %vm829, %v1987, %v1970
      %v1989 = vsel %vm831, %v1988, %v1974
      %v1990 = vld [vmem:[#allocation2 + $0x2] sm:$0xff]
      %v1991 = vld [vmem:[#allocation2 + $0xa] sm:$0xff]
      %v1992 = vld [vmem:[#allocation2 + $0x1a] sm:$0xff]
      %v1993 = vld [vmem:[#allocation2 + $0x22] sm:$0xff]
      %v1994 = vld [vmem:[#allocation2 + $0x32] sm:$0xff]
      %v1995 = vld [vmem:[#allocation2 + $0x3a] sm:$0xff]
      %v1996 = vld [vmem:[#allocation2 + $0x4a] sm:$0xff]
      %v1997 = vld [vmem:[#allocation2 + $0x52] sm:$0xff]
      %v1998 = vcombine.low %v1990, %v1994
      %v1999 = vcombine.high %v1990, %v1994
      %v2001 = vunpack.c.l.s4 1983009808
      %v2002 = vunpack.c.0.s8 %v2001
      %v2003 = vlaneseq
      %v2004 = vshrl.u32 %v2003, 7
      %v2005 = vsub.s32 %v2002, %v2004
      %v2006 = vrot.slane %v1998, %v2005
      %v2008 = vunpack.c.l.s4 1983009808
      %v2009 = vunpack.c.0.s8 %v2008
      %v2010 = vlaneseq
      %v2011 = vshrl.u32 %v2010, 7
      %v2012 = vsub.s32 %v2009, %v2011
      %v2013 = vrot.slane %v1999, %v2012
      %v2014 = vcombine.low %v1992, %v1996
      %v2015 = vcombine.high %v1992, %v1996
      %v2017 = vunpack.c.l.s4 1983009808
      %v2018 = vunpack.c.0.s8 %v2017
      %v2019 = vlaneseq
      %v2020 = vshrl.u32 %v2019, 7
      %v2021 = vsub.s32 %v2018, %v2020
      %v2022 = vrot.slane %v2014, %v2021
      %v2024 = vunpack.c.l.s4 1983009808
      %v2025 = vunpack.c.0.s8 %v2024
      %v2026 = vlaneseq
      %v2027 = vshrl.u32 %v2026, 7
      %v2028 = vsub.s32 %v2025, %v2027
      %v2029 = vrot.slane %v2015, %v2028
      %v2030 = vcombine.low %v2006, %v2022
      %v2031 = vcombine.high %v2006, %v2022
      %v2033 = vunpack.c.l.s4 1934713408
      %v2034 = vunpack.c.0.s8 %v2033
      %v2035 = vlaneseq
      %v2036 = vshrl.u32 %v2035, 7
      %v2037 = vsub.s32 %v2034, %v2036
      %v2038 = vrot.slane %v2030, %v2037
      %v2040 = vunpack.c.l.s4 1934713408
      %v2041 = vunpack.c.0.s8 %v2040
      %v2042 = vlaneseq
      %v2043 = vshrl.u32 %v2042, 7
      %v2044 = vsub.s32 %v2041, %v2043
      %v2045 = vrot.slane %v2031, %v2044
      %v2046 = vcombine.low %v2013, %v2029
      %v2047 = vcombine.high %v2013, %v2029
      %v2049 = vunpack.c.l.s4 1934713408
      %v2050 = vunpack.c.0.s8 %v2049
      %v2051 = vlaneseq
      %v2052 = vshrl.u32 %v2051, 7
      %v2053 = vsub.s32 %v2050, %v2052
      %v2054 = vrot.slane %v2046, %v2053
      %v2056 = vunpack.c.l.s4 1934713408
      %v2057 = vunpack.c.0.s8 %v2056
      %v2058 = vlaneseq
      %v2059 = vshrl.u32 %v2058, 7
      %v2060 = vsub.s32 %v2057, %v2059
      %v2061 = vrot.slane %v2047, %v2060
      %v2062 = vcombine.high %v2038, 0.0
      %v2063 = vcombine.high %v2045, 0.0
      %v2064 = vcombine.high %v2054, 0.0
      %v2065 = vcombine.high %v2061, 0.0
      %v2066 = vcombine.low %v1991, %v1995
      %v2067 = vcombine.high %v1991, %v1995
      %v2069 = vunpack.c.l.s4 1983009808
      %v2070 = vunpack.c.0.s8 %v2069
      %v2071 = vlaneseq
      %v2072 = vshrl.u32 %v2071, 7
      %v2073 = vsub.s32 %v2070, %v2072
      %v2074 = vrot.slane %v2066, %v2073
      %v2076 = vunpack.c.l.s4 1983009808
      %v2077 = vunpack.c.0.s8 %v2076
      %v2078 = vlaneseq
      %v2079 = vshrl.u32 %v2078, 7
      %v2080 = vsub.s32 %v2077, %v2079
      %v2081 = vrot.slane %v2067, %v2080
      %v2082 = vcombine.low %v1993, %v1997
      %v2083 = vcombine.high %v1993, %v1997
      %v2085 = vunpack.c.l.s4 1983009808
      %v2086 = vunpack.c.0.s8 %v2085
      %v2087 = vlaneseq
      %v2088 = vshrl.u32 %v2087, 7
      %v2089 = vsub.s32 %v2086, %v2088
      %v2090 = vrot.slane %v2082, %v2089
      %v2092 = vunpack.c.l.s4 1983009808
      %v2093 = vunpack.c.0.s8 %v2092
      %v2094 = vlaneseq
      %v2095 = vshrl.u32 %v2094, 7
      %v2096 = vsub.s32 %v2093, %v2095
      %v2097 = vrot.slane %v2083, %v2096
      %v2098 = vcombine.low %v2074, %v2090
      %v2099 = vcombine.high %v2074, %v2090
      %v2101 = vunpack.c.l.s4 1934713408
      %v2102 = vunpack.c.0.s8 %v2101
      %v2103 = vlaneseq
      %v2104 = vshrl.u32 %v2103, 7
      %v2105 = vsub.s32 %v2102, %v2104
      %v2106 = vrot.slane %v2098, %v2105
      %v2108 = vunpack.c.l.s4 1934713408
      %v2109 = vunpack.c.0.s8 %v2108
      %v2110 = vlaneseq
      %v2111 = vshrl.u32 %v2110, 7
      %v2112 = vsub.s32 %v2109, %v2111
      %v2113 = vrot.slane %v2099, %v2112
      %v2114 = vcombine.low %v2081, %v2097
      %v2115 = vcombine.high %v2081, %v2097
      %v2117 = vunpack.c.l.s4 1934713408
      %v2118 = vunpack.c.0.s8 %v2117
      %v2119 = vlaneseq
      %v2120 = vshrl.u32 %v2119, 7
      %v2121 = vsub.s32 %v2118, %v2120
      %v2122 = vrot.slane %v2114, %v2121
      %v2124 = vunpack.c.l.s4 1934713408
      %v2125 = vunpack.c.0.s8 %v2124
      %v2126 = vlaneseq
      %v2127 = vshrl.u32 %v2126, 7
      %v2128 = vsub.s32 %v2125, %v2127
      %v2129 = vrot.slane %v2115, %v2128
      %v2130 = vcombine.high %v2106, 0.0
      %v2131 = vcombine.high %v2113, 0.0
      %v2132 = vcombine.high %v2122, 0.0
      %v2133 = vcombine.high %v2129, 0.0
      %2135 = vrot.lane.b32.xlu0 %v2062, 16
      %v2136 = vpop.permute.xlu0 %2135
      %2139 = vrot.lane.b32.xlu0 %v2045, 32
      %v2140 = vpop.permute.xlu0 %2139
      %2143 = vrot.lane.b32.xlu0 %v2063, 48
      %v2144 = vpop.permute.xlu0 %2143
      %2147 = vrot.lane.b32.xlu0 %v2054, 64
      %v2148 = vpop.permute.xlu0 %2147
      %2151 = vrot.lane.b32.xlu0 %v2064, 80
      %v2152 = vpop.permute.xlu0 %2151
      %2155 = vrot.lane.b32.xlu0 %v2061, 96
      %v2156 = vpop.permute.xlu0 %2155
      %2159 = vrot.lane.b32.xlu0 %v2065, 112
      %v2160 = vpop.permute.xlu0 %2159
      %2163 = vrot.lane.b32.xlu0 %v2130, 16
      %v2164 = vpop.permute.xlu0 %2163
      %2167 = vrot.lane.b32.xlu0 %v2113, 32
      %v2168 = vpop.permute.xlu0 %2167
      %2171 = vrot.lane.b32.xlu0 %v2131, 48
      %v2172 = vpop.permute.xlu0 %2171
      %2175 = vrot.lane.b32.xlu0 %v2122, 64
      %v2176 = vpop.permute.xlu0 %2175
      %2179 = vrot.lane.b32.xlu0 %v2132, 80
      %v2180 = vpop.permute.xlu0 %2179
      %2183 = vrot.lane.b32.xlu0 %v2129, 96
      %v2184 = vpop.permute.xlu0 %2183
      %2187 = vrot.lane.b32.xlu0 %v2133, 112
      %v2188 = vpop.permute.xlu0 %2187
      %v2190 = vsel %vm819, %v2038, %v2136
      %v2191 = vsel %vm821, %v2190, %v2140
      %v2192 = vsel %vm823, %v2191, %v2144
      %v2193 = vsel %vm825, %v2192, %v2148
      %v2194 = vsel %vm827, %v2193, %v2152
      %v2195 = vsel %vm829, %v2194, %v2156
      %v2196 = vsel %vm831, %v2195, %v2160
      %v2197 = vsel %vm819, %v2106, %v2164
      %v2198 = vsel %vm821, %v2197, %v2168
      %v2199 = vsel %vm823, %v2198, %v2172
      %v2200 = vsel %vm825, %v2199, %v2176
      %v2201 = vsel %vm827, %v2200, %v2180
      %v2202 = vsel %vm829, %v2201, %v2184
      %v2203 = vsel %vm831, %v2202, %v2188
      %2212 = vrot.lane.b32.xlu0 %v1990, 127
      %v2213 = vpop.permute.xlu0 %2212
      %2214 = vrot.lane.b32.xlu0 %v1991, 127
      %v2215 = vpop.permute.xlu0 %2214
      %2216 = vrot.lane.b32.xlu0 %v1992, 127
      %v2217 = vpop.permute.xlu0 %2216
      %2218 = vrot.lane.b32.xlu0 %v1993, 127
      %v2219 = vpop.permute.xlu0 %2218
      %2220 = vrot.lane.b32.xlu0 %v1994, 127
      %v2221 = vpop.permute.xlu0 %2220
      %2222 = vrot.lane.b32.xlu0 %v1995, 127
      %v2223 = vpop.permute.xlu0 %2222
      %2224 = vrot.lane.b32.xlu0 %v1996, 127
      %v2225 = vpop.permute.xlu0 %2224
      %2226 = vrot.lane.b32.xlu0 %v1997, 127
      %v2227 = vpop.permute.xlu0 %2226
      %v2236 = vcombine.low %v2213, %v2221
      %v2237 = vcombine.high %v2213, %v2221
      %v2239 = vunpack.c.l.s4 1983009808
      %v2240 = vunpack.c.0.s8 %v2239
      %v2241 = vlaneseq
      %v2242 = vshrl.u32 %v2241, 7
      %v2243 = vsub.s32 %v2240, %v2242
      %v2244 = vrot.slane %v2236, %v2243
      %v2246 = vunpack.c.l.s4 1983009808
      %v2247 = vunpack.c.0.s8 %v2246
      %v2248 = vlaneseq
      %v2249 = vshrl.u32 %v2248, 7
      %v2250 = vsub.s32 %v2247, %v2249
      %v2251 = vrot.slane %v2237, %v2250
      %v2252 = vcombine.low %v2217, %v2225
      %v2253 = vcombine.high %v2217, %v2225
      %v2255 = vunpack.c.l.s4 1983009808
      %v2256 = vunpack.c.0.s8 %v2255
      %v2257 = vlaneseq
      %v2258 = vshrl.u32 %v2257, 7
      %v2259 = vsub.s32 %v2256, %v2258
      %v2260 = vrot.slane %v2252, %v2259
      %v2262 = vunpack.c.l.s4 1983009808
      %v2263 = vunpack.c.0.s8 %v2262
      %v2264 = vlaneseq
      %v2265 = vshrl.u32 %v2264, 7
      %v2266 = vsub.s32 %v2263, %v2265
      %v2267 = vrot.slane %v2253, %v2266
      %v2268 = vcombine.low %v2244, %v2260
      %v2269 = vcombine.high %v2244, %v2260
      %v2271 = vunpack.c.l.s4 1934713408
      %v2272 = vunpack.c.0.s8 %v2271
      %v2273 = vlaneseq
      %v2274 = vshrl.u32 %v2273, 7
      %v2275 = vsub.s32 %v2272, %v2274
      %v2276 = vrot.slane %v2268, %v2275
      %v2278 = vunpack.c.l.s4 1934713408
      %v2279 = vunpack.c.0.s8 %v2278
      %v2280 = vlaneseq
      %v2281 = vshrl.u32 %v2280, 7
      %v2282 = vsub.s32 %v2279, %v2281
      %v2283 = vrot.slane %v2269, %v2282
      %v2284 = vcombine.low %v2251, %v2267
      %v2285 = vcombine.high %v2251, %v2267
      %v2287 = vunpack.c.l.s4 1934713408
      %v2288 = vunpack.c.0.s8 %v2287
      %v2289 = vlaneseq
      %v2290 = vshrl.u32 %v2289, 7
      %v2291 = vsub.s32 %v2288, %v2290
      %v2292 = vrot.slane %v2284, %v2291
      %v2294 = vunpack.c.l.s4 1934713408
      %v2295 = vunpack.c.0.s8 %v2294
      %v2296 = vlaneseq
      %v2297 = vshrl.u32 %v2296, 7
      %v2298 = vsub.s32 %v2295, %v2297
      %v2299 = vrot.slane %v2285, %v2298
      %v2300 = vcombine.high %v2276, 0.0
      %v2301 = vcombine.high %v2283, 0.0
      %v2302 = vcombine.high %v2292, 0.0
      %v2303 = vcombine.high %v2299, 0.0
      %v2304 = vcombine.low %v2215, %v2223
      %v2305 = vcombine.high %v2215, %v2223
      %v2307 = vunpack.c.l.s4 1983009808
      %v2308 = vunpack.c.0.s8 %v2307
      %v2309 = vlaneseq
      %v2310 = vshrl.u32 %v2309, 7
      %v2311 = vsub.s32 %v2308, %v2310
      %v2312 = vrot.slane %v2304, %v2311
      %v2314 = vunpack.c.l.s4 1983009808
      %v2315 = vunpack.c.0.s8 %v2314
      %v2316 = vlaneseq
      %v2317 = vshrl.u32 %v2316, 7
      %v2318 = vsub.s32 %v2315, %v2317
      %v2319 = vrot.slane %v2305, %v2318
      %v2320 = vcombine.low %v2219, %v2227
      %v2321 = vcombine.high %v2219, %v2227
      %v2323 = vunpack.c.l.s4 1983009808
      %v2324 = vunpack.c.0.s8 %v2323
      %v2325 = vlaneseq
      %v2326 = vshrl.u32 %v2325, 7
      %v2327 = vsub.s32 %v2324, %v2326
      %v2328 = vrot.slane %v2320, %v2327
      %v2330 = vunpack.c.l.s4 1983009808
      %v2331 = vunpack.c.0.s8 %v2330
      %v2332 = vlaneseq
      %v2333 = vshrl.u32 %v2332, 7
      %v2334 = vsub.s32 %v2331, %v2333
      %v2335 = vrot.slane %v2321, %v2334
      %v2336 = vcombine.low %v2312, %v2328
      %v2337 = vcombine.high %v2312, %v2328
      %v2339 = vunpack.c.l.s4 1934713408
      %v2340 = vunpack.c.0.s8 %v2339
      %v2341 = vlaneseq
      %v2342 = vshrl.u32 %v2341, 7
      %v2343 = vsub.s32 %v2340, %v2342
      %v2344 = vrot.slane %v2336, %v2343
      %v2346 = vunpack.c.l.s4 1934713408
      %v2347 = vunpack.c.0.s8 %v2346
      %v2348 = vlaneseq
      %v2349 = vshrl.u32 %v2348, 7
      %v2350 = vsub.s32 %v2347, %v2349
      %v2351 = vrot.slane %v2337, %v2350
      %v2352 = vcombine.low %v2319, %v2335
      %v2353 = vcombine.high %v2319, %v2335
      %v2355 = vunpack.c.l.s4 1934713408
      %v2356 = vunpack.c.0.s8 %v2355
      %v2357 = vlaneseq
      %v2358 = vshrl.u32 %v2357, 7
      %v2359 = vsub.s32 %v2356, %v2358
      %v2360 = vrot.slane %v2352, %v2359
      %v2362 = vunpack.c.l.s4 1934713408
      %v2363 = vunpack.c.0.s8 %v2362
      %v2364 = vlaneseq
      %v2365 = vshrl.u32 %v2364, 7
      %v2366 = vsub.s32 %v2363, %v2365
      %v2367 = vrot.slane %v2353, %v2366
      %v2368 = vcombine.high %v2344, 0.0
      %v2369 = vcombine.high %v2351, 0.0
      %v2370 = vcombine.high %v2360, 0.0
      %v2371 = vcombine.high %v2367, 0.0
      %2373 = vrot.lane.b32.xlu0 %v2300, 16
      %v2374 = vpop.permute.xlu0 %2373
      %2377 = vrot.lane.b32.xlu0 %v2283, 32
      %v2378 = vpop.permute.xlu0 %2377
      %2381 = vrot.lane.b32.xlu0 %v2301, 48
      %v2382 = vpop.permute.xlu0 %2381
      %2385 = vrot.lane.b32.xlu0 %v2292, 64
      %v2386 = vpop.permute.xlu0 %2385
      %2389 = vrot.lane.b32.xlu0 %v2302, 80
      %v2390 = vpop.permute.xlu0 %2389
      %2393 = vrot.lane.b32.xlu0 %v2299, 96
      %v2394 = vpop.permute.xlu0 %2393
      %2397 = vrot.lane.b32.xlu0 %v2303, 112
      %v2398 = vpop.permute.xlu0 %2397
      %2401 = vrot.lane.b32.xlu0 %v2368, 16
      %v2402 = vpop.permute.xlu0 %2401
      %2405 = vrot.lane.b32.xlu0 %v2351, 32
      %v2406 = vpop.permute.xlu0 %2405
      %2409 = vrot.lane.b32.xlu0 %v2369, 48
      %v2410 = vpop.permute.xlu0 %2409
      %2413 = vrot.lane.b32.xlu0 %v2360, 64
      %v2414 = vpop.permute.xlu0 %2413
      %2417 = vrot.lane.b32.xlu0 %v2370, 80
      %v2418 = vpop.permute.xlu0 %2417
      %2421 = vrot.lane.b32.xlu0 %v2367, 96
      %v2422 = vpop.permute.xlu0 %2421
      %2425 = vrot.lane.b32.xlu0 %v2371, 112
      %v2426 = vpop.permute.xlu0 %2425
      %v2428 = vsel %vm819, %v2276, %v2374
      %v2429 = vsel %vm821, %v2428, %v2378
      %v2430 = vsel %vm823, %v2429, %v2382
      %v2431 = vsel %vm825, %v2430, %v2386
      %v2432 = vsel %vm827, %v2431, %v2390
      %v2433 = vsel %vm829, %v2432, %v2394
      %v2434 = vsel %vm831, %v2433, %v2398
      %v2435 = vsel %vm819, %v2344, %v2402
      %v2436 = vsel %vm821, %v2435, %v2406
      %v2437 = vsel %vm823, %v2436, %v2410
      %v2438 = vsel %vm825, %v2437, %v2414
      %v2439 = vsel %vm827, %v2438, %v2418
      %v2440 = vsel %vm829, %v2439, %v2422
      %v2441 = vsel %vm831, %v2440, %v2426
      %2442 = vrot.lane.b32.xlu0 %v1990, 126
      %v2443 = vpop.permute.xlu0 %2442
      %2444 = vrot.lane.b32.xlu0 %v1991, 126
      %v2445 = vpop.permute.xlu0 %2444
      %2446 = vrot.lane.b32.xlu0 %v1992, 126
      %v2447 = vpop.permute.xlu0 %2446
      %2448 = vrot.lane.b32.xlu0 %v1993, 126
      %v2449 = vpop.permute.xlu0 %2448
      %2450 = vrot.lane.b32.xlu0 %v1994, 126
      %v2451 = vpop.permute.xlu0 %2450
      %2452 = vrot.lane.b32.xlu0 %v1995, 126
      %v2453 = vpop.permute.xlu0 %2452
      %2454 = vrot.lane.b32.xlu0 %v1996, 126
      %v2455 = vpop.permute.xlu0 %2454
      %2456 = vrot.lane.b32.xlu0 %v1997, 126
      %v2457 = vpop.permute.xlu0 %2456
      %v2466 = vcombine.low %v2443, %v2451
      %v2467 = vcombine.high %v2443, %v2451
      %v2469 = vunpack.c.l.s4 1983009808
      %v2470 = vunpack.c.0.s8 %v2469
      %v2471 = vlaneseq
      %v2472 = vshrl.u32 %v2471, 7
      %v2473 = vsub.s32 %v2470, %v2472
      %v2474 = vrot.slane %v2466, %v2473
      %v2476 = vunpack.c.l.s4 1983009808
      %v2477 = vunpack.c.0.s8 %v2476
      %v2478 = vlaneseq
      %v2479 = vshrl.u32 %v2478, 7
      %v2480 = vsub.s32 %v2477, %v2479
      %v2481 = vrot.slane %v2467, %v2480
      %v2482 = vcombine.low %v2447, %v2455
      %v2483 = vcombine.high %v2447, %v2455
      %v2485 = vunpack.c.l.s4 1983009808
      %v2486 = vunpack.c.0.s8 %v2485
      %v2487 = vlaneseq
      %v2488 = vshrl.u32 %v2487, 7
      %v2489 = vsub.s32 %v2486, %v2488
      %v2490 = vrot.slane %v2482, %v2489
      %v2492 = vunpack.c.l.s4 1983009808
      %v2493 = vunpack.c.0.s8 %v2492
      %v2494 = vlaneseq
      %v2495 = vshrl.u32 %v2494, 7
      %v2496 = vsub.s32 %v2493, %v2495
      %v2497 = vrot.slane %v2483, %v2496
      %v2498 = vcombine.low %v2474, %v2490
      %v2499 = vcombine.high %v2474, %v2490
      %v2501 = vunpack.c.l.s4 1934713408
      %v2502 = vunpack.c.0.s8 %v2501
      %v2503 = vlaneseq
      %v2504 = vshrl.u32 %v2503, 7
      %v2505 = vsub.s32 %v2502, %v2504
      %v2506 = vrot.slane %v2498, %v2505
      %v2508 = vunpack.c.l.s4 1934713408
      %v2509 = vunpack.c.0.s8 %v2508
      %v2510 = vlaneseq
      %v2511 = vshrl.u32 %v2510, 7
      %v2512 = vsub.s32 %v2509, %v2511
      %v2513 = vrot.slane %v2499, %v2512
      %v2514 = vcombine.low %v2481, %v2497
      %v2515 = vcombine.high %v2481, %v2497
      %v2517 = vunpack.c.l.s4 1934713408
      %v2518 = vunpack.c.0.s8 %v2517
      %v2519 = vlaneseq
      %v2520 = vshrl.u32 %v2519, 7
      %v2521 = vsub.s32 %v2518, %v2520
      %v2522 = vrot.slane %v2514, %v2521
      %v2524 = vunpack.c.l.s4 1934713408
      %v2525 = vunpack.c.0.s8 %v2524
      %v2526 = vlaneseq
      %v2527 = vshrl.u32 %v2526, 7
      %v2528 = vsub.s32 %v2525, %v2527
      %v2529 = vrot.slane %v2515, %v2528
      %v2530 = vcombine.high %v2506, 0.0
      %v2531 = vcombine.high %v2513, 0.0
      %v2532 = vcombine.high %v2522, 0.0
      %v2533 = vcombine.high %v2529, 0.0
      %v2534 = vcombine.low %v2445, %v2453
      %v2535 = vcombine.high %v2445, %v2453
      %v2537 = vunpack.c.l.s4 1983009808
      %v2538 = vunpack.c.0.s8 %v2537
      %v2539 = vlaneseq
      %v2540 = vshrl.u32 %v2539, 7
      %v2541 = vsub.s32 %v2538, %v2540
      %v2542 = vrot.slane %v2534, %v2541
      %v2544 = vunpack.c.l.s4 1983009808
      %v2545 = vunpack.c.0.s8 %v2544
      %v2546 = vlaneseq
      %v2547 = vshrl.u32 %v2546, 7
      %v2548 = vsub.s32 %v2545, %v2547
      %v2549 = vrot.slane %v2535, %v2548
      %v2550 = vcombine.low %v2449, %v2457
      %v2551 = vcombine.high %v2449, %v2457
      %v2553 = vunpack.c.l.s4 1983009808
      %v2554 = vunpack.c.0.s8 %v2553
      %v2555 = vlaneseq
      %v2556 = vshrl.u32 %v2555, 7
      %v2557 = vsub.s32 %v2554, %v2556
      %v2558 = vrot.slane %v2550, %v2557
      %v2560 = vunpack.c.l.s4 1983009808
      %v2561 = vunpack.c.0.s8 %v2560
      %v2562 = vlaneseq
      %v2563 = vshrl.u32 %v2562, 7
      %v2564 = vsub.s32 %v2561, %v2563
      %v2565 = vrot.slane %v2551, %v2564
      %v2566 = vcombine.low %v2542, %v2558
      %v2567 = vcombine.high %v2542, %v2558
      %v2569 = vunpack.c.l.s4 1934713408
      %v2570 = vunpack.c.0.s8 %v2569
      %v2571 = vlaneseq
      %v2572 = vshrl.u32 %v2571, 7
      %v2573 = vsub.s32 %v2570, %v2572
      %v2574 = vrot.slane %v2566, %v2573
      %v2576 = vunpack.c.l.s4 1934713408
      %v2577 = vunpack.c.0.s8 %v2576
      %v2578 = vlaneseq
      %v2579 = vshrl.u32 %v2578, 7
      %v2580 = vsub.s32 %v2577, %v2579
      %v2581 = vrot.slane %v2567, %v2580
      %v2582 = vcombine.low %v2549, %v2565
      %v2583 = vcombine.high %v2549, %v2565
      %v2585 = vunpack.c.l.s4 1934713408
      %v2586 = vunpack.c.0.s8 %v2585
      %v2587 = vlaneseq
      %v2588 = vshrl.u32 %v2587, 7
      %v2589 = vsub.s32 %v2586, %v2588
      %v2590 = vrot.slane %v2582, %v2589
      %v2592 = vunpack.c.l.s4 1934713408
      %v2593 = vunpack.c.0.s8 %v2592
      %v2594 = vlaneseq
      %v2595 = vshrl.u32 %v2594, 7
      %v2596 = vsub.s32 %v2593, %v2595
      %v2597 = vrot.slane %v2583, %v2596
      %v2598 = vcombine.high %v2574, 0.0
      %v2599 = vcombine.high %v2581, 0.0
      %v2600 = vcombine.high %v2590, 0.0
      %v2601 = vcombine.high %v2597, 0.0
      %2603 = vrot.lane.b32.xlu0 %v2530, 16
      %v2604 = vpop.permute.xlu0 %2603
      %2607 = vrot.lane.b32.xlu0 %v2513, 32
      %v2608 = vpop.permute.xlu0 %2607
      %2611 = vrot.lane.b32.xlu0 %v2531, 48
      %v2612 = vpop.permute.xlu0 %2611
      %2615 = vrot.lane.b32.xlu0 %v2522, 64
      %v2616 = vpop.permute.xlu0 %2615
      %2619 = vrot.lane.b32.xlu0 %v2532, 80
      %v2620 = vpop.permute.xlu0 %2619
      %2623 = vrot.lane.b32.xlu0 %v2529, 96
      %v2624 = vpop.permute.xlu0 %2623
      %2627 = vrot.lane.b32.xlu0 %v2533, 112
      %v2628 = vpop.permute.xlu0 %2627
      %2631 = vrot.lane.b32.xlu0 %v2598, 16
      %v2632 = vpop.permute.xlu0 %2631
      %2635 = vrot.lane.b32.xlu0 %v2581, 32
      %v2636 = vpop.permute.xlu0 %2635
      %2639 = vrot.lane.b32.xlu0 %v2599, 48
      %v2640 = vpop.permute.xlu0 %2639
      %2643 = vrot.lane.b32.xlu0 %v2590, 64
      %v2644 = vpop.permute.xlu0 %2643
      %2647 = vrot.lane.b32.xlu0 %v2600, 80
      %v2648 = vpop.permute.xlu0 %2647
      %2651 = vrot.lane.b32.xlu0 %v2597, 96
      %v2652 = vpop.permute.xlu0 %2651
      %2655 = vrot.lane.b32.xlu0 %v2601, 112
      %v2656 = vpop.permute.xlu0 %2655
      %v2658 = vsel %vm819, %v2506, %v2604
      %v2659 = vsel %vm821, %v2658, %v2608
      %v2660 = vsel %vm823, %v2659, %v2612
      %v2661 = vsel %vm825, %v2660, %v2616
      %v2662 = vsel %vm827, %v2661, %v2620
      %v2663 = vsel %vm829, %v2662, %v2624
      %v2664 = vsel %vm831, %v2663, %v2628
      %v2665 = vsel %vm819, %v2574, %v2632
      %v2666 = vsel %vm821, %v2665, %v2636
      %v2667 = vsel %vm823, %v2666, %v2640
      %v2668 = vsel %vm825, %v2667, %v2644
      %v2669 = vsel %vm827, %v2668, %v2648
      %v2670 = vsel %vm829, %v2669, %v2652
      %v2671 = vsel %vm831, %v2670, %v2656
      %v2674 = vrot.slane %v1070, 4
      %v2675 = vrot.slane %v1077, 4
      %v2680 = vrot.slane %v1514, 4
      %v2681 = vrot.slane %v1521, 4
      %v2686 = vrot.slane %v1982, 4
      %v2687 = vrot.slane %v1989, 4
      %v2692 = vrot.slane %v2434, 4
      %v2693 = vrot.slane %v2441, 4
      %vm2696 = vcmask 1043456
      %v2697 = vsel %vm2696, %v832, %v2674
      %v2698 = vsel %vm2696, %v839, %v2675
      %v2699 = vsel %vm2696, %v1300, %v2680
      %v2700 = vsel %vm2696, %v1307, %v2681
      %v2701 = vsel %vm2696, %v1752, %v2686
      %v2702 = vsel %vm2696, %v1759, %v2687
      %v2703 = vsel %vm2696, %v2196, %v2692
      %v2704 = vsel %vm2696, %v2203, %v2693
      %v2705 = vsel %vm2696, %v2664, 1.0
      %v2706 = vsel %vm2696, %v2671, 1.0
      %v2707 = vpack.c.bf16 %v2699, %v2697
      %v2708 = vpack.c.bf16 %v2700, %v2698
      %v2709 = vpack.c.bf16 %v2703, %v2701
      %v2710 = vpack.c.bf16 %v2704, %v2702
      %v2711 = vpack.c.bf16 %v2705, %v2705
      %v2712 = vpack.c.bf16 %v2706, %v2706
      %vm2713 = vcmask 302080
      %v2715 = vsel %vm2713, %v618, 0
      %vm2717 = vcmask 1041408
      %vm2718 = vcmask 1042432
      %v2719 = vsel %vm2717, 4294967295, 65535
      %v2720 = vsel %vm2718, %v2719, 0
      %v2722 = vand.u32 %v2711, %v2720
      %v2725 = vand.u32 %v2712, %v2720
      %2727 = vmatprep.subr.bf16.mxu0 0
      %2728 = vmatpush1.bf16.msra.mxu0 0
      %2729 = vmatprep.subr.bf16.mxu0 0
      %2730 = vmatpush1.bf16.msra.mxu0 0
      %2731 = vmatprep.subr.bf16.mxu0 0
      %2732 = vmatpush1.bf16.msra.mxu0 0
      %2733 = vmatprep.subr.bf16.mxu0 0
      %2734 = vmatpush1.bf16.msra.mxu0 0
      %2735 = vmatprep.subr.bf16.mxu0 0
      %2736 = vmatpush1.bf16.msra.mxu0 0
      %2737 = vmatprep.subr.bf16.mxu0 %v2725
      %2738 = vmatpush1.bf16.msra.mxu0 %v2722
      %2739 = vmatprep.subr.bf16.mxu0 %v2710
      %2740 = vmatpush1.bf16.msra.mxu0 %v2709
      %2741 = vmatprep.subr.bf16.mxu0 %v2708
      %2742 = vmatpush1.bf16.msra.mxu0 %v2707
      %2743 = vmatprep.subr.bf16.mxu0 0
      %2744 = vmatpush2.bf16.msra.mxu0 0
      %2745 = vmatprep.subr.bf16.mxu0 0
      %2746 = vmatpush2.bf16.msra.mxu0 0
      %2747 = vmatprep.subr.bf16.mxu0 0
      %2748 = vmatpush2.bf16.msra.mxu0 0
      %2749 = vmatprep.subr.bf16.mxu0 0
      %2750 = vmatpush2.bf16.msra.mxu0 0
      %2751 = vmatprep.subr.bf16.mxu0 0
      %2752 = vmatpush2.bf16.msra.mxu0 0
      %2753 = vmatprep.subr.bf16.mxu0 0
      %2754 = vmatpush2.bf16.msra.mxu0 0
      %2755 = vmatprep.subr.bf16.mxu0 0
      %2756 = vmatpush2.bf16.msra.mxu0 0
      %2757 = vmatprep.subr.bf16.mxu0 0
      %2758 = vmatpush2.bf16.msra.mxu0 0
      %2759 = vmatprep.mubr.bf16.mxu0 0
      %2760 = vmatmul.mubr.bf16.gmra.mxu0 %v2715
      %v2761 = vpop.f32.mrf.mxu0
      %v2762 = vadd.f32 0.0, %v2761
      %v2763 = vpop.f32.mrf.mxu0
      %v2764 = vadd.f32 0.0, %v2763
      %v2765 = vpop.f32.mrf.mxu0
      %v2766 = vpop.f32.mrf.mxu0
      %2767 = vdwg.mxu0
      %v2768 = vsel %vm2696, %v2762, 0.0
      %v2769 = vsel %vm2696, %v2764, 0.0
      %v2770 = vadd.f32 %v2768, %v2769
      %2771 = vadd.xlane.f32.xlu0 %v2770
      %v2772 = vpop.xlane.xlu0 %2771
      %v2773 = vrcp.pop 256.0
      %v2774 = vmul.f32 %v2772, %v2773
      %v2775 = vsub.f32 %v2762, %v2774
      %v2776 = vsub.f32 %v2764, %v2774
      %v2777 = vmul.f32 %v2775, %v2775
      %v2778 = vmul.f32 %v2776, %v2776
      %v2779 = vsel %vm2696, %v2777, 0.0
      %v2780 = vsel %vm2696, %v2778, 0.0
      %v2781 = vadd.f32 %v2779, %v2780
      %2782 = vadd.xlane.f32.xlu0 %v2781
      %v2783 = vpop.xlane.xlu0 %2782
      %v2784 = vmul.f32 %v2783, %v2773
      %v2785 = vadd.f32 %v2784, 1e-05
      %v2786 = vrsqrt.pop %v2785
      %v2787 = vmul.f32 %v2775, %v2786
      %v2788 = vmul.f32 %v2776, %v2786
      %v2789 = vmax.f32 %v2787, 0.0
      %v2790 = vmax.f32 %v2788, 0.0
      %2792 = vrot.lane.b32.xlu0 %v2789, 112
      %v2793 = vpop.permute.xlu0 %2792
      %2795 = vrot.lane.b32.xlu0 %v2789, 96
      %v2796 = vpop.permute.xlu0 %2795
      %2798 = vrot.lane.b32.xlu0 %v2789, 80
      %v2799 = vpop.permute.xlu0 %2798
      %2801 = vrot.lane.b32.xlu0 %v2789, 64
      %v2802 = vpop.permute.xlu0 %2801
      %2804 = vrot.lane.b32.xlu0 %v2789, 48
      %v2805 = vpop.permute.xlu0 %2804
      %2807 = vrot.lane.b32.xlu0 %v2789, 32
      %v2808 = vpop.permute.xlu0 %2807
      %2810 = vrot.lane.b32.xlu0 %v2789, 16
      %v2811 = vpop.permute.xlu0 %2810
      %2814 = vrot.lane.b32.xlu0 %v2790, 112
      %v2815 = vpop.permute.xlu0 %2814
      %2817 = vrot.lane.b32.xlu0 %v2790, 96
      %v2818 = vpop.permute.xlu0 %2817
      %2820 = vrot.lane.b32.xlu0 %v2790, 80
      %v2821 = vpop.permute.xlu0 %2820
      %2823 = vrot.lane.b32.xlu0 %v2790, 64
      %v2824 = vpop.permute.xlu0 %2823
      %2826 = vrot.lane.b32.xlu0 %v2790, 48
      %v2827 = vpop.permute.xlu0 %2826
      %2829 = vrot.lane.b32.xlu0 %v2790, 32
      %v2830 = vpop.permute.xlu0 %2829
      %2832 = vrot.lane.b32.xlu0 %v2790, 16
      %v2833 = vpop.permute.xlu0 %2832
      %v2835 = vcombine.low %v2789, %v2796
      %v2837 = vunpack.c.l.s4 1983009808
      %v2838 = vunpack.c.0.s8 %v2837
      %v2839 = vlaneseq
      %v2840 = vshrl.u32 %v2839, 7
      %v2841 = vsub.s32 %v2838, %v2840
      %v2842 = vrot.slane %v2835, %v2841
      %v2843 = vcombine.low %v2793, %v2799
      %v2845 = vunpack.c.l.s4 1983009808
      %v2846 = vunpack.c.0.s8 %v2845
      %v2847 = vlaneseq
      %v2848 = vshrl.u32 %v2847, 7
      %v2849 = vsub.s32 %v2846, %v2848
      %v2850 = vrot.slane %v2843, %v2849
      %v2851 = vcombine.low %v2802, %v2808
      %v2853 = vunpack.c.l.s4 1983009808
      %v2854 = vunpack.c.0.s8 %v2853
      %v2855 = vlaneseq
      %v2856 = vshrl.u32 %v2855, 7
      %v2857 = vsub.s32 %v2854, %v2856
      %v2858 = vrot.slane %v2851, %v2857
      %v2859 = vcombine.low %v2805, %v2811
      %v2861 = vunpack.c.l.s4 1983009808
      %v2862 = vunpack.c.0.s8 %v2861
      %v2863 = vlaneseq
      %v2864 = vshrl.u32 %v2863, 7
      %v2865 = vsub.s32 %v2862, %v2864
      %v2866 = vrot.slane %v2859, %v2865
      %v2867 = vcombine.low %v2842, %v2850
      %v2868 = vcombine.high %v2842, %v2850
      %v2870 = vunpack.c.l.s4 1934713408
      %v2871 = vunpack.c.0.s8 %v2870
      %v2872 = vlaneseq
      %v2873 = vshrl.u32 %v2872, 7
      %v2874 = vsub.s32 %v2871, %v2873
      %v2875 = vrot.slane %v2867, %v2874
      %v2877 = vunpack.c.l.s4 1934713408
      %v2878 = vunpack.c.0.s8 %v2877
      %v2879 = vlaneseq
      %v2880 = vshrl.u32 %v2879, 7
      %v2881 = vsub.s32 %v2878, %v2880
      %v2882 = vrot.slane %v2868, %v2881
      %v2883 = vcombine.low %v2858, %v2866
      %v2884 = vcombine.high %v2858, %v2866
      %v2886 = vunpack.c.l.s4 1934713408
      %v2887 = vunpack.c.0.s8 %v2886
      %v2888 = vlaneseq
      %v2889 = vshrl.u32 %v2888, 7
      %v2890 = vsub.s32 %v2887, %v2889
      %v2891 = vrot.slane %v2883, %v2890
      %v2893 = vunpack.c.l.s4 1934713408
      %v2894 = vunpack.c.0.s8 %v2893
      %v2895 = vlaneseq
      %v2896 = vshrl.u32 %v2895, 7
      %v2897 = vsub.s32 %v2894, %v2896
      %v2898 = vrot.slane %v2884, %v2897
      %v2899 = vcombine.low %v2875, %v2891
      %v2900 = vcombine.high %v2875, %v2891
      %v2901 = vcombine.low %v2882, %v2898
      %v2902 = vcombine.high %v2882, %v2898
      %v2903 = vcombine.low %v2790, %v2818
      %v2905 = vunpack.c.l.s4 1983009808
      %v2906 = vunpack.c.0.s8 %v2905
      %v2907 = vlaneseq
      %v2908 = vshrl.u32 %v2907, 7
      %v2909 = vsub.s32 %v2906, %v2908
      %v2910 = vrot.slane %v2903, %v2909
      %v2911 = vcombine.low %v2815, %v2821
      %v2913 = vunpack.c.l.s4 1983009808
      %v2914 = vunpack.c.0.s8 %v2913
      %v2915 = vlaneseq
      %v2916 = vshrl.u32 %v2915, 7
      %v2917 = vsub.s32 %v2914, %v2916
      %v2918 = vrot.slane %v2911, %v2917
      %v2919 = vcombine.low %v2824, %v2830
      %v2921 = vunpack.c.l.s4 1983009808
      %v2922 = vunpack.c.0.s8 %v2921
      %v2923 = vlaneseq
      %v2924 = vshrl.u32 %v2923, 7
      %v2925 = vsub.s32 %v2922, %v2924
      %v2926 = vrot.slane %v2919, %v2925
      %v2927 = vcombine.low %v2827, %v2833
      %v2929 = vunpack.c.l.s4 1983009808
      %v2930 = vunpack.c.0.s8 %v2929
      %v2931 = vlaneseq
      %v2932 = vshrl.u32 %v2931, 7
      %v2933 = vsub.s32 %v2930, %v2932
      %v2934 = vrot.slane %v2927, %v2933
      %v2935 = vcombine.low %v2910, %v2918
      %v2936 = vcombine.high %v2910, %v2918
      %v2938 = vunpack.c.l.s4 1934713408
      %v2939 = vunpack.c.0.s8 %v2938
      %v2940 = vlaneseq
      %v2941 = vshrl.u32 %v2940, 7
      %v2942 = vsub.s32 %v2939, %v2941
      %v2943 = vrot.slane %v2935, %v2942
      %v2945 = vunpack.c.l.s4 1934713408
      %v2946 = vunpack.c.0.s8 %v2945
      %v2947 = vlaneseq
      %v2948 = vshrl.u32 %v2947, 7
      %v2949 = vsub.s32 %v2946, %v2948
      %v2950 = vrot.slane %v2936, %v2949
      %v2951 = vcombine.low %v2926, %v2934
      %v2952 = vcombine.high %v2926, %v2934
      %v2954 = vunpack.c.l.s4 1934713408
      %v2955 = vunpack.c.0.s8 %v2954
      %v2956 = vlaneseq
      %v2957 = vshrl.u32 %v2956, 7
      %v2958 = vsub.s32 %v2955, %v2957
      %v2959 = vrot.slane %v2951, %v2958
      %v2961 = vunpack.c.l.s4 1934713408
      %v2962 = vunpack.c.0.s8 %v2961
      %v2963 = vlaneseq
      %v2964 = vshrl.u32 %v2963, 7
      %v2965 = vsub.s32 %v2962, %v2964
      %v2966 = vrot.slane %v2952, %v2965
      %v2967 = vcombine.low %v2943, %v2959
      %v2968 = vcombine.high %v2943, %v2959
      %v2969 = vcombine.low %v2950, %v2966
      %v2970 = vcombine.high %v2950, %v2966
      %2979 = vrot.lane.b32.xlu0 %v2899, 1
      %v2980 = vpop.permute.xlu0 %2979
      %2981 = vrot.lane.b32.xlu0 %v2967, 1
      %v2982 = vpop.permute.xlu0 %2981
      %2983 = vrot.lane.b32.xlu0 %v2900, 1
      %v2984 = vpop.permute.xlu0 %2983
      %2985 = vrot.lane.b32.xlu0 %v2968, 1
      %v2986 = vpop.permute.xlu0 %2985
      %2987 = vrot.lane.b32.xlu0 %v2901, 1
      %v2988 = vpop.permute.xlu0 %2987
      %2989 = vrot.lane.b32.xlu0 %v2969, 1
      %v2990 = vpop.permute.xlu0 %2989
      %2991 = vrot.lane.b32.xlu0 %v2902, 1
      %v2992 = vpop.permute.xlu0 %2991
      %2993 = vrot.lane.b32.xlu0 %v2970, 1
      %v2994 = vpop.permute.xlu0 %2993
      %3003 = vst.msk [vmem:[#allocation2 + $0x1] sm:$0xff] %vm395, %v2980
      %3004 = vst.msk [vmem:[#allocation2 + $0x9] sm:$0xff] %vm395, %v2982
      %3005 = vst.msk [vmem:[#allocation2 + $0x19] sm:$0xff] %vm395, %v2984
      %3006 = vst.msk [vmem:[#allocation2 + $0x21] sm:$0xff] %vm395, %v2986
      %3007 = vst.msk [vmem:[#allocation2 + $0x31] sm:$0xff] %vm395, %v2988
      %3008 = vst.msk [vmem:[#allocation2 + $0x39] sm:$0xff] %vm395, %v2990
      %3009 = vst.msk [vmem:[#allocation2 + $0x49] sm:$0xff] %vm395, %v2992
      %3010 = vst.msk [vmem:[#allocation2 + $0x51] sm:$0xff] %vm395, %v2994
      %3011 = vst.msk [vmem:[#allocation2 - $0x1] sm:$0x2] %vm432, %v2980
      %3012 = vst.msk [vmem:[#allocation2 + $0x17] sm:$0x2] %vm432, %v2984
      %3013 = vst.msk [vmem:[#allocation2 + $0x2f] sm:$0x2] %vm432, %v2988
      %3014 = vst.msk [vmem:[#allocation2 + $0x47] sm:$0x2] %vm432, %v2992
      %vm3015 = vcmask 137230
      %3016 = vst.msk [vmem:[#allocation2 + $0xb] sm:$0x40] %vm3015, %v2982
      %3017 = vst.msk [vmem:[#allocation2 + $0x23] sm:$0x40] %vm3015, %v2986
      %3018 = vst.msk [vmem:[#allocation2 + $0x3b] sm:$0x40] %vm3015, %v2990
      %3019 = vst.msk [vmem:[#allocation2 + $0x53] sm:$0x40] %vm3015, %v2994
      %v3020 = vld [vmem:[#allocation2] sm:$0xff]
      %v3021 = vld [vmem:[#allocation2 + $0x8] sm:$0xff]
      %v3022 = vld [vmem:[#allocation2 + $0x10] sm:$0x3]
      %v3023 = vld [vmem:[#allocation2 + $0x18] sm:$0xff]
      %v3024 = vld [vmem:[#allocation2 + $0x20] sm:$0xff]
      %v3025 = vld [vmem:[#allocation2 + $0x28] sm:$0x3]
      %v3026 = vld [vmem:[#allocation2 + $0x30] sm:$0xff]
      %v3027 = vld [vmem:[#allocation2 + $0x38] sm:$0xff]
      %v3028 = vld [vmem:[#allocation2 + $0x40] sm:$0x3]
      %v3029 = vld [vmem:[#allocation2 + $0x48] sm:$0xff]
      %v3030 = vld [vmem:[#allocation2 + $0x50] sm:$0xff]
      %v3031 = vld [vmem:[#allocation2 + $0x58] sm:$0x3]
      %3044 = vrot.lane.b32.xlu0 %v3020, 126
      %v3045 = vpop.permute.xlu0 %3044
      %3046 = vrot.lane.b32.xlu0 %v3021, 126
      %v3047 = vpop.permute.xlu0 %3046
      %3048 = vrot.lane.b32.xlu0 %v3022, 126
      %v3049 = vpop.permute.xlu0 %3048
      %3050 = vrot.lane.b32.xlu0 %v3023, 126
      %v3051 = vpop.permute.xlu0 %3050
      %3052 = vrot.lane.b32.xlu0 %v3024, 126
      %v3053 = vpop.permute.xlu0 %3052
      %3054 = vrot.lane.b32.xlu0 %v3025, 126
      %v3055 = vpop.permute.xlu0 %3054
      %3056 = vrot.lane.b32.xlu0 %v3026, 126
      %v3057 = vpop.permute.xlu0 %3056
      %3058 = vrot.lane.b32.xlu0 %v3027, 126
      %v3059 = vpop.permute.xlu0 %3058
      %3060 = vrot.lane.b32.xlu0 %v3028, 126
      %v3061 = vpop.permute.xlu0 %3060
      %3062 = vrot.lane.b32.xlu0 %v3029, 126
      %v3063 = vpop.permute.xlu0 %3062
      %3064 = vrot.lane.b32.xlu0 %v3030, 126
      %v3065 = vpop.permute.xlu0 %3064
      %3066 = vrot.lane.b32.xlu0 %v3031, 126
      %v3067 = vpop.permute.xlu0 %3066
      %3080 = vst.msk [vmem:[#allocation2] sm:$0xff] %vm530, %v3045
      %3081 = vst.msk [vmem:[#allocation2 + $0x8] sm:$0xff] %vm530, %v3047
      %3082 = vst.msk [vmem:[#allocation2 + $0x10] sm:$0x3] %vm533, %v3049
      %3083 = vst.msk [vmem:[#allocation2 + $0x18] sm:$0xff] %vm530, %v3051
      %3084 = vst.msk [vmem:[#allocation2 + $0x20] sm:$0xff] %vm530, %v3053
      %3085 = vst.msk [vmem:[#allocation2 + $0x28] sm:$0x3] %vm533, %v3055
      %3086 = vst.msk [vmem:[#allocation2 + $0x30] sm:$0xff] %vm530, %v3057
      %3087 = vst.msk [vmem:[#allocation2 + $0x38] sm:$0xff] %vm530, %v3059
      %3088 = vst.msk [vmem:[#allocation2 + $0x40] sm:$0x3] %vm533, %v3061
      %3089 = vst.msk [vmem:[#allocation2 + $0x48] sm:$0xff] %vm530, %v3063
      %3090 = vst.msk [vmem:[#allocation2 + $0x50] sm:$0xff] %vm530, %v3065
      %3091 = vst.msk [vmem:[#allocation2 + $0x58] sm:$0x3] %vm533, %v3067
      %v3092 = vld [vmem:[#allocation2] sm:$0xff]
      %v3093 = vld [vmem:[#allocation2 + $0x8] sm:$0xff]
      %v3094 = vld [vmem:[#allocation2 + $0x10] sm:$0x3]
      %v3095 = vld [vmem:[#allocation2 + $0x18] sm:$0xff]
      %v3096 = vld [vmem:[#allocation2 + $0x20] sm:$0xff]
      %v3097 = vld [vmem:[#allocation2 + $0x28] sm:$0x3]
      %v3098 = vld [vmem:[#allocation2 + $0x30] sm:$0xff]
      %v3099 = vld [vmem:[#allocation2 + $0x38] sm:$0xff]
      %v3100 = vld [vmem:[#allocation2 + $0x40] sm:$0x3]
      %v3101 = vld [vmem:[#allocation2 + $0x48] sm:$0xff]
      %v3102 = vld [vmem:[#allocation2 + $0x50] sm:$0xff]
      %v3103 = vld [vmem:[#allocation2 + $0x58] sm:$0x3]
      %3116 = vrot.lane.b32.xlu0 %v3092, 2
      %v3117 = vpop.permute.xlu0 %3116
      %3118 = vrot.lane.b32.xlu0 %v3093, 2
      %v3119 = vpop.permute.xlu0 %3118
      %3120 = vrot.lane.b32.xlu0 %v3094, 2
      %v3121 = vpop.permute.xlu0 %3120
      %3122 = vrot.lane.b32.xlu0 %v3095, 2
      %v3123 = vpop.permute.xlu0 %3122
      %3124 = vrot.lane.b32.xlu0 %v3096, 2
      %v3125 = vpop.permute.xlu0 %3124
      %3126 = vrot.lane.b32.xlu0 %v3097, 2
      %v3127 = vpop.permute.xlu0 %3126
      %3128 = vrot.lane.b32.xlu0 %v3098, 2
      %v3129 = vpop.permute.xlu0 %3128
      %3130 = vrot.lane.b32.xlu0 %v3099, 2
      %v3131 = vpop.permute.xlu0 %3130
      %3132 = vrot.lane.b32.xlu0 %v3100, 2
      %v3133 = vpop.permute.xlu0 %3132
      %3134 = vrot.lane.b32.xlu0 %v3101, 2
      %v3135 = vpop.permute.xlu0 %3134
      %3136 = vrot.lane.b32.xlu0 %v3102, 2
      %v3137 = vpop.permute.xlu0 %3136
      %3138 = vrot.lane.b32.xlu0 %v3103, 2
      %v3139 = vpop.permute.xlu0 %3138
      %3152 = vst.msk [vmem:[#allocation2] sm:$0xff] %vm604, %v3117
      %3153 = vst.msk [vmem:[#allocation2 + $0x8] sm:$0xff] %vm604, %v3119
      %3154 = vst.msk [vmem:[#allocation2 + $0x10] sm:$0x3] %vm607, %v3121
      %3155 = vst.msk [vmem:[#allocation2 + $0x18] sm:$0xff] %vm604, %v3123
      %3156 = vst.msk [vmem:[#allocation2 + $0x20] sm:$0xff] %vm604, %v3125
      %3157 = vst.msk [vmem:[#allocation2 + $0x28] sm:$0x3] %vm607, %v3127
      %3158 = vst.msk [vmem:[#allocation2 + $0x30] sm:$0xff] %vm604, %v3129
      %3159 = vst.msk [vmem:[#allocation2 + $0x38] sm:$0xff] %vm604, %v3131
      %3160 = vst.msk [vmem:[#allocation2 + $0x40] sm:$0x3] %vm607, %v3133
      %3161 = vst.msk [vmem:[#allocation2 + $0x48] sm:$0xff] %vm604, %v3135
      %3162 = vst.msk [vmem:[#allocation2 + $0x50] sm:$0xff] %vm604, %v3137
      %3163 = vst.msk [vmem:[#allocation2 + $0x58] sm:$0x3] %vm607, %v3139
      %v3164 = vld [vmem:[%s2] sm:$0x3]
      %v3165 = vld [vmem:[#allocation2] sm:$0xff]
      %v3166 = vld [vmem:[#allocation2 + $0x8] sm:$0xff]
      %v3167 = vld [vmem:[#allocation2 + $0x18] sm:$0xff]
      %v3168 = vld [vmem:[#allocation2 + $0x20] sm:$0xff]
      %v3169 = vld [vmem:[#allocation2 + $0x30] sm:$0xff]
      %v3170 = vld [vmem:[#allocation2 + $0x38] sm:$0xff]
      %v3171 = vld [vmem:[#allocation2 + $0x48] sm:$0xff]
      %v3172 = vld [vmem:[#allocation2 + $0x50] sm:$0xff]
      %v3173 = vcombine.low %v3165, %v3169
      %v3174 = vcombine.high %v3165, %v3169
      %v3176 = vunpack.c.l.s4 1983009808
      %v3177 = vunpack.c.0.s8 %v3176
      %v3178 = vlaneseq
      %v3179 = vshrl.u32 %v3178, 7
      %v3180 = vsub.s32 %v3177, %v3179
      %v3181 = vrot.slane %v3173, %v3180
      %v3183 = vunpack.c.l.s4 1983009808
      %v3184 = vunpack.c.0.s8 %v3183
      %v3185 = vlaneseq
      %v3186 = vshrl.u32 %v3185, 7
      %v3187 = vsub.s32 %v3184, %v3186
      %v3188 = vrot.slane %v3174, %v3187
      %v3189 = vcombine.low %v3167, %v3171
      %v3190 = vcombine.high %v3167, %v3171
      %v3192 = vunpack.c.l.s4 1983009808
      %v3193 = vunpack.c.0.s8 %v3192
      %v3194 = vlaneseq
      %v3195 = vshrl.u32 %v3194, 7
      %v3196 = vsub.s32 %v3193, %v3195
      %v3197 = vrot.slane %v3189, %v3196
      %v3199 = vunpack.c.l.s4 1983009808
      %v3200 = vunpack.c.0.s8 %v3199
      %v3201 = vlaneseq
      %v3202 = vshrl.u32 %v3201, 7
      %v3203 = vsub.s32 %v3200, %v3202
      %v3204 = vrot.slane %v3190, %v3203
      %v3205 = vcombine.low %v3181, %v3197
      %v3206 = vcombine.high %v3181, %v3197
      %v3208 = vunpack.c.l.s4 1934713408
      %v3209 = vunpack.c.0.s8 %v3208
      %v3210 = vlaneseq
      %v3211 = vshrl.u32 %v3210, 7
      %v3212 = vsub.s32 %v3209, %v3211
      %v3213 = vrot.slane %v3205, %v3212
      %v3215 = vunpack.c.l.s4 1934713408
      %v3216 = vunpack.c.0.s8 %v3215
      %v3217 = vlaneseq
      %v3218 = vshrl.u32 %v3217, 7
      %v3219 = vsub.s32 %v3216, %v3218
      %v3220 = vrot.slane %v3206, %v3219
      %v3221 = vcombine.low %v3188, %v3204
      %v3222 = vcombine.high %v3188, %v3204
      %v3224 = vunpack.c.l.s4 1934713408
      %v3225 = vunpack.c.0.s8 %v3224
      %v3226 = vlaneseq
      %v3227 = vshrl.u32 %v3226, 7
      %v3228 = vsub.s32 %v3225, %v3227
      %v3229 = vrot.slane %v3221, %v3228
      %v3231 = vunpack.c.l.s4 1934713408
      %v3232 = vunpack.c.0.s8 %v3231
      %v3233 = vlaneseq
      %v3234 = vshrl.u32 %v3233, 7
      %v3235 = vsub.s32 %v3232, %v3234
      %v3236 = vrot.slane %v3222, %v3235
      %v3237 = vcombine.high %v3213, 0.0
      %v3238 = vcombine.high %v3220, 0.0
      %v3239 = vcombine.high %v3229, 0.0
      %v3240 = vcombine.high %v3236, 0.0
      %v3241 = vcombine.low %v3166, %v3170
      %v3242 = vcombine.high %v3166, %v3170
      %v3244 = vunpack.c.l.s4 1983009808
      %v3245 = vunpack.c.0.s8 %v3244
      %v3246 = vlaneseq
      %v3247 = vshrl.u32 %v3246, 7
      %v3248 = vsub.s32 %v3245, %v3247
      %v3249 = vrot.slane %v3241, %v3248
      %v3251 = vunpack.c.l.s4 1983009808
      %v3252 = vunpack.c.0.s8 %v3251
      %v3253 = vlaneseq
      %v3254 = vshrl.u32 %v3253, 7
      %v3255 = vsub.s32 %v3252, %v3254
      %v3256 = vrot.slane %v3242, %v3255
      %v3257 = vcombine.low %v3168, %v3172
      %v3258 = vcombine.high %v3168, %v3172
      %v3260 = vunpack.c.l.s4 1983009808
      %v3261 = vunpack.c.0.s8 %v3260
      %v3262 = vlaneseq
      %v3263 = vshrl.u32 %v3262, 7
      %v3264 = vsub.s32 %v3261, %v3263
      %v3265 = vrot.slane %v3257, %v3264
      %v3267 = vunpack.c.l.s4 1983009808
      %v3268 = vunpack.c.0.s8 %v3267
      %v3269 = vlaneseq
      %v3270 = vshrl.u32 %v3269, 7
      %v3271 = vsub.s32 %v3268, %v3270
      %v3272 = vrot.slane %v3258, %v3271
      %v3273 = vcombine.low %v3249, %v3265
      %v3274 = vcombine.high %v3249, %v3265
      %v3276 = vunpack.c.l.s4 1934713408
      %v3277 = vunpack.c.0.s8 %v3276
      %v3278 = vlaneseq
      %v3279 = vshrl.u32 %v3278, 7
      %v3280 = vsub.s32 %v3277, %v3279
      %v3281 = vrot.slane %v3273, %v3280
      %v3283 = vunpack.c.l.s4 1934713408
      %v3284 = vunpack.c.0.s8 %v3283
      %v3285 = vlaneseq
      %v3286 = vshrl.u32 %v3285, 7
      %v3287 = vsub.s32 %v3284, %v3286
      %v3288 = vrot.slane %v3274, %v3287
      %v3289 = vcombine.low %v3256, %v3272
      %v3290 = vcombine.high %v3256, %v3272
      %v3292 = vunpack.c.l.s4 1934713408
      %v3293 = vunpack.c.0.s8 %v3292
      %v3294 = vlaneseq
      %v3295 = vshrl.u32 %v3294, 7
      %v3296 = vsub.s32 %v3293, %v3295
      %v3297 = vrot.slane %v3289, %v3296
      %v3299 = vunpack.c.l.s4 1934713408
      %v3300 = vunpack.c.0.s8 %v3299
      %v3301 = vlaneseq
      %v3302 = vshrl.u32 %v3301, 7
      %v3303 = vsub.s32 %v3300, %v3302
      %v3304 = vrot.slane %v3290, %v3303
      %v3305 = vcombine.high %v3281, 0.0
      %v3306 = vcombine.high %v3288, 0.0
      %v3307 = vcombine.high %v3297, 0.0
      %v3308 = vcombine.high %v3304, 0.0
      %3310 = vrot.lane.b32.xlu0 %v3237, 16
      %v3311 = vpop.permute.xlu0 %3310
      %3314 = vrot.lane.b32.xlu0 %v3220, 32
      %v3315 = vpop.permute.xlu0 %3314
      %3318 = vrot.lane.b32.xlu0 %v3238, 48
      %v3319 = vpop.permute.xlu0 %3318
      %3322 = vrot.lane.b32.xlu0 %v3229, 64
      %v3323 = vpop.permute.xlu0 %3322
      %3326 = vrot.lane.b32.xlu0 %v3239, 80
      %v3327 = vpop.permute.xlu0 %3326
      %3330 = vrot.lane.b32.xlu0 %v3236, 96
      %v3331 = vpop.permute.xlu0 %3330
      %3334 = vrot.lane.b32.xlu0 %v3240, 112
      %v3335 = vpop.permute.xlu0 %3334
      %3338 = vrot.lane.b32.xlu0 %v3305, 16
      %v3339 = vpop.permute.xlu0 %3338
      %3342 = vrot.lane.b32.xlu0 %v3288, 32
      %v3343 = vpop.permute.xlu0 %3342
      %3346 = vrot.lane.b32.xlu0 %v3306, 48
      %v3347 = vpop.permute.xlu0 %3346
      %3350 = vrot.lane.b32.xlu0 %v3297, 64
      %v3351 = vpop.permute.xlu0 %3350
      %3354 = vrot.lane.b32.xlu0 %v3307, 80
      %v3355 = vpop.permute.xlu0 %3354
      %3358 = vrot.lane.b32.xlu0 %v3304, 96
      %v3359 = vpop.permute.xlu0 %3358
      %3362 = vrot.lane.b32.xlu0 %v3308, 112
      %v3363 = vpop.permute.xlu0 %3362
      %v3365 = vsel %vm819, %v3213, %v3311
      %v3366 = vsel %vm821, %v3365, %v3315
      %v3367 = vsel %vm823, %v3366, %v3319
      %v3368 = vsel %vm825, %v3367, %v3323
      %v3369 = vsel %vm827, %v3368, %v3327
      %v3370 = vsel %vm829, %v3369, %v3331
      %v3371 = vsel %vm831, %v3370, %v3335
      %v3372 = vsel %vm819, %v3281, %v3339
      %v3373 = vsel %vm821, %v3372, %v3343
      %v3374 = vsel %vm823, %v3373, %v3347
      %v3375 = vsel %vm825, %v3374, %v3351
      %v3376 = vsel %vm827, %v3375, %v3355
      %v3377 = vsel %vm829, %v3376, %v3359
      %v3378 = vsel %vm831, %v3377, %v3363
      %3387 = vrot.lane.b32.xlu0 %v3165, 127
      %v3388 = vpop.permute.xlu0 %3387
      %3389 = vrot.lane.b32.xlu0 %v3166, 127
      %v3390 = vpop.permute.xlu0 %3389
      %3391 = vrot.lane.b32.xlu0 %v3167, 127
      %v3392 = vpop.permute.xlu0 %3391
      %3393 = vrot.lane.b32.xlu0 %v3168, 127
      %v3394 = vpop.permute.xlu0 %3393
      %3395 = vrot.lane.b32.xlu0 %v3169, 127
      %v3396 = vpop.permute.xlu0 %3395
      %3397 = vrot.lane.b32.xlu0 %v3170, 127
      %v3398 = vpop.permute.xlu0 %3397
      %3399 = vrot.lane.b32.xlu0 %v3171, 127
      %v3400 = vpop.permute.xlu0 %3399
      %3401 = vrot.lane.b32.xlu0 %v3172, 127
      %v3402 = vpop.permute.xlu0 %3401
      %v3411 = vcombine.low %v3388, %v3396
      %v3412 = vcombine.high %v3388, %v3396
      %v3414 = vunpack.c.l.s4 1983009808
      %v3415 = vunpack.c.0.s8 %v3414
      %v3416 = vlaneseq
      %v3417 = vshrl.u32 %v3416, 7
      %v3418 = vsub.s32 %v3415, %v3417
      %v3419 = vrot.slane %v3411, %v3418
      %v3421 = vunpack.c.l.s4 1983009808
      %v3422 = vunpack.c.0.s8 %v3421
      %v3423 = vlaneseq
      %v3424 = vshrl.u32 %v3423, 7
      %v3425 = vsub.s32 %v3422, %v3424
      %v3426 = vrot.slane %v3412, %v3425
      %v3427 = vcombine.low %v3392, %v3400
      %v3428 = vcombine.high %v3392, %v3400
      %v3430 = vunpack.c.l.s4 1983009808
      %v3431 = vunpack.c.0.s8 %v3430
      %v3432 = vlaneseq
      %v3433 = vshrl.u32 %v3432, 7
      %v3434 = vsub.s32 %v3431, %v3433
      %v3435 = vrot.slane %v3427, %v3434
      %v3437 = vunpack.c.l.s4 1983009808
      %v3438 = vunpack.c.0.s8 %v3437
      %v3439 = vlaneseq
      %v3440 = vshrl.u32 %v3439, 7
      %v3441 = vsub.s32 %v3438, %v3440
      %v3442 = vrot.slane %v3428, %v3441
      %v3443 = vcombine.low %v3419, %v3435
      %v3444 = vcombine.high %v3419, %v3435
      %v3446 = vunpack.c.l.s4 1934713408
      %v3447 = vunpack.c.0.s8 %v3446
      %v3448 = vlaneseq
      %v3449 = vshrl.u32 %v3448, 7
      %v3450 = vsub.s32 %v3447, %v3449
      %v3451 = vrot.slane %v3443, %v3450
      %v3453 = vunpack.c.l.s4 1934713408
      %v3454 = vunpack.c.0.s8 %v3453
      %v3455 = vlaneseq
      %v3456 = vshrl.u32 %v3455, 7
      %v3457 = vsub.s32 %v3454, %v3456
      %v3458 = vrot.slane %v3444, %v3457
      %v3459 = vcombine.low %v3426, %v3442
      %v3460 = vcombine.high %v3426, %v3442
      %v3462 = vunpack.c.l.s4 1934713408
      %v3463 = vunpack.c.0.s8 %v3462
      %v3464 = vlaneseq
      %v3465 = vshrl.u32 %v3464, 7
      %v3466 = vsub.s32 %v3463, %v3465
      %v3467 = vrot.slane %v3459, %v3466
      %v3469 = vunpack.c.l.s4 1934713408
      %v3470 = vunpack.c.0.s8 %v3469
      %v3471 = vlaneseq
      %v3472 = vshrl.u32 %v3471, 7
      %v3473 = vsub.s32 %v3470, %v3472
      %v3474 = vrot.slane %v3460, %v3473
      %v3475 = vcombine.high %v3451, 0.0
      %v3476 = vcombine.high %v3458, 0.0
      %v3477 = vcombine.high %v3467, 0.0
      %v3478 = vcombine.high %v3474, 0.0
      %v3479 = vcombine.low %v3390, %v3398
      %v3480 = vcombine.high %v3390, %v3398
      %v3482 = vunpack.c.l.s4 1983009808
      %v3483 = vunpack.c.0.s8 %v3482
      %v3484 = vlaneseq
      %v3485 = vshrl.u32 %v3484, 7
      %v3486 = vsub.s32 %v3483, %v3485
      %v3487 = vrot.slane %v3479, %v3486
      %v3489 = vunpack.c.l.s4 1983009808
      %v3490 = vunpack.c.0.s8 %v3489
      %v3491 = vlaneseq
      %v3492 = vshrl.u32 %v3491, 7
      %v3493 = vsub.s32 %v3490, %v3492
      %v3494 = vrot.slane %v3480, %v3493
      %v3495 = vcombine.low %v3394, %v3402
      %v3496 = vcombine.high %v3394, %v3402
      %v3498 = vunpack.c.l.s4 1983009808
      %v3499 = vunpack.c.0.s8 %v3498
      %v3500 = vlaneseq
      %v3501 = vshrl.u32 %v3500, 7
      %v3502 = vsub.s32 %v3499, %v3501
      %v3503 = vrot.slane %v3495, %v3502
      %v3505 = vunpack.c.l.s4 1983009808
      %v3506 = vunpack.c.0.s8 %v3505
      %v3507 = vlaneseq
      %v3508 = vshrl.u32 %v3507, 7
      %v3509 = vsub.s32 %v3506, %v3508
      %v3510 = vrot.slane %v3496, %v3509
      %v3511 = vcombine.low %v3487, %v3503
      %v3512 = vcombine.high %v3487, %v3503
      %v3514 = vunpack.c.l.s4 1934713408
      %v3515 = vunpack.c.0.s8 %v3514
      %v3516 = vlaneseq
      %v3517 = vshrl.u32 %v3516, 7
      %v3518 = vsub.s32 %v3515, %v3517
      %v3519 = vrot.slane %v3511, %v3518
      %v3521 = vunpack.c.l.s4 1934713408
      %v3522 = vunpack.c.0.s8 %v3521
      %v3523 = vlaneseq
      %v3524 = vshrl.u32 %v3523, 7
      %v3525 = vsub.s32 %v3522, %v3524
      %v3526 = vrot.slane %v3512, %v3525
      %v3527 = vcombine.low %v3494, %v3510
      %v3528 = vcombine.high %v3494, %v3510
      %v3530 = vunpack.c.l.s4 1934713408
      %v3531 = vunpack.c.0.s8 %v3530
      %v3532 = vlaneseq
      %v3533 = vshrl.u32 %v3532, 7
      %v3534 = vsub.s32 %v3531, %v3533
      %v3535 = vrot.slane %v3527, %v3534
      %v3537 = vunpack.c.l.s4 1934713408
      %v3538 = vunpack.c.0.s8 %v3537
      %v3539 = vlaneseq
      %v3540 = vshrl.u32 %v3539, 7
      %v3541 = vsub.s32 %v3538, %v3540
      %v3542 = vrot.slane %v3528, %v3541
      %v3543 = vcombine.high %v3519, 0.0
      %v3544 = vcombine.high %v3526, 0.0
      %v3545 = vcombine.high %v3535, 0.0
      %v3546 = vcombine.high %v3542, 0.0
      %3548 = vrot.lane.b32.xlu0 %v3475, 16
      %v3549 = vpop.permute.xlu0 %3548
      %3552 = vrot.lane.b32.xlu0 %v3458, 32
      %v3553 = vpop.permute.xlu0 %3552
      %3556 = vrot.lane.b32.xlu0 %v3476, 48
      %v3557 = vpop.permute.xlu0 %3556
      %3560 = vrot.lane.b32.xlu0 %v3467, 64
      %v3561 = vpop.permute.xlu0 %3560
      %3564 = vrot.lane.b32.xlu0 %v3477, 80
      %v3565 = vpop.permute.xlu0 %3564
      %3568 = vrot.lane.b32.xlu0 %v3474, 96
      %v3569 = vpop.permute.xlu0 %3568
      %3572 = vrot.lane.b32.xlu0 %v3478, 112
      %v3573 = vpop.permute.xlu0 %3572
      %3576 = vrot.lane.b32.xlu0 %v3543, 16
      %v3577 = vpop.permute.xlu0 %3576
      %3580 = vrot.lane.b32.xlu0 %v3526, 32
      %v3581 = vpop.permute.xlu0 %3580
      %3584 = vrot.lane.b32.xlu0 %v3544, 48
      %v3585 = vpop.permute.xlu0 %3584
      %3588 = vrot.lane.b32.xlu0 %v3535, 64
      %v3589 = vpop.permute.xlu0 %3588
      %3592 = vrot.lane.b32.xlu0 %v3545, 80
      %v3593 = vpop.permute.xlu0 %3592
      %3596 = vrot.lane.b32.xlu0 %v3542, 96
      %v3597 = vpop.permute.xlu0 %3596
      %3600 = vrot.lane.b32.xlu0 %v3546, 112
      %v3601 = vpop.permute.xlu0 %3600
      %v3603 = vsel %vm819, %v3451, %v3549
      %v3604 = vsel %vm821, %v3603, %v3553
      %v3605 = vsel %vm823, %v3604, %v3557
      %v3606 = vsel %vm825, %v3605, %v3561
      %v3607 = vsel %vm827, %v3606, %v3565
      %v3608 = vsel %vm829, %v3607, %v3569
      %v3609 = vsel %vm831, %v3608, %v3573
      %v3610 = vsel %vm819, %v3519, %v3577
      %v3611 = vsel %vm821, %v3610, %v3581
      %v3612 = vsel %vm823, %v3611, %v3585
      %v3613 = vsel %vm825, %v3612, %v3589
      %v3614 = vsel %vm827, %v3613, %v3593
      %v3615 = vsel %vm829, %v3614, %v3597
      %v3616 = vsel %vm831, %v3615, %v3601
      %3617 = vrot.lane.b32.xlu0 %v3165, 126
      %v3618 = vpop.permute.xlu0 %3617
      %3619 = vrot.lane.b32.xlu0 %v3166, 126
      %v3620 = vpop.permute.xlu0 %3619
      %3621 = vrot.lane.b32.xlu0 %v3167, 126
      %v3622 = vpop.permute.xlu0 %3621
      %3623 = vrot.lane.b32.xlu0 %v3168, 126
      %v3624 = vpop.permute.xlu0 %3623
      %3625 = vrot.lane.b32.xlu0 %v3169, 126
      %v3626 = vpop.permute.xlu0 %3625
      %3627 = vrot.lane.b32.xlu0 %v3170, 126
      %v3628 = vpop.permute.xlu0 %3627
      %3629 = vrot.lane.b32.xlu0 %v3171, 126
      %v3630 = vpop.permute.xlu0 %3629
      %3631 = vrot.lane.b32.xlu0 %v3172, 126
      %v3632 = vpop.permute.xlu0 %3631
      %v3641 = vcombine.low %v3618, %v3626
      %v3642 = vcombine.high %v3618, %v3626
      %v3644 = vunpack.c.l.s4 1983009808
      %v3645 = vunpack.c.0.s8 %v3644
      %v3646 = vlaneseq
      %v3647 = vshrl.u32 %v3646, 7
      %v3648 = vsub.s32 %v3645, %v3647
      %v3649 = vrot.slane %v3641, %v3648
      %v3651 = vunpack.c.l.s4 1983009808
      %v3652 = vunpack.c.0.s8 %v3651
      %v3653 = vlaneseq
      %v3654 = vshrl.u32 %v3653, 7
      %v3655 = vsub.s32 %v3652, %v3654
      %v3656 = vrot.slane %v3642, %v3655
      %v3657 = vcombine.low %v3622, %v3630
      %v3658 = vcombine.high %v3622, %v3630
      %v3660 = vunpack.c.l.s4 1983009808
      %v3661 = vunpack.c.0.s8 %v3660
      %v3662 = vlaneseq
      %v3663 = vshrl.u32 %v3662, 7
      %v3664 = vsub.s32 %v3661, %v3663
      %v3665 = vrot.slane %v3657, %v3664
      %v3667 = vunpack.c.l.s4 1983009808
      %v3668 = vunpack.c.0.s8 %v3667
      %v3669 = vlaneseq
      %v3670 = vshrl.u32 %v3669, 7
      %v3671 = vsub.s32 %v3668, %v3670
      %v3672 = vrot.slane %v3658, %v3671
      %v3673 = vcombine.low %v3649, %v3665
      %v3674 = vcombine.high %v3649, %v3665
      %v3676 = vunpack.c.l.s4 1934713408
      %v3677 = vunpack.c.0.s8 %v3676
      %v3678 = vlaneseq
      %v3679 = vshrl.u32 %v3678, 7
      %v3680 = vsub.s32 %v3677, %v3679
      %v3681 = vrot.slane %v3673, %v3680
      %v3683 = vunpack.c.l.s4 1934713408
      %v3684 = vunpack.c.0.s8 %v3683
      %v3685 = vlaneseq
      %v3686 = vshrl.u32 %v3685, 7
      %v3687 = vsub.s32 %v3684, %v3686
      %v3688 = vrot.slane %v3674, %v3687
      %v3689 = vcombine.low %v3656, %v3672
      %v3690 = vcombine.high %v3656, %v3672
      %v3692 = vunpack.c.l.s4 1934713408
      %v3693 = vunpack.c.0.s8 %v3692
      %v3694 = vlaneseq
      %v3695 = vshrl.u32 %v3694, 7
      %v3696 = vsub.s32 %v3693, %v3695
      %v3697 = vrot.slane %v3689, %v3696
      %v3699 = vunpack.c.l.s4 1934713408
      %v3700 = vunpack.c.0.s8 %v3699
      %v3701 = vlaneseq
      %v3702 = vshrl.u32 %v3701, 7
      %v3703 = vsub.s32 %v3700, %v3702
      %v3704 = vrot.slane %v3690, %v3703
      %v3705 = vcombine.high %v3681, 0.0
      %v3706 = vcombine.high %v3688, 0.0
      %v3707 = vcombine.high %v3697, 0.0
      %v3708 = vcombine.high %v3704, 0.0
      %v3709 = vcombine.low %v3620, %v3628
      %v3710 = vcombine.high %v3620, %v3628
      %v3712 = vunpack.c.l.s4 1983009808
      %v3713 = vunpack.c.0.s8 %v3712
      %v3714 = vlaneseq
      %v3715 = vshrl.u32 %v3714, 7
      %v3716 = vsub.s32 %v3713, %v3715
      %v3717 = vrot.slane %v3709, %v3716
      %v3719 = vunpack.c.l.s4 1983009808
      %v3720 = vunpack.c.0.s8 %v3719
      %v3721 = vlaneseq
      %v3722 = vshrl.u32 %v3721, 7
      %v3723 = vsub.s32 %v3720, %v3722
      %v3724 = vrot.slane %v3710, %v3723
      %v3725 = vcombine.low %v3624, %v3632
      %v3726 = vcombine.high %v3624, %v3632
      %v3728 = vunpack.c.l.s4 1983009808
      %v3729 = vunpack.c.0.s8 %v3728
      %v3730 = vlaneseq
      %v3731 = vshrl.u32 %v3730, 7
      %v3732 = vsub.s32 %v3729, %v3731
      %v3733 = vrot.slane %v3725, %v3732
      %v3735 = vunpack.c.l.s4 1983009808
      %v3736 = vunpack.c.0.s8 %v3735
      %v3737 = vlaneseq
      %v3738 = vshrl.u32 %v3737, 7
      %v3739 = vsub.s32 %v3736, %v3738
      %v3740 = vrot.slane %v3726, %v3739
      %v3741 = vcombine.low %v3717, %v3733
      %v3742 = vcombine.high %v3717, %v3733
      %v3744 = vunpack.c.l.s4 1934713408
      %v3745 = vunpack.c.0.s8 %v3744
      %v3746 = vlaneseq
      %v3747 = vshrl.u32 %v3746, 7
      %v3748 = vsub.s32 %v3745, %v3747
      %v3749 = vrot.slane %v3741, %v3748
      %v3751 = vunpack.c.l.s4 1934713408
      %v3752 = vunpack.c.0.s8 %v3751
      %v3753 = vlaneseq
      %v3754 = vshrl.u32 %v3753, 7
      %v3755 = vsub.s32 %v3752, %v3754
      %v3756 = vrot.slane %v3742, %v3755
      %v3757 = vcombine.low %v3724, %v3740
      %v3758 = vcombine.high %v3724, %v3740
      %v3760 = vunpack.c.l.s4 1934713408
      %v3761 = vunpack.c.0.s8 %v3760
      %v3762 = vlaneseq
      %v3763 = vshrl.u32 %v3762, 7
      %v3764 = vsub.s32 %v3761, %v3763
      %v3765 = vrot.slane %v3757, %v3764
      %v3767 = vunpack.c.l.s4 1934713408
      %v3768 = vunpack.c.0.s8 %v3767
      %v3769 = vlaneseq
      %v3770 = vshrl.u32 %v3769, 7
      %v3771 = vsub.s32 %v3768, %v3770
      %v3772 = vrot.slane %v3758, %v3771
      %v3773 = vcombine.high %v3749, 0.0
      %v3774 = vcombine.high %v3756, 0.0
      %v3775 = vcombine.high %v3765, 0.0
      %v3776 = vcombine.high %v3772, 0.0
      %3778 = vrot.lane.b32.xlu0 %v3705, 16
      %v3779 = vpop.permute.xlu0 %3778
      %3782 = vrot.lane.b32.xlu0 %v3688, 32
      %v3783 = vpop.permute.xlu0 %3782
      %3786 = vrot.lane.b32.xlu0 %v3706, 48
      %v3787 = vpop.permute.xlu0 %3786
      %3790 = vrot.lane.b32.xlu0 %v3697, 64
      %v3791 = vpop.permute.xlu0 %3790
      %3794 = vrot.lane.b32.xlu0 %v3707, 80
      %v3795 = vpop.permute.xlu0 %3794
      %3798 = vrot.lane.b32.xlu0 %v3704, 96
      %v3799 = vpop.permute.xlu0 %3798
      %3802 = vrot.lane.b32.xlu0 %v3708, 112
      %v3803 = vpop.permute.xlu0 %3802
      %3806 = vrot.lane.b32.xlu0 %v3773, 16
      %v3807 = vpop.permute.xlu0 %3806
      %3810 = vrot.lane.b32.xlu0 %v3756, 32
      %v3811 = vpop.permute.xlu0 %3810
      %3814 = vrot.lane.b32.xlu0 %v3774, 48
      %v3815 = vpop.permute.xlu0 %3814
      %3818 = vrot.lane.b32.xlu0 %v3765, 64
      %v3819 = vpop.permute.xlu0 %3818
      %3822 = vrot.lane.b32.xlu0 %v3775, 80
      %v3823 = vpop.permute.xlu0 %3822
      %3826 = vrot.lane.b32.xlu0 %v3772, 96
      %v3827 = vpop.permute.xlu0 %3826
      %3830 = vrot.lane.b32.xlu0 %v3776, 112
      %v3831 = vpop.permute.xlu0 %3830
      %v3833 = vsel %vm819, %v3681, %v3779
      %v3834 = vsel %vm821, %v3833, %v3783
      %v3835 = vsel %vm823, %v3834, %v3787
      %v3836 = vsel %vm825, %v3835, %v3791
      %v3837 = vsel %vm827, %v3836, %v3795
      %v3838 = vsel %vm829, %v3837, %v3799
      %v3839 = vsel %vm831, %v3838, %v3803
      %v3840 = vsel %vm819, %v3749, %v3807
      %v3841 = vsel %vm821, %v3840, %v3811
      %v3842 = vsel %vm823, %v3841, %v3815
      %v3843 = vsel %vm825, %v3842, %v3819
      %v3844 = vsel %vm827, %v3843, %v3823
      %v3845 = vsel %vm829, %v3844, %v3827
      %v3846 = vsel %vm831, %v3845, %v3831
      %v3847 = vld [vmem:[#allocation2 + $0x1] sm:$0xff]
      %v3848 = vld [vmem:[#allocation2 + $0x9] sm:$0xff]
      %v3849 = vld [vmem:[#allocation2 + $0x19] sm:$0xff]
      %v3850 = vld [vmem:[#allocation2 + $0x21] sm:$0xff]
      %v3851 = vld [vmem:[#allocation2 + $0x31] sm:$0xff]
      %v3852 = vld [vmem:[#allocation2 + $0x39] sm:$0xff]
      %v3853 = vld [vmem:[#allocation2 + $0x49] sm:$0xff]
      %v3854 = vld [vmem:[#allocation2 + $0x51] sm:$0xff]
      %v3855 = vcombine.low %v3847, %v3851
      %v3856 = vcombine.high %v3847, %v3851
      %v3858 = vunpack.c.l.s4 1983009808
      %v3859 = vunpack.c.0.s8 %v3858
      %v3860 = vlaneseq
      %v3861 = vshrl.u32 %v3860, 7
      %v3862 = vsub.s32 %v3859, %v3861
      %v3863 = vrot.slane %v3855, %v3862
      %v3865 = vunpack.c.l.s4 1983009808
      %v3866 = vunpack.c.0.s8 %v3865
      %v3867 = vlaneseq
      %v3868 = vshrl.u32 %v3867, 7
      %v3869 = vsub.s32 %v3866, %v3868
      %v3870 = vrot.slane %v3856, %v3869
      %v3871 = vcombine.low %v3849, %v3853
      %v3872 = vcombine.high %v3849, %v3853
      %v3874 = vunpack.c.l.s4 1983009808
      %v3875 = vunpack.c.0.s8 %v3874
      %v3876 = vlaneseq
      %v3877 = vshrl.u32 %v3876, 7
      %v3878 = vsub.s32 %v3875, %v3877
      %v3879 = vrot.slane %v3871, %v3878
      %v3881 = vunpack.c.l.s4 1983009808
      %v3882 = vunpack.c.0.s8 %v3881
      %v3883 = vlaneseq
      %v3884 = vshrl.u32 %v3883, 7
      %v3885 = vsub.s32 %v3882, %v3884
      %v3886 = vrot.slane %v3872, %v3885
      %v3887 = vcombine.low %v3863, %v3879
      %v3888 = vcombine.high %v3863, %v3879
      %v3890 = vunpack.c.l.s4 1934713408
      %v3891 = vunpack.c.0.s8 %v3890
      %v3892 = vlaneseq
      %v3893 = vshrl.u32 %v3892, 7
      %v3894 = vsub.s32 %v3891, %v3893
      %v3895 = vrot.slane %v3887, %v3894
      %v3897 = vunpack.c.l.s4 1934713408
      %v3898 = vunpack.c.0.s8 %v3897
      %v3899 = vlaneseq
      %v3900 = vshrl.u32 %v3899, 7
      %v3901 = vsub.s32 %v3898, %v3900
      %v3902 = vrot.slane %v3888, %v3901
      %v3903 = vcombine.low %v3870, %v3886
      %v3904 = vcombine.high %v3870, %v3886
      %v3906 = vunpack.c.l.s4 1934713408
      %v3907 = vunpack.c.0.s8 %v3906
      %v3908 = vlaneseq
      %v3909 = vshrl.u32 %v3908, 7
      %v3910 = vsub.s32 %v3907, %v3909
      %v3911 = vrot.slane %v3903, %v3910
      %v3913 = vunpack.c.l.s4 1934713408
      %v3914 = vunpack.c.0.s8 %v3913
      %v3915 = vlaneseq
      %v3916 = vshrl.u32 %v3915, 7
      %v3917 = vsub.s32 %v3914, %v3916
      %v3918 = vrot.slane %v3904, %v3917
      %v3919 = vcombine.high %v3895, 0.0
      %v3920 = vcombine.high %v3902, 0.0
      %v3921 = vcombine.high %v3911, 0.0
      %v3922 = vcombine.high %v3918, 0.0
      %v3923 = vcombine.low %v3848, %v3852
      %v3924 = vcombine.high %v3848, %v3852
      %v3926 = vunpack.c.l.s4 1983009808
      %v3927 = vunpack.c.0.s8 %v3926
      %v3928 = vlaneseq
      %v3929 = vshrl.u32 %v3928, 7
      %v3930 = vsub.s32 %v3927, %v3929
      %v3931 = vrot.slane %v3923, %v3930
      %v3933 = vunpack.c.l.s4 1983009808
      %v3934 = vunpack.c.0.s8 %v3933
      %v3935 = vlaneseq
      %v3936 = vshrl.u32 %v3935, 7
      %v3937 = vsub.s32 %v3934, %v3936
      %v3938 = vrot.slane %v3924, %v3937
      %v3939 = vcombine.low %v3850, %v3854
      %v3940 = vcombine.high %v3850, %v3854
      %v3942 = vunpack.c.l.s4 1983009808
      %v3943 = vunpack.c.0.s8 %v3942
      %v3944 = vlaneseq
      %v3945 = vshrl.u32 %v3944, 7
      %v3946 = vsub.s32 %v3943, %v3945
      %v3947 = vrot.slane %v3939, %v3946
      %v3949 = vunpack.c.l.s4 1983009808
      %v3950 = vunpack.c.0.s8 %v3949
      %v3951 = vlaneseq
      %v3952 = vshrl.u32 %v3951, 7
      %v3953 = vsub.s32 %v3950, %v3952
      %v3954 = vrot.slane %v3940, %v3953
      %v3955 = vcombine.low %v3931, %v3947
      %v3956 = vcombine.high %v3931, %v3947
      %v3958 = vunpack.c.l.s4 1934713408
      %v3959 = vunpack.c.0.s8 %v3958
      %v3960 = vlaneseq
      %v3961 = vshrl.u32 %v3960, 7
      %v3962 = vsub.s32 %v3959, %v3961
      %v3963 = vrot.slane %v3955, %v3962
      %v3965 = vunpack.c.l.s4 1934713408
      %v3966 = vunpack.c.0.s8 %v3965
      %v3967 = vlaneseq
      %v3968 = vshrl.u32 %v3967, 7
      %v3969 = vsub.s32 %v3966, %v3968
      %v3970 = vrot.slane %v3956, %v3969
      %v3971 = vcombine.low %v3938, %v3954
      %v3972 = vcombine.high %v3938, %v3954
      %v3974 = vunpack.c.l.s4 1934713408
      %v3975 = vunpack.c.0.s8 %v3974
      %v3976 = vlaneseq
      %v3977 = vshrl.u32 %v3976, 7
      %v3978 = vsub.s32 %v3975, %v3977
      %v3979 = vrot.slane %v3971, %v3978
      %v3981 = vunpack.c.l.s4 1934713408
      %v3982 = vunpack.c.0.s8 %v3981
      %v3983 = vlaneseq
      %v3984 = vshrl.u32 %v3983, 7
      %v3985 = vsub.s32 %v3982, %v3984
      %v3986 = vrot.slane %v3972, %v3985
      %v3987 = vcombine.high %v3963, 0.0
      %v3988 = vcombine.high %v3970, 0.0
      %v3989 = vcombine.high %v3979, 0.0
      %v3990 = vcombine.high %v3986, 0.0
      %3992 = vrot.lane.b32.xlu0 %v3919, 16
      %v3993 = vpop.permute.xlu0 %3992
      %3996 = vrot.lane.b32.xlu0 %v3902, 32
      %v3997 = vpop.permute.xlu0 %3996
      %4000 = vrot.lane.b32.xlu0 %v3920, 48
      %v4001 = vpop.permute.xlu0 %4000
      %4004 = vrot.lane.b32.xlu0 %v3911, 64
      %v4005 = vpop.permute.xlu0 %4004
      %4008 = vrot.lane.b32.xlu0 %v3921, 80
      %v4009 = vpop.permute.xlu0 %4008
      %4012 = vrot.lane.b32.xlu0 %v3918, 96
      %v4013 = vpop.permute.xlu0 %4012
      %4016 = vrot.lane.b32.xlu0 %v3922, 112
      %v4017 = vpop.permute.xlu0 %4016
      %4020 = vrot.lane.b32.xlu0 %v3987, 16
      %v4021 = vpop.permute.xlu0 %4020
      %4024 = vrot.lane.b32.xlu0 %v3970, 32
      %v4025 = vpop.permute.xlu0 %4024
      %4028 = vrot.lane.b32.xlu0 %v3988, 48
      %v4029 = vpop.permute.xlu0 %4028
      %4032 = vrot.lane.b32.xlu0 %v3979, 64
      %v4033 = vpop.permute.xlu0 %4032
      %4036 = vrot.lane.b32.xlu0 %v3989, 80
      %v4037 = vpop.permute.xlu0 %4036
      %4040 = vrot.lane.b32.xlu0 %v3986, 96
      %v4041 = vpop.permute.xlu0 %4040
      %4044 = vrot.lane.b32.xlu0 %v3990, 112
      %v4045 = vpop.permute.xlu0 %4044
      %v4047 = vsel %vm819, %v3895, %v3993
      %v4048 = vsel %vm821, %v4047, %v3997
      %v4049 = vsel %vm823, %v4048, %v4001
      %v4050 = vsel %vm825, %v4049, %v4005
      %v4051 = vsel %vm827, %v4050, %v4009
      %v4052 = vsel %vm829, %v4051, %v4013
      %v4053 = vsel %vm831, %v4052, %v4017
      %v4054 = vsel %vm819, %v3963, %v4021
      %v4055 = vsel %vm821, %v4054, %v4025
      %v4056 = vsel %vm823, %v4055, %v4029
      %v4057 = vsel %vm825, %v4056, %v4033
      %v4058 = vsel %vm827, %v4057, %v4037
      %v4059 = vsel %vm829, %v4058, %v4041
      %v4060 = vsel %vm831, %v4059, %v4045
      %4069 = vrot.lane.b32.xlu0 %v3847, 127
      %v4070 = vpop.permute.xlu0 %4069
      %4071 = vrot.lane.b32.xlu0 %v3848, 127
      %v4072 = vpop.permute.xlu0 %4071
      %4073 = vrot.lane.b32.xlu0 %v3849, 127
      %v4074 = vpop.permute.xlu0 %4073
      %4075 = vrot.lane.b32.xlu0 %v3850, 127
      %v4076 = vpop.permute.xlu0 %4075
      %4077 = vrot.lane.b32.xlu0 %v3851, 127
      %v4078 = vpop.permute.xlu0 %4077
      %4079 = vrot.lane.b32.xlu0 %v3852, 127
      %v4080 = vpop.permute.xlu0 %4079
      %4081 = vrot.lane.b32.xlu0 %v3853, 127
      %v4082 = vpop.permute.xlu0 %4081
      %4083 = vrot.lane.b32.xlu0 %v3854, 127
      %v4084 = vpop.permute.xlu0 %4083
      %v4093 = vcombine.low %v4070, %v4078
      %v4094 = vcombine.high %v4070, %v4078
      %v4096 = vunpack.c.l.s4 1983009808
      %v4097 = vunpack.c.0.s8 %v4096
      %v4098 = vlaneseq
      %v4099 = vshrl.u32 %v4098, 7
      %v4100 = vsub.s32 %v4097, %v4099
      %v4101 = vrot.slane %v4093, %v4100
      %v4103 = vunpack.c.l.s4 1983009808
      %v4104 = vunpack.c.0.s8 %v4103
      %v4105 = vlaneseq
      %v4106 = vshrl.u32 %v4105, 7
      %v4107 = vsub.s32 %v4104, %v4106
      %v4108 = vrot.slane %v4094, %v4107
      %v4109 = vcombine.low %v4074, %v4082
      %v4110 = vcombine.high %v4074, %v4082
      %v4112 = vunpack.c.l.s4 1983009808
      %v4113 = vunpack.c.0.s8 %v4112
      %v4114 = vlaneseq
      %v4115 = vshrl.u32 %v4114, 7
      %v4116 = vsub.s32 %v4113, %v4115
      %v4117 = vrot.slane %v4109, %v4116
      %v4119 = vunpack.c.l.s4 1983009808
      %v4120 = vunpack.c.0.s8 %v4119
      %v4121 = vlaneseq
      %v4122 = vshrl.u32 %v4121, 7
      %v4123 = vsub.s32 %v4120, %v4122
      %v4124 = vrot.slane %v4110, %v4123
      %v4125 = vcombine.low %v4101, %v4117
      %v4126 = vcombine.high %v4101, %v4117
      %v4128 = vunpack.c.l.s4 1934713408
      %v4129 = vunpack.c.0.s8 %v4128
      %v4130 = vlaneseq
      %v4131 = vshrl.u32 %v4130, 7
      %v4132 = vsub.s32 %v4129, %v4131
      %v4133 = vrot.slane %v4125, %v4132
      %v4135 = vunpack.c.l.s4 1934713408
      %v4136 = vunpack.c.0.s8 %v4135
      %v4137 = vlaneseq
      %v4138 = vshrl.u32 %v4137, 7
      %v4139 = vsub.s32 %v4136, %v4138
      %v4140 = vrot.slane %v4126, %v4139
      %v4141 = vcombine.low %v4108, %v4124
      %v4142 = vcombine.high %v4108, %v4124
      %v4144 = vunpack.c.l.s4 1934713408
      %v4145 = vunpack.c.0.s8 %v4144
      %v4146 = vlaneseq
      %v4147 = vshrl.u32 %v4146, 7
      %v4148 = vsub.s32 %v4145, %v4147
      %v4149 = vrot.slane %v4141, %v4148
      %v4151 = vunpack.c.l.s4 1934713408
      %v4152 = vunpack.c.0.s8 %v4151
      %v4153 = vlaneseq
      %v4154 = vshrl.u32 %v4153, 7
      %v4155 = vsub.s32 %v4152, %v4154
      %v4156 = vrot.slane %v4142, %v4155
      %v4157 = vcombine.high %v4133, 0.0
      %v4158 = vcombine.high %v4140, 0.0
      %v4159 = vcombine.high %v4149, 0.0
      %v4160 = vcombine.high %v4156, 0.0
      %v4161 = vcombine.low %v4072, %v4080
      %v4162 = vcombine.high %v4072, %v4080
      %v4164 = vunpack.c.l.s4 1983009808
      %v4165 = vunpack.c.0.s8 %v4164
      %v4166 = vlaneseq
      %v4167 = vshrl.u32 %v4166, 7
      %v4168 = vsub.s32 %v4165, %v4167
      %v4169 = vrot.slane %v4161, %v4168
      %v4171 = vunpack.c.l.s4 1983009808
      %v4172 = vunpack.c.0.s8 %v4171
      %v4173 = vlaneseq
      %v4174 = vshrl.u32 %v4173, 7
      %v4175 = vsub.s32 %v4172, %v4174
      %v4176 = vrot.slane %v4162, %v4175
      %v4177 = vcombine.low %v4076, %v4084
      %v4178 = vcombine.high %v4076, %v4084
      %v4180 = vunpack.c.l.s4 1983009808
      %v4181 = vunpack.c.0.s8 %v4180
      %v4182 = vlaneseq
      %v4183 = vshrl.u32 %v4182, 7
      %v4184 = vsub.s32 %v4181, %v4183
      %v4185 = vrot.slane %v4177, %v4184
      %v4187 = vunpack.c.l.s4 1983009808
      %v4188 = vunpack.c.0.s8 %v4187
      %v4189 = vlaneseq
      %v4190 = vshrl.u32 %v4189, 7
      %v4191 = vsub.s32 %v4188, %v4190
      %v4192 = vrot.slane %v4178, %v4191
      %v4193 = vcombine.low %v4169, %v4185
      %v4194 = vcombine.high %v4169, %v4185
      %v4196 = vunpack.c.l.s4 1934713408
      %v4197 = vunpack.c.0.s8 %v4196
      %v4198 = vlaneseq
      %v4199 = vshrl.u32 %v4198, 7
      %v4200 = vsub.s32 %v4197, %v4199
      %v4201 = vrot.slane %v4193, %v4200
      %v4203 = vunpack.c.l.s4 1934713408
      %v4204 = vunpack.c.0.s8 %v4203
      %v4205 = vlaneseq
      %v4206 = vshrl.u32 %v4205, 7
      %v4207 = vsub.s32 %v4204, %v4206
      %v4208 = vrot.slane %v4194, %v4207
      %v4209 = vcombine.low %v4176, %v4192
      %v4210 = vcombine.high %v4176, %v4192
      %v4212 = vunpack.c.l.s4 1934713408
      %v4213 = vunpack.c.0.s8 %v4212
      %v4214 = vlaneseq
      %v4215 = vshrl.u32 %v4214, 7
      %v4216 = vsub.s32 %v4213, %v4215
      %v4217 = vrot.slane %v4209, %v4216
      %v4219 = vunpack.c.l.s4 1934713408
      %v4220 = vunpack.c.0.s8 %v4219
      %v4221 = vlaneseq
      %v4222 = vshrl.u32 %v4221, 7
      %v4223 = vsub.s32 %v4220, %v4222
      %v4224 = vrot.slane %v4210, %v4223
      %v4225 = vcombine.high %v4201, 0.0
      %v4226 = vcombine.high %v4208, 0.0
      %v4227 = vcombine.high %v4217, 0.0
      %v4228 = vcombine.high %v4224, 0.0
      %4230 = vrot.lane.b32.xlu0 %v4157, 16
      %v4231 = vpop.permute.xlu0 %4230
      %4234 = vrot.lane.b32.xlu0 %v4140, 32
      %v4235 = vpop.permute.xlu0 %4234
      %4238 = vrot.lane.b32.xlu0 %v4158, 48
      %v4239 = vpop.permute.xlu0 %4238
      %4242 = vrot.lane.b32.xlu0 %v4149, 64
      %v4243 = vpop.permute.xlu0 %4242
      %4246 = vrot.lane.b32.xlu0 %v4159, 80
      %v4247 = vpop.permute.xlu0 %4246
      %4250 = vrot.lane.b32.xlu0 %v4156, 96
      %v4251 = vpop.permute.xlu0 %4250
      %4254 = vrot.lane.b32.xlu0 %v4160, 112
      %v4255 = vpop.permute.xlu0 %4254
      %4258 = vrot.lane.b32.xlu0 %v4225, 16
      %v4259 = vpop.permute.xlu0 %4258
      %4262 = vrot.lane.b32.xlu0 %v4208, 32
      %v4263 = vpop.permute.xlu0 %4262
      %4266 = vrot.lane.b32.xlu0 %v4226, 48
      %v4267 = vpop.permute.xlu0 %4266
      %4270 = vrot.lane.b32.xlu0 %v4217, 64
      %v4271 = vpop.permute.xlu0 %4270
      %4274 = vrot.lane.b32.xlu0 %v4227, 80
      %v4275 = vpop.permute.xlu0 %4274
      %4278 = vrot.lane.b32.xlu0 %v4224, 96
      %v4279 = vpop.permute.xlu0 %4278
      %4282 = vrot.lane.b32.xlu0 %v4228, 112
      %v4283 = vpop.permute.xlu0 %4282
      %v4285 = vsel %vm819, %v4133, %v4231
      %v4286 = vsel %vm821, %v4285, %v4235
      %v4287 = vsel %vm823, %v4286, %v4239
      %v4288 = vsel %vm825, %v4287, %v4243
      %v4289 = vsel %vm827, %v4288, %v4247
      %v4290 = vsel %vm829, %v4289, %v4251
      %v4291 = vsel %vm831, %v4290, %v4255
      %v4292 = vsel %vm819, %v4201, %v4259
      %v4293 = vsel %vm821, %v4292, %v4263
      %v4294 = vsel %vm823, %v4293, %v4267
      %v4295 = vsel %vm825, %v4294, %v4271
      %v4296 = vsel %vm827, %v4295, %v4275
      %v4297 = vsel %vm829, %v4296, %v4279
      %v4298 = vsel %vm831, %v4297, %v4283
      %4299 = vrot.lane.b32.xlu0 %v3847, 126
      %v4300 = vpop.permute.xlu0 %4299
      %4301 = vrot.lane.b32.xlu0 %v3848, 126
      %v4302 = vpop.permute.xlu0 %4301
      %4303 = vrot.lane.b32.xlu0 %v3849, 126
      %v4304 = vpop.permute.xlu0 %4303
      %4305 = vrot.lane.b32.xlu0 %v3850, 126
      %v4306 = vpop.permute.xlu0 %4305
      %4307 = vrot.lane.b32.xlu0 %v3851, 126
      %v4308 = vpop.permute.xlu0 %4307
      %4309 = vrot.lane.b32.xlu0 %v3852, 126
      %v4310 = vpop.permute.xlu0 %4309
      %4311 = vrot.lane.b32.xlu0 %v3853, 126
      %v4312 = vpop.permute.xlu0 %4311
      %4313 = vrot.lane.b32.xlu0 %v3854, 126
      %v4314 = vpop.permute.xlu0 %4313
      %v4323 = vcombine.low %v4300, %v4308
      %v4324 = vcombine.high %v4300, %v4308
      %v4326 = vunpack.c.l.s4 1983009808
      %v4327 = vunpack.c.0.s8 %v4326
      %v4328 = vlaneseq
      %v4329 = vshrl.u32 %v4328, 7
      %v4330 = vsub.s32 %v4327, %v4329
      %v4331 = vrot.slane %v4323, %v4330
      %v4333 = vunpack.c.l.s4 1983009808
      %v4334 = vunpack.c.0.s8 %v4333
      %v4335 = vlaneseq
      %v4336 = vshrl.u32 %v4335, 7
      %v4337 = vsub.s32 %v4334, %v4336
      %v4338 = vrot.slane %v4324, %v4337
      %v4339 = vcombine.low %v4304, %v4312
      %v4340 = vcombine.high %v4304, %v4312
      %v4342 = vunpack.c.l.s4 1983009808
      %v4343 = vunpack.c.0.s8 %v4342
      %v4344 = vlaneseq
      %v4345 = vshrl.u32 %v4344, 7
      %v4346 = vsub.s32 %v4343, %v4345
      %v4347 = vrot.slane %v4339, %v4346
      %v4349 = vunpack.c.l.s4 1983009808
      %v4350 = vunpack.c.0.s8 %v4349
      %v4351 = vlaneseq
      %v4352 = vshrl.u32 %v4351, 7
      %v4353 = vsub.s32 %v4350, %v4352
      %v4354 = vrot.slane %v4340, %v4353
      %v4355 = vcombine.low %v4331, %v4347
      %v4356 = vcombine.high %v4331, %v4347
      %v4358 = vunpack.c.l.s4 1934713408
      %v4359 = vunpack.c.0.s8 %v4358
      %v4360 = vlaneseq
      %v4361 = vshrl.u32 %v4360, 7
      %v4362 = vsub.s32 %v4359, %v4361
      %v4363 = vrot.slane %v4355, %v4362
      %v4365 = vunpack.c.l.s4 1934713408
      %v4366 = vunpack.c.0.s8 %v4365
      %v4367 = vlaneseq
      %v4368 = vshrl.u32 %v4367, 7
      %v4369 = vsub.s32 %v4366, %v4368
      %v4370 = vrot.slane %v4356, %v4369
      %v4371 = vcombine.low %v4338, %v4354
      %v4372 = vcombine.high %v4338, %v4354
      %v4374 = vunpack.c.l.s4 1934713408
      %v4375 = vunpack.c.0.s8 %v4374
      %v4376 = vlaneseq
      %v4377 = vshrl.u32 %v4376, 7
      %v4378 = vsub.s32 %v4375, %v4377
      %v4379 = vrot.slane %v4371, %v4378
      %v4381 = vunpack.c.l.s4 1934713408
      %v4382 = vunpack.c.0.s8 %v4381
      %v4383 = vlaneseq
      %v4384 = vshrl.u32 %v4383, 7
      %v4385 = vsub.s32 %v4382, %v4384
      %v4386 = vrot.slane %v4372, %v4385
      %v4387 = vcombine.high %v4363, 0.0
      %v4388 = vcombine.high %v4370, 0.0
      %v4389 = vcombine.high %v4379, 0.0
      %v4390 = vcombine.high %v4386, 0.0
      %v4391 = vcombine.low %v4302, %v4310
      %v4392 = vcombine.high %v4302, %v4310
      %v4394 = vunpack.c.l.s4 1983009808
      %v4395 = vunpack.c.0.s8 %v4394
      %v4396 = vlaneseq
      %v4397 = vshrl.u32 %v4396, 7
      %v4398 = vsub.s32 %v4395, %v4397
      %v4399 = vrot.slane %v4391, %v4398
      %v4401 = vunpack.c.l.s4 1983009808
      %v4402 = vunpack.c.0.s8 %v4401
      %v4403 = vlaneseq
      %v4404 = vshrl.u32 %v4403, 7
      %v4405 = vsub.s32 %v4402, %v4404
      %v4406 = vrot.slane %v4392, %v4405
      %v4407 = vcombine.low %v4306, %v4314
      %v4408 = vcombine.high %v4306, %v4314
      %v4410 = vunpack.c.l.s4 1983009808
      %v4411 = vunpack.c.0.s8 %v4410
      %v4412 = vlaneseq
      %v4413 = vshrl.u32 %v4412, 7
      %v4414 = vsub.s32 %v4411, %v4413
      %v4415 = vrot.slane %v4407, %v4414
      %v4417 = vunpack.c.l.s4 1983009808
      %v4418 = vunpack.c.0.s8 %v4417
      %v4419 = vlaneseq
      %v4420 = vshrl.u32 %v4419, 7
      %v4421 = vsub.s32 %v4418, %v4420
      %v4422 = vrot.slane %v4408, %v4421
      %v4423 = vcombine.low %v4399, %v4415
      %v4424 = vcombine.high %v4399, %v4415
      %v4426 = vunpack.c.l.s4 1934713408
      %v4427 = vunpack.c.0.s8 %v4426
      %v4428 = vlaneseq
      %v4429 = vshrl.u32 %v4428, 7
      %v4430 = vsub.s32 %v4427, %v4429
      %v4431 = vrot.slane %v4423, %v4430
      %v4433 = vunpack.c.l.s4 1934713408
      %v4434 = vunpack.c.0.s8 %v4433
      %v4435 = vlaneseq
      %v4436 = vshrl.u32 %v4435, 7
      %v4437 = vsub.s32 %v4434, %v4436
      %v4438 = vrot.slane %v4424, %v4437
      %v4439 = vcombine.low %v4406, %v4422
      %v4440 = vcombine.high %v4406, %v4422
      %v4442 = vunpack.c.l.s4 1934713408
      %v4443 = vunpack.c.0.s8 %v4442
      %v4444 = vlaneseq
      %v4445 = vshrl.u32 %v4444, 7
      %v4446 = vsub.s32 %v4443, %v4445
      %v4447 = vrot.slane %v4439, %v4446
      %v4449 = vunpack.c.l.s4 1934713408
      %v4450 = vunpack.c.0.s8 %v4449
      %v4451 = vlaneseq
      %v4452 = vshrl.u32 %v4451, 7
      %v4453 = vsub.s32 %v4450, %v4452
      %v4454 = vrot.slane %v4440, %v4453
      %v4455 = vcombine.high %v4431, 0.0
      %v4456 = vcombine.high %v4438, 0.0
      %v4457 = vcombine.high %v4447, 0.0
      %v4458 = vcombine.high %v4454, 0.0
      %4460 = vrot.lane.b32.xlu0 %v4387, 16
      %v4461 = vpop.permute.xlu0 %4460
      %4464 = vrot.lane.b32.xlu0 %v4370, 32
      %v4465 = vpop.permute.xlu0 %4464
      %4468 = vrot.lane.b32.xlu0 %v4388, 48
      %v4469 = vpop.permute.xlu0 %4468
      %4472 = vrot.lane.b32.xlu0 %v4379, 64
      %v4473 = vpop.permute.xlu0 %4472
      %4476 = vrot.lane.b32.xlu0 %v4389, 80
      %v4477 = vpop.permute.xlu0 %4476
      %4480 = vrot.lane.b32.xlu0 %v4386, 96
      %v4481 = vpop.permute.xlu0 %4480
      %4484 = vrot.lane.b32.xlu0 %v4390, 112
      %v4485 = vpop.permute.xlu0 %4484
      %4488 = vrot.lane.b32.xlu0 %v4455, 16
      %v4489 = vpop.permute.xlu0 %4488
      %4492 = vrot.lane.b32.xlu0 %v4438, 32
      %v4493 = vpop.permute.xlu0 %4492
      %4496 = vrot.lane.b32.xlu0 %v4456, 48
      %v4497 = vpop.permute.xlu0 %4496
      %4500 = vrot.lane.b32.xlu0 %v4447, 64
      %v4501 = vpop.permute.xlu0 %4500
      %4504 = vrot.lane.b32.xlu0 %v4457, 80
      %v4505 = vpop.permute.xlu0 %4504
      %4508 = vrot.lane.b32.xlu0 %v4454, 96
      %v4509 = vpop.permute.xlu0 %4508
      %4512 = vrot.lane.b32.xlu0 %v4458, 112
      %v4513 = vpop.permute.xlu0 %4512
      %v4515 = vsel %vm819, %v4363, %v4461
      %v4516 = vsel %vm821, %v4515, %v4465
      %v4517 = vsel %vm823, %v4516, %v4469
      %v4518 = vsel %vm825, %v4517, %v4473
      %v4519 = vsel %vm827, %v4518, %v4477
      %v4520 = vsel %vm829, %v4519, %v4481
      %v4521 = vsel %vm831, %v4520, %v4485
      %v4522 = vsel %vm819, %v4431, %v4489
      %v4523 = vsel %vm821, %v4522, %v4493
      %v4524 = vsel %vm823, %v4523, %v4497
      %v4525 = vsel %vm825, %v4524, %v4501
      %v4526 = vsel %vm827, %v4525, %v4505
      %v4527 = vsel %vm829, %v4526, %v4509
      %v4528 = vsel %vm831, %v4527, %v4513
      %v4529 = vld [vmem:[#allocation2 + $0x2] sm:$0xff]
      %v4530 = vld [vmem:[#allocation2 + $0xa] sm:$0xff]
      %v4531 = vld [vmem:[#allocation2 + $0x1a] sm:$0xff]
      %v4532 = vld [vmem:[#allocation2 + $0x22] sm:$0xff]
      %v4533 = vld [vmem:[#allocation2 + $0x32] sm:$0xff]
      %v4534 = vld [vmem:[#allocation2 + $0x3a] sm:$0xff]
      %v4535 = vld [vmem:[#allocation2 + $0x4a] sm:$0xff]
      %v4536 = vld [vmem:[#allocation2 + $0x52] sm:$0xff]
      %v4537 = vcombine.low %v4529, %v4533
      %v4538 = vcombine.high %v4529, %v4533
      %v4540 = vunpack.c.l.s4 1983009808
      %v4541 = vunpack.c.0.s8 %v4540
      %v4542 = vlaneseq
      %v4543 = vshrl.u32 %v4542, 7
      %v4544 = vsub.s32 %v4541, %v4543
      %v4545 = vrot.slane %v4537, %v4544
      %v4547 = vunpack.c.l.s4 1983009808
      %v4548 = vunpack.c.0.s8 %v4547
      %v4549 = vlaneseq
      %v4550 = vshrl.u32 %v4549, 7
      %v4551 = vsub.s32 %v4548, %v4550
      %v4552 = vrot.slane %v4538, %v4551
      %v4553 = vcombine.low %v4531, %v4535
      %v4554 = vcombine.high %v4531, %v4535
      %v4556 = vunpack.c.l.s4 1983009808
      %v4557 = vunpack.c.0.s8 %v4556
      %v4558 = vlaneseq
      %v4559 = vshrl.u32 %v4558, 7
      %v4560 = vsub.s32 %v4557, %v4559
      %v4561 = vrot.slane %v4553, %v4560
      %v4563 = vunpack.c.l.s4 1983009808
      %v4564 = vunpack.c.0.s8 %v4563
      %v4565 = vlaneseq
      %v4566 = vshrl.u32 %v4565, 7
      %v4567 = vsub.s32 %v4564, %v4566
      %v4568 = vrot.slane %v4554, %v4567
      %v4569 = vcombine.low %v4545, %v4561
      %v4570 = vcombine.high %v4545, %v4561
      %v4572 = vunpack.c.l.s4 1934713408
      %v4573 = vunpack.c.0.s8 %v4572
      %v4574 = vlaneseq
      %v4575 = vshrl.u32 %v4574, 7
      %v4576 = vsub.s32 %v4573, %v4575
      %v4577 = vrot.slane %v4569, %v4576
      %v4579 = vunpack.c.l.s4 1934713408
      %v4580 = vunpack.c.0.s8 %v4579
      %v4581 = vlaneseq
      %v4582 = vshrl.u32 %v4581, 7
      %v4583 = vsub.s32 %v4580, %v4582
      %v4584 = vrot.slane %v4570, %v4583
      %v4585 = vcombine.low %v4552, %v4568
      %v4586 = vcombine.high %v4552, %v4568
      %v4588 = vunpack.c.l.s4 1934713408
      %v4589 = vunpack.c.0.s8 %v4588
      %v4590 = vlaneseq
      %v4591 = vshrl.u32 %v4590, 7
      %v4592 = vsub.s32 %v4589, %v4591
      %v4593 = vrot.slane %v4585, %v4592
      %v4595 = vunpack.c.l.s4 1934713408
      %v4596 = vunpack.c.0.s8 %v4595
      %v4597 = vlaneseq
      %v4598 = vshrl.u32 %v4597, 7
      %v4599 = vsub.s32 %v4596, %v4598
      %v4600 = vrot.slane %v4586, %v4599
      %v4601 = vcombine.high %v4577, 0.0
      %v4602 = vcombine.high %v4584, 0.0
      %v4603 = vcombine.high %v4593, 0.0
      %v4604 = vcombine.high %v4600, 0.0
      %v4605 = vcombine.low %v4530, %v4534
      %v4606 = vcombine.high %v4530, %v4534
      %v4608 = vunpack.c.l.s4 1983009808
      %v4609 = vunpack.c.0.s8 %v4608
      %v4610 = vlaneseq
      %v4611 = vshrl.u32 %v4610, 7
      %v4612 = vsub.s32 %v4609, %v4611
      %v4613 = vrot.slane %v4605, %v4612
      %v4615 = vunpack.c.l.s4 1983009808
      %v4616 = vunpack.c.0.s8 %v4615
      %v4617 = vlaneseq
      %v4618 = vshrl.u32 %v4617, 7
      %v4619 = vsub.s32 %v4616, %v4618
      %v4620 = vrot.slane %v4606, %v4619
      %v4621 = vcombine.low %v4532, %v4536
      %v4622 = vcombine.high %v4532, %v4536
      %v4624 = vunpack.c.l.s4 1983009808
      %v4625 = vunpack.c.0.s8 %v4624
      %v4626 = vlaneseq
      %v4627 = vshrl.u32 %v4626, 7
      %v4628 = vsub.s32 %v4625, %v4627
      %v4629 = vrot.slane %v4621, %v4628
      %v4631 = vunpack.c.l.s4 1983009808
      %v4632 = vunpack.c.0.s8 %v4631
      %v4633 = vlaneseq
      %v4634 = vshrl.u32 %v4633, 7
      %v4635 = vsub.s32 %v4632, %v4634
      %v4636 = vrot.slane %v4622, %v4635
      %v4637 = vcombine.low %v4613, %v4629
      %v4638 = vcombine.high %v4613, %v4629
      %v4640 = vunpack.c.l.s4 1934713408
      %v4641 = vunpack.c.0.s8 %v4640
      %v4642 = vlaneseq
      %v4643 = vshrl.u32 %v4642, 7
      %v4644 = vsub.s32 %v4641, %v4643
      %v4645 = vrot.slane %v4637, %v4644
      %v4647 = vunpack.c.l.s4 1934713408
      %v4648 = vunpack.c.0.s8 %v4647
      %v4649 = vlaneseq
      %v4650 = vshrl.u32 %v4649, 7
      %v4651 = vsub.s32 %v4648, %v4650
      %v4652 = vrot.slane %v4638, %v4651
      %v4653 = vcombine.low %v4620, %v4636
      %v4654 = vcombine.high %v4620, %v4636
      %v4656 = vunpack.c.l.s4 1934713408
      %v4657 = vunpack.c.0.s8 %v4656
      %v4658 = vlaneseq
      %v4659 = vshrl.u32 %v4658, 7
      %v4660 = vsub.s32 %v4657, %v4659
      %v4661 = vrot.slane %v4653, %v4660
      %v4663 = vunpack.c.l.s4 1934713408
      %v4664 = vunpack.c.0.s8 %v4663
      %v4665 = vlaneseq
      %v4666 = vshrl.u32 %v4665, 7
      %v4667 = vsub.s32 %v4664, %v4666
      %v4668 = vrot.slane %v4654, %v4667
      %v4669 = vcombine.high %v4645, 0.0
      %v4670 = vcombine.high %v4652, 0.0
      %v4671 = vcombine.high %v4661, 0.0
      %v4672 = vcombine.high %v4668, 0.0
      %4674 = vrot.lane.b32.xlu0 %v4601, 16
      %v4675 = vpop.permute.xlu0 %4674
      %4678 = vrot.lane.b32.xlu0 %v4584, 32
      %v4679 = vpop.permute.xlu0 %4678
      %4682 = vrot.lane.b32.xlu0 %v4602, 48
      %v4683 = vpop.permute.xlu0 %4682
      %4686 = vrot.lane.b32.xlu0 %v4593, 64
      %v4687 = vpop.permute.xlu0 %4686
      %4690 = vrot.lane.b32.xlu0 %v4603, 80
      %v4691 = vpop.permute.xlu0 %4690
      %4694 = vrot.lane.b32.xlu0 %v4600, 96
      %v4695 = vpop.permute.xlu0 %4694
      %4698 = vrot.lane.b32.xlu0 %v4604, 112
      %v4699 = vpop.permute.xlu0 %4698
      %4702 = vrot.lane.b32.xlu0 %v4669, 16
      %v4703 = vpop.permute.xlu0 %4702
      %4706 = vrot.lane.b32.xlu0 %v4652, 32
      %v4707 = vpop.permute.xlu0 %4706
      %4710 = vrot.lane.b32.xlu0 %v4670, 48
      %v4711 = vpop.permute.xlu0 %4710
      %4714 = vrot.lane.b32.xlu0 %v4661, 64
      %v4715 = vpop.permute.xlu0 %4714
      %4718 = vrot.lane.b32.xlu0 %v4671, 80
      %v4719 = vpop.permute.xlu0 %4718
      %4722 = vrot.lane.b32.xlu0 %v4668, 96
      %v4723 = vpop.permute.xlu0 %4722
      %4726 = vrot.lane.b32.xlu0 %v4672, 112
      %v4727 = vpop.permute.xlu0 %4726
      %v4729 = vsel %vm819, %v4577, %v4675
      %v4730 = vsel %vm821, %v4729, %v4679
      %v4731 = vsel %vm823, %v4730, %v4683
      %v4732 = vsel %vm825, %v4731, %v4687
      %v4733 = vsel %vm827, %v4732, %v4691
      %v4734 = vsel %vm829, %v4733, %v4695
      %v4735 = vsel %vm831, %v4734, %v4699
      %v4736 = vsel %vm819, %v4645, %v4703
      %v4737 = vsel %vm821, %v4736, %v4707
      %v4738 = vsel %vm823, %v4737, %v4711
      %v4739 = vsel %vm825, %v4738, %v4715
      %v4740 = vsel %vm827, %v4739, %v4719
      %v4741 = vsel %vm829, %v4740, %v4723
      %v4742 = vsel %vm831, %v4741, %v4727
      %4751 = vrot.lane.b32.xlu0 %v4529, 127
      %v4752 = vpop.permute.xlu0 %4751
      %4753 = vrot.lane.b32.xlu0 %v4530, 127
      %v4754 = vpop.permute.xlu0 %4753
      %4755 = vrot.lane.b32.xlu0 %v4531, 127
      %v4756 = vpop.permute.xlu0 %4755
      %4757 = vrot.lane.b32.xlu0 %v4532, 127
      %v4758 = vpop.permute.xlu0 %4757
      %4759 = vrot.lane.b32.xlu0 %v4533, 127
      %v4760 = vpop.permute.xlu0 %4759
      %4761 = vrot.lane.b32.xlu0 %v4534, 127
      %v4762 = vpop.permute.xlu0 %4761
      %4763 = vrot.lane.b32.xlu0 %v4535, 127
      %v4764 = vpop.permute.xlu0 %4763
      %4765 = vrot.lane.b32.xlu0 %v4536, 127
      %v4766 = vpop.permute.xlu0 %4765
      %v4775 = vcombine.low %v4752, %v4760
      %v4776 = vcombine.high %v4752, %v4760
      %v4778 = vunpack.c.l.s4 1983009808
      %v4779 = vunpack.c.0.s8 %v4778
      %v4780 = vlaneseq
      %v4781 = vshrl.u32 %v4780, 7
      %v4782 = vsub.s32 %v4779, %v4781
      %v4783 = vrot.slane %v4775, %v4782
      %v4785 = vunpack.c.l.s4 1983009808
      %v4786 = vunpack.c.0.s8 %v4785
      %v4787 = vlaneseq
      %v4788 = vshrl.u32 %v4787, 7
      %v4789 = vsub.s32 %v4786, %v4788
      %v4790 = vrot.slane %v4776, %v4789
      %v4791 = vcombine.low %v4756, %v4764
      %v4792 = vcombine.high %v4756, %v4764
      %v4794 = vunpack.c.l.s4 1983009808
      %v4795 = vunpack.c.0.s8 %v4794
      %v4796 = vlaneseq
      %v4797 = vshrl.u32 %v4796, 7
      %v4798 = vsub.s32 %v4795, %v4797
      %v4799 = vrot.slane %v4791, %v4798
      %v4801 = vunpack.c.l.s4 1983009808
      %v4802 = vunpack.c.0.s8 %v4801
      %v4803 = vlaneseq
      %v4804 = vshrl.u32 %v4803, 7
      %v4805 = vsub.s32 %v4802, %v4804
      %v4806 = vrot.slane %v4792, %v4805
      %v4807 = vcombine.low %v4783, %v4799
      %v4808 = vcombine.high %v4783, %v4799
      %v4810 = vunpack.c.l.s4 1934713408
      %v4811 = vunpack.c.0.s8 %v4810
      %v4812 = vlaneseq
      %v4813 = vshrl.u32 %v4812, 7
      %v4814 = vsub.s32 %v4811, %v4813
      %v4815 = vrot.slane %v4807, %v4814
      %v4817 = vunpack.c.l.s4 1934713408
      %v4818 = vunpack.c.0.s8 %v4817
      %v4819 = vlaneseq
      %v4820 = vshrl.u32 %v4819, 7
      %v4821 = vsub.s32 %v4818, %v4820
      %v4822 = vrot.slane %v4808, %v4821
      %v4823 = vcombine.low %v4790, %v4806
      %v4824 = vcombine.high %v4790, %v4806
      %v4826 = vunpack.c.l.s4 1934713408
      %v4827 = vunpack.c.0.s8 %v4826
      %v4828 = vlaneseq
      %v4829 = vshrl.u32 %v4828, 7
      %v4830 = vsub.s32 %v4827, %v4829
      %v4831 = vrot.slane %v4823, %v4830
      %v4833 = vunpack.c.l.s4 1934713408
      %v4834 = vunpack.c.0.s8 %v4833
      %v4835 = vlaneseq
      %v4836 = vshrl.u32 %v4835, 7
      %v4837 = vsub.s32 %v4834, %v4836
      %v4838 = vrot.slane %v4824, %v4837
      %v4839 = vcombine.high %v4815, 0.0
      %v4840 = vcombine.high %v4822, 0.0
      %v4841 = vcombine.high %v4831, 0.0
      %v4842 = vcombine.high %v4838, 0.0
      %v4843 = vcombine.low %v4754, %v4762
      %v4844 = vcombine.high %v4754, %v4762
      %v4846 = vunpack.c.l.s4 1983009808
      %v4847 = vunpack.c.0.s8 %v4846
      %v4848 = vlaneseq
      %v4849 = vshrl.u32 %v4848, 7
      %v4850 = vsub.s32 %v4847, %v4849
      %v4851 = vrot.slane %v4843, %v4850
      %v4853 = vunpack.c.l.s4 1983009808
      %v4854 = vunpack.c.0.s8 %v4853
      %v4855 = vlaneseq
      %v4856 = vshrl.u32 %v4855, 7
      %v4857 = vsub.s32 %v4854, %v4856
      %v4858 = vrot.slane %v4844, %v4857
      %v4859 = vcombine.low %v4758, %v4766
      %v4860 = vcombine.high %v4758, %v4766
      %v4862 = vunpack.c.l.s4 1983009808
      %v4863 = vunpack.c.0.s8 %v4862
      %v4864 = vlaneseq
      %v4865 = vshrl.u32 %v4864, 7
      %v4866 = vsub.s32 %v4863, %v4865
      %v4867 = vrot.slane %v4859, %v4866
      %v4869 = vunpack.c.l.s4 1983009808
      %v4870 = vunpack.c.0.s8 %v4869
      %v4871 = vlaneseq
      %v4872 = vshrl.u32 %v4871, 7
      %v4873 = vsub.s32 %v4870, %v4872
      %v4874 = vrot.slane %v4860, %v4873
      %v4875 = vcombine.low %v4851, %v4867
      %v4876 = vcombine.high %v4851, %v4867
      %v4878 = vunpack.c.l.s4 1934713408
      %v4879 = vunpack.c.0.s8 %v4878
      %v4880 = vlaneseq
      %v4881 = vshrl.u32 %v4880, 7
      %v4882 = vsub.s32 %v4879, %v4881
      %v4883 = vrot.slane %v4875, %v4882
      %v4885 = vunpack.c.l.s4 1934713408
      %v4886 = vunpack.c.0.s8 %v4885
      %v4887 = vlaneseq
      %v4888 = vshrl.u32 %v4887, 7
      %v4889 = vsub.s32 %v4886, %v4888
      %v4890 = vrot.slane %v4876, %v4889
      %v4891 = vcombine.low %v4858, %v4874
      %v4892 = vcombine.high %v4858, %v4874
      %v4894 = vunpack.c.l.s4 1934713408
      %v4895 = vunpack.c.0.s8 %v4894
      %v4896 = vlaneseq
      %v4897 = vshrl.u32 %v4896, 7
      %v4898 = vsub.s32 %v4895, %v4897
      %v4899 = vrot.slane %v4891, %v4898
      %v4901 = vunpack.c.l.s4 1934713408
      %v4902 = vunpack.c.0.s8 %v4901
      %v4903 = vlaneseq
      %v4904 = vshrl.u32 %v4903, 7
      %v4905 = vsub.s32 %v4902, %v4904
      %v4906 = vrot.slane %v4892, %v4905
      %v4907 = vcombine.high %v4883, 0.0
      %v4908 = vcombine.high %v4890, 0.0
      %v4909 = vcombine.high %v4899, 0.0
      %v4910 = vcombine.high %v4906, 0.0
      %4912 = vrot.lane.b32.xlu0 %v4839, 16
      %v4913 = vpop.permute.xlu0 %4912
      %4916 = vrot.lane.b32.xlu0 %v4822, 32
      %v4917 = vpop.permute.xlu0 %4916
      %4920 = vrot.lane.b32.xlu0 %v4840, 48
      %v4921 = vpop.permute.xlu0 %4920
      %4924 = vrot.lane.b32.xlu0 %v4831, 64
      %v4925 = vpop.permute.xlu0 %4924
      %4928 = vrot.lane.b32.xlu0 %v4841, 80
      %v4929 = vpop.permute.xlu0 %4928
      %4932 = vrot.lane.b32.xlu0 %v4838, 96
      %v4933 = vpop.permute.xlu0 %4932
      %4936 = vrot.lane.b32.xlu0 %v4842, 112
      %v4937 = vpop.permute.xlu0 %4936
      %4940 = vrot.lane.b32.xlu0 %v4907, 16
      %v4941 = vpop.permute.xlu0 %4940
      %4944 = vrot.lane.b32.xlu0 %v4890, 32
      %v4945 = vpop.permute.xlu0 %4944
      %4948 = vrot.lane.b32.xlu0 %v4908, 48
      %v4949 = vpop.permute.xlu0 %4948
      %4952 = vrot.lane.b32.xlu0 %v4899, 64
      %v4953 = vpop.permute.xlu0 %4952
      %4956 = vrot.lane.b32.xlu0 %v4909, 80
      %v4957 = vpop.permute.xlu0 %4956
      %4960 = vrot.lane.b32.xlu0 %v4906, 96
      %v4961 = vpop.permute.xlu0 %4960
      %4964 = vrot.lane.b32.xlu0 %v4910, 112
      %v4965 = vpop.permute.xlu0 %4964
      %v4967 = vsel %vm819, %v4815, %v4913
      %v4968 = vsel %vm821, %v4967, %v4917
      %v4969 = vsel %vm823, %v4968, %v4921
      %v4970 = vsel %vm825, %v4969, %v4925
      %v4971 = vsel %vm827, %v4970, %v4929
      %v4972 = vsel %vm829, %v4971, %v4933
      %v4973 = vsel %vm831, %v4972, %v4937
      %v4974 = vsel %vm819, %v4883, %v4941
      %v4975 = vsel %vm821, %v4974, %v4945
      %v4976 = vsel %vm823, %v4975, %v4949
      %v4977 = vsel %vm825, %v4976, %v4953
      %v4978 = vsel %vm827, %v4977, %v4957
      %v4979 = vsel %vm829, %v4978, %v4961
      %v4980 = vsel %vm831, %v4979, %v4965
      %4981 = vrot.lane.b32.xlu0 %v4529, 126
      %v4982 = vpop.permute.xlu0 %4981
      %4983 = vrot.lane.b32.xlu0 %v4530, 126
      %v4984 = vpop.permute.xlu0 %4983
      %4985 = vrot.lane.b32.xlu0 %v4531, 126
      %v4986 = vpop.permute.xlu0 %4985
      %4987 = vrot.lane.b32.xlu0 %v4532, 126
      %v4988 = vpop.permute.xlu0 %4987
      %4989 = vrot.lane.b32.xlu0 %v4533, 126
      %v4990 = vpop.permute.xlu0 %4989
      %4991 = vrot.lane.b32.xlu0 %v4534, 126
      %v4992 = vpop.permute.xlu0 %4991
      %4993 = vrot.lane.b32.xlu0 %v4535, 126
      %v4994 = vpop.permute.xlu0 %4993
      %4995 = vrot.lane.b32.xlu0 %v4536, 126
      %v4996 = vpop.permute.xlu0 %4995
      %v5005 = vcombine.low %v4982, %v4990
      %v5006 = vcombine.high %v4982, %v4990
      %v5008 = vunpack.c.l.s4 1983009808
      %v5009 = vunpack.c.0.s8 %v5008
      %v5010 = vlaneseq
      %v5011 = vshrl.u32 %v5010, 7
      %v5012 = vsub.s32 %v5009, %v5011
      %v5013 = vrot.slane %v5005, %v5012
      %v5015 = vunpack.c.l.s4 1983009808
      %v5016 = vunpack.c.0.s8 %v5015
      %v5017 = vlaneseq
      %v5018 = vshrl.u32 %v5017, 7
      %v5019 = vsub.s32 %v5016, %v5018
      %v5020 = vrot.slane %v5006, %v5019
      %v5021 = vcombine.low %v4986, %v4994
      %v5022 = vcombine.high %v4986, %v4994
      %v5024 = vunpack.c.l.s4 1983009808
      %v5025 = vunpack.c.0.s8 %v5024
      %v5026 = vlaneseq
      %v5027 = vshrl.u32 %v5026, 7
      %v5028 = vsub.s32 %v5025, %v5027
      %v5029 = vrot.slane %v5021, %v5028
      %v5031 = vunpack.c.l.s4 1983009808
      %v5032 = vunpack.c.0.s8 %v5031
      %v5033 = vlaneseq
      %v5034 = vshrl.u32 %v5033, 7
      %v5035 = vsub.s32 %v5032, %v5034
      %v5036 = vrot.slane %v5022, %v5035
      %v5037 = vcombine.low %v5013, %v5029
      %v5038 = vcombine.high %v5013, %v5029
      %v5040 = vunpack.c.l.s4 1934713408
      %v5041 = vunpack.c.0.s8 %v5040
      %v5042 = vlaneseq
      %v5043 = vshrl.u32 %v5042, 7
      %v5044 = vsub.s32 %v5041, %v5043
      %v5045 = vrot.slane %v5037, %v5044
      %v5047 = vunpack.c.l.s4 1934713408
      %v5048 = vunpack.c.0.s8 %v5047
      %v5049 = vlaneseq
      %v5050 = vshrl.u32 %v5049, 7
      %v5051 = vsub.s32 %v5048, %v5050
      %v5052 = vrot.slane %v5038, %v5051
      %v5053 = vcombine.low %v5020, %v5036
      %v5054 = vcombine.high %v5020, %v5036
      %v5056 = vunpack.c.l.s4 1934713408
      %v5057 = vunpack.c.0.s8 %v5056
      %v5058 = vlaneseq
      %v5059 = vshrl.u32 %v5058, 7
      %v5060 = vsub.s32 %v5057, %v5059
      %v5061 = vrot.slane %v5053, %v5060
      %v5063 = vunpack.c.l.s4 1934713408
      %v5064 = vunpack.c.0.s8 %v5063
      %v5065 = vlaneseq
      %v5066 = vshrl.u32 %v5065, 7
      %v5067 = vsub.s32 %v5064, %v5066
      %v5068 = vrot.slane %v5054, %v5067
      %v5069 = vcombine.high %v5045, 0.0
      %v5070 = vcombine.high %v5052, 0.0
      %v5071 = vcombine.high %v5061, 0.0
      %v5072 = vcombine.high %v5068, 0.0
      %v5073 = vcombine.low %v4984, %v4992
      %v5074 = vcombine.high %v4984, %v4992
      %v5076 = vunpack.c.l.s4 1983009808
      %v5077 = vunpack.c.0.s8 %v5076
      %v5078 = vlaneseq
      %v5079 = vshrl.u32 %v5078, 7
      %v5080 = vsub.s32 %v5077, %v5079
      %v5081 = vrot.slane %v5073, %v5080
      %v5083 = vunpack.c.l.s4 1983009808
      %v5084 = vunpack.c.0.s8 %v5083
      %v5085 = vlaneseq
      %v5086 = vshrl.u32 %v5085, 7
      %v5087 = vsub.s32 %v5084, %v5086
      %v5088 = vrot.slane %v5074, %v5087
      %v5089 = vcombine.low %v4988, %v4996
      %v5090 = vcombine.high %v4988, %v4996
      %v5092 = vunpack.c.l.s4 1983009808
      %v5093 = vunpack.c.0.s8 %v5092
      %v5094 = vlaneseq
      %v5095 = vshrl.u32 %v5094, 7
      %v5096 = vsub.s32 %v5093, %v5095
      %v5097 = vrot.slane %v5089, %v5096
      %v5099 = vunpack.c.l.s4 1983009808
      %v5100 = vunpack.c.0.s8 %v5099
      %v5101 = vlaneseq
      %v5102 = vshrl.u32 %v5101, 7
      %v5103 = vsub.s32 %v5100, %v5102
      %v5104 = vrot.slane %v5090, %v5103
      %v5105 = vcombine.low %v5081, %v5097
      %v5106 = vcombine.high %v5081, %v5097
      %v5108 = vunpack.c.l.s4 1934713408
      %v5109 = vunpack.c.0.s8 %v5108
      %v5110 = vlaneseq
      %v5111 = vshrl.u32 %v5110, 7
      %v5112 = vsub.s32 %v5109, %v5111
      %v5113 = vrot.slane %v5105, %v5112
      %v5115 = vunpack.c.l.s4 1934713408
      %v5116 = vunpack.c.0.s8 %v5115
      %v5117 = vlaneseq
      %v5118 = vshrl.u32 %v5117, 7
      %v5119 = vsub.s32 %v5116, %v5118
      %v5120 = vrot.slane %v5106, %v5119
      %v5121 = vcombine.low %v5088, %v5104
      %v5122 = vcombine.high %v5088, %v5104
      %v5124 = vunpack.c.l.s4 1934713408
      %v5125 = vunpack.c.0.s8 %v5124
      %v5126 = vlaneseq
      %v5127 = vshrl.u32 %v5126, 7
      %v5128 = vsub.s32 %v5125, %v5127
      %v5129 = vrot.slane %v5121, %v5128
      %v5131 = vunpack.c.l.s4 1934713408
      %v5132 = vunpack.c.0.s8 %v5131
      %v5133 = vlaneseq
      %v5134 = vshrl.u32 %v5133, 7
      %v5135 = vsub.s32 %v5132, %v5134
      %v5136 = vrot.slane %v5122, %v5135
      %v5137 = vcombine.high %v5113, 0.0
      %v5138 = vcombine.high %v5120, 0.0
      %v5139 = vcombine.high %v5129, 0.0
      %v5140 = vcombine.high %v5136, 0.0
      %5142 = vrot.lane.b32.xlu0 %v5069, 16
      %v5143 = vpop.permute.xlu0 %5142
      %5146 = vrot.lane.b32.xlu0 %v5052, 32
      %v5147 = vpop.permute.xlu0 %5146
      %5150 = vrot.lane.b32.xlu0 %v5070, 48
      %v5151 = vpop.permute.xlu0 %5150
      %5154 = vrot.lane.b32.xlu0 %v5061, 64
      %v5155 = vpop.permute.xlu0 %5154
      %5158 = vrot.lane.b32.xlu0 %v5071, 80
      %v5159 = vpop.permute.xlu0 %5158
      %5162 = vrot.lane.b32.xlu0 %v5068, 96
      %v5163 = vpop.permute.xlu0 %5162
      %5166 = vrot.lane.b32.xlu0 %v5072, 112
      %v5167 = vpop.permute.xlu0 %5166
      %5170 = vrot.lane.b32.xlu0 %v5137, 16
      %v5171 = vpop.permute.xlu0 %5170
      %5174 = vrot.lane.b32.xlu0 %v5120, 32
      %v5175 = vpop.permute.xlu0 %5174
      %5178 = vrot.lane.b32.xlu0 %v5138, 48
      %v5179 = vpop.permute.xlu0 %5178
      %5182 = vrot.lane.b32.xlu0 %v5129, 64
      %v5183 = vpop.permute.xlu0 %5182
      %5186 = vrot.lane.b32.xlu0 %v5139, 80
      %v5187 = vpop.permute.xlu0 %5186
      %5190 = vrot.lane.b32.xlu0 %v5136, 96
      %v5191 = vpop.permute.xlu0 %5190
      %5194 = vrot.lane.b32.xlu0 %v5140, 112
      %v5195 = vpop.permute.xlu0 %5194
      %v5197 = vsel %vm819, %v5045, %v5143
      %v5198 = vsel %vm821, %v5197, %v5147
      %v5199 = vsel %vm823, %v5198, %v5151
      %v5200 = vsel %vm825, %v5199, %v5155
      %v5201 = vsel %vm827, %v5200, %v5159
      %v5202 = vsel %vm829, %v5201, %v5163
      %v5203 = vsel %vm831, %v5202, %v5167
      %v5204 = vsel %vm819, %v5113, %v5171
      %v5205 = vsel %vm821, %v5204, %v5175
      %v5206 = vsel %vm823, %v5205, %v5179
      %v5207 = vsel %vm825, %v5206, %v5183
      %v5208 = vsel %vm827, %v5207, %v5187
      %v5209 = vsel %vm829, %v5208, %v5191
      %v5210 = vsel %vm831, %v5209, %v5195
      %v5213 = vrot.slane %v3609, 4
      %v5214 = vrot.slane %v3616, 4
      %v5219 = vrot.slane %v4053, 4
      %v5220 = vrot.slane %v4060, 4
      %v5225 = vrot.slane %v4521, 4
      %v5226 = vrot.slane %v4528, 4
      %v5231 = vrot.slane %v4973, 4
      %v5232 = vrot.slane %v4980, 4
      %v5235 = vsel %vm2696, %v3371, %v5213
      %v5236 = vsel %vm2696, %v3378, %v5214
      %v5237 = vsel %vm2696, %v3839, %v5219
      %v5238 = vsel %vm2696, %v3846, %v5220
      %v5239 = vsel %vm2696, %v4291, %v5225
      %v5240 = vsel %vm2696, %v4298, %v5226
      %v5241 = vsel %vm2696, %v4735, %v5231
      %v5242 = vsel %vm2696, %v4742, %v5232
      %v5243 = vsel %vm2696, %v5203, 1.0
      %v5244 = vsel %vm2696, %v5210, 1.0
      %v5245 = vpack.c.bf16 %v5237, %v5235
      %v5246 = vpack.c.bf16 %v5238, %v5236
      %v5247 = vpack.c.bf16 %v5241, %v5239
      %v5248 = vpack.c.bf16 %v5242, %v5240
      %v5249 = vpack.c.bf16 %v5243, %v5243
      %v5250 = vpack.c.bf16 %v5244, %v5244
      %v5252 = vsel %vm2713, %v3164, 0
      %v5255 = vand.u32 %v5249, %v2720
      %v5258 = vand.u32 %v5250, %v2720
      %5260 = vmatprep.subr.bf16.mxu0 0
      %5261 = vmatpush1.bf16.msra.mxu0 0
      %5262 = vmatprep.subr.bf16.mxu0 0
      %5263 = vmatpush1.bf16.msra.mxu0 0
      %5264 = vmatprep.subr.bf16.mxu0 0
      %5265 = vmatpush1.bf16.msra.mxu0 0
      %5266 = vmatprep.subr.bf16.mxu0 0
      %5267 = vmatpush1.bf16.msra.mxu0 0
      %5268 = vmatprep.subr.bf16.mxu0 0
      %5269 = vmatpush1.bf16.msra.mxu0 0
      %5270 = vmatprep.subr.bf16.mxu0 %v5258
      %5271 = vmatpush1.bf16.msra.mxu0 %v5255
      %5272 = vmatprep.subr.bf16.mxu0 %v5248
      %5273 = vmatpush1.bf16.msra.mxu0 %v5247
      %5274 = vmatprep.subr.bf16.mxu0 %v5246
      %5275 = vmatpush1.bf16.msra.mxu0 %v5245
      %5276 = vmatprep.subr.bf16.mxu0 0
      %5277 = vmatpush2.bf16.msra.mxu0 0
      %5278 = vmatprep.subr.bf16.mxu0 0
      %5279 = vmatpush2.bf16.msra.mxu0 0
      %5280 = vmatprep.subr.bf16.mxu0 0
      %5281 = vmatpush2.bf16.msra.mxu0 0
      %5282 = vmatprep.subr.bf16.mxu0 0
      %5283 = vmatpush2.bf16.msra.mxu0 0
      %5284 = vmatprep.subr.bf16.mxu0 0
      %5285 = vmatpush2.bf16.msra.mxu0 0
      %5286 = vmatprep.subr.bf16.mxu0 0
      %5287 = vmatpush2.bf16.msra.mxu0 0
      %5288 = vmatprep.subr.bf16.mxu0 0
      %5289 = vmatpush2.bf16.msra.mxu0 0
      %5290 = vmatprep.subr.bf16.mxu0 0
      %5291 = vmatpush2.bf16.msra.mxu0 0
      %5292 = vmatprep.mubr.bf16.mxu0 0
      %5293 = vmatmul.mubr.bf16.gmra.mxu0 %v5252
      %v5294 = vpop.f32.mrf.mxu0
      %v5295 = vadd.f32 0.0, %v5294
      %v5296 = vpop.f32.mrf.mxu0
      %v5297 = vadd.f32 0.0, %v5296
      %v5298 = vpop.f32.mrf.mxu0
      %v5299 = vpop.f32.mrf.mxu0
      %5300 = vdwg.mxu0
      %v5301 = vsel %vm2696, %v5295, 0.0
      %v5302 = vsel %vm2696, %v5297, 0.0
      %v5303 = vadd.f32 %v5301, %v5302
      %5304 = vadd.xlane.f32.xlu0 %v5303
      %v5305 = vpop.xlane.xlu0 %5304
      %v5306 = vmul.f32 %v5305, %v2773
      %v5307 = vsub.f32 %v5295, %v5306
      %v5308 = vsub.f32 %v5297, %v5306
      %v5309 = vmul.f32 %v5307, %v5307
      %v5310 = vmul.f32 %v5308, %v5308
      %v5311 = vsel %vm2696, %v5309, 0.0
      %v5312 = vsel %vm2696, %v5310, 0.0
      %v5313 = vadd.f32 %v5311, %v5312
      %5314 = vadd.xlane.f32.xlu0 %v5313
      %v5315 = vpop.xlane.xlu0 %5314
      %v5316 = vmul.f32 %v5315, %v2773
      %v5317 = vadd.f32 %v5316, 1e-05
      %v5318 = vrsqrt.pop %v5317
      %v5319 = vmul.f32 %v5307, %v5318
      %v5320 = vmul.f32 %v5308, %v5318
      %v5323 = vcombine.low %v5319, %v5320
      %v5325 = vadd.f32 %v172, %v5323
      %5326 = vst [vmem:[%s170] sm:$0xff] %v5325
      %p5327 = scmp.lt.s32.totalorder %s14, 1
      %s5328 = scalar_select %p5327, %s14, 1
      %s5329 = smul.addr %s5328, 2
      %s5330 = smul.addr %s5329, 4
      %s5331 = scalar_lea.vmem %s3, %s5330
      // Predicated region
      $region33: #{residual_block.1} parent=31 // pred_check
        %p5332 = pneg %p100
      $region34: #{residual_block.1} parent=31 // pred_check_branch
        %5334 = sbr.rel (%p5332) target = $region36
      $region35: #{residual_block.1} parent=31 // pred_region
        _
      $region36: #{residual_block.1} parent=31 // pred_fallthru
        _
    $region32: #{residual_block.1} parent=5 // pred_fallthru
      _
    %p5335 = scmp.le.s32.totalorder 2, %s9
    // Predicated region
    $region37: #{residual_block.1} parent=5 // pred_check
      %p5336 = pneg %p5335
    $region38: #{residual_block.1} parent=5 // pred_check_branch
      %5338 = sbr.rel (%p5336) target = $region40
    $region39: #{residual_block.1} parent=5 // pred_region
      %s5339 = ssub.s32 %s9, 2
      // Predicated region
      $region41: #{residual_block.1} parent=39 // pred_check
        %p5340 = pneg %p106
      $region42: #{residual_block.1} parent=39 // pred_check_branch
        %5342 = sbr.rel (%p5340) target = $region44
      $region43: #{residual_block.1} parent=39 // pred_region
        %p5343 = scmp.lt.s32.totalorder %s15, 1
        %s5344 = scalar_select %p5343, %s15, 1
        %s5345 = smul.addr %s5344, 2
        %s5346 = smul.addr %s5345, 4
        %s5347 = scalar_lea.vmem %s3, %s5346
      $region44: #{residual_block.1} parent=39 // pred_fallthru
        _
    $region40: #{residual_block.1} parent=5 // pred_fallthru
      _
  $region6: #{residual_block.1} parent=0 // loop_footer
    %s13 = sadd.s32 1, %s9
  $region7: #{residual_block.1} parent=0 // loop_footer_branch
    %8 = sbr.rel target = $region3
  $region8: #{residual_block.1} parent=0 // loop_exit
    _

</llo_original>
